<compile_context>
chip_gen: v7x
topology: tpu7x:2x2x1
jax: 0.10.0
libtpu: 0.0.40
codegen_flags: <defaults>
</compile_context>

<pallas_src>
import jax
import jax.numpy as jnp
from jax import lax
from jax.experimental import pallas as pl
from jax.experimental.pallas import tpu as pltpu


def _round_up(a, b):
    return ((a + b - 1) // b) * b


# ----------------------------------------------------------------------------
# Pallas kernel: fused inlayer+enc_rnn (relu) + FFlayer + parity masking +
# p_rnn (relu), one statically-unrolled pass over time, all in VMEM.
# ----------------------------------------------------------------------------
def rnn2l_kernel(x_ref, w_ie_ref, w_ehh_ref, w_ff_ref, w_pih_ref, w_phh_ref,
                 y_ref, h_ref, obs_next_ref):
    T, BN, _ = x_ref.shape
    Ep = w_ie_ref.shape[1]
    Hp = y_ref.shape[2]

    f32 = jnp.float32
    zero_row = jnp.zeros((BN, Hp), f32)

    def enc_step(t, h_enc):
        # fused inlayer + enc ih:  x[t] @ (W_in @ W_enc_ih)
        pre = (jnp.dot(x_ref[t], w_ie_ref[...], preferred_element_type=f32)
               + jnp.dot(h_enc, w_ehh_ref[...], preferred_element_type=f32))
        h_enc = jnp.maximum(pre, 0.0)                       # relu RNN cell
        ff = jnp.dot(h_enc, w_ff_ref[...], preferred_element_type=f32)
        return h_enc, ff

    h_enc = jnp.zeros((BN, Ep), f32)
    h_p = jnp.zeros((BN, Hp), f32)

    # T is a static shape -> fully unroll in Python so every timestep's loads,
    # matmuls and stores have static indices and are visible to the scheduler.
    for t0 in range(0, T - 1, 2):
        t1 = t0 + 1

        # -------- even timestep: obs_in = ff, y/obs_next masked to zero -----
        h_enc, ff_e = enc_step(t0, h_enc)
        h_p = jnp.maximum(
            jnp.dot(ff_e, w_pih_ref[...], preferred_element_type=f32)
            + jnp.dot(h_p, w_phh_ref[...], preferred_element_type=f32), 0.0)
        h_ref[t0] = h_p
        y_ref[t0] = zero_row
        obs_next_ref[t0] = zero_row

        # -------- odd timestep: obs_in == 0 -> skip the p_ih matmul ---------
        h_enc, ff_o = enc_step(t1, h_enc)
        h_p = jnp.maximum(
            jnp.dot(h_p, w_phh_ref[...], preferred_element_type=f32), 0.0)
        h_ref[t1] = h_p
        y_ref[t1] = h_p
        obs_next_ref[t1] = ff_o

    if T % 2 == 1:                                  # trailing even timestep
        t0 = T - 1
        h_enc, ff_e = enc_step(t0, h_enc)
        h_p = jnp.maximum(
            jnp.dot(ff_e, w_pih_ref[...], preferred_element_type=f32)
            + jnp.dot(h_p, w_phh_ref[...], preferred_element_type=f32), 0.0)
        h_ref[t0] = h_p
        y_ref[t0] = zero_row
        obs_next_ref[t0] = zero_row


# ----------------------------------------------------------------------------
# Wrapper: restructure_inputs, weight folding/padding, layout transposes,
# batch-tiled pallas_call.
# ----------------------------------------------------------------------------
def rnn2l_forward(obs, act, params):
    N, _, obs_size = obs.shape
    _, L, act_size = act.shape

    # restructure_inputs: pad act with a zero timestep; obs pad+drop is a no-op
    act_p = jnp.concatenate(
        [act, jnp.zeros((N, 1, act_size), act.dtype)], axis=1)       # (N, L+1, A)
    obs_p = jnp.concatenate(
        [obs, jnp.zeros((N, 1, obs_size), obs.dtype)], axis=1)[:, :-1, :]
    x = jnp.concatenate([obs_p, act_p], axis=2)                      # (N, T, Din)
    T, Din = x.shape[1], x.shape[2]

    E = params["w_in"].shape[1]
    H = params["w_ff"].shape[1]
    Ep = _round_up(E, 128)           # lane-dense enc width
    Hp = _round_up(H, 128)           # lane-dense output width

    # Fold the inlayer into the enc ih weight (exact up to fp reassociation),
    # then zero-pad E -> Ep and H -> Hp so every matmul operand and every
    # output store is 128-lane dense.  Padded entries stay exactly 0 through
    # the relu recurrences because the padded weight rows/cols are 0.
    w_in_eih = jnp.dot(params["w_in"], params["w_enc_ih"],
                       preferred_element_type=jnp.float32)           # (Din, E)
    w_ie_p = jnp.zeros((Din, Ep), jnp.float32).at[:, :E].set(w_in_eih)
    w_ehh_p = jnp.zeros((Ep, Ep), jnp.float32).at[:E, :E].set(params["w_enc_hh"])
    w_ff_p = jnp.zeros((Ep, Hp), jnp.float32).at[:E, :H].set(params["w_ff"])
    w_pih_p = jnp.zeros((Hp, Hp), jnp.float32).at[:H, :H].set(params["w_p_ih"])
    w_phh_p = jnp.zeros((Hp, Hp), jnp.float32).at[:H, :H].set(params["w_p_hh"])

    # Batch padding: full sublane utilization + a clean batch-tiled grid.
    N8 = _round_up(N, 8)
    BN = min(N8, 128)                # batch tile (rows per grid step)
    N_pad = _round_up(N8, BN)

    x_tm = jnp.transpose(x, (1, 0, 2)).astype(jnp.float32)           # (T, N, Din)
    if N_pad != N:
        x_tm = jnp.pad(x_tm, ((0, 0), (0, N_pad - N), (0, 0)))       # (T, Np, Din)

    seq_in_spec = pl.BlockSpec((T, BN, Din), lambda b: (0, b, 0))
    seq_out_spec = pl.BlockSpec((T, BN, Hp), lambda b: (0, b, 0))

    def wspec(shape):
        return pl.BlockSpec(shape, lambda b: (0, 0))

    out_shape = tuple(
        jax.ShapeDtypeStruct((T, N_pad, Hp), jnp.float32) for _ in range(3))

    y_tm, h_tm, obs_next_tm = pl.pallas_call(
        rnn2l_kernel,
        out_shape=out_shape,
        grid=(N_pad // BN,),
        in_specs=[
            seq_in_spec,
            wspec((Din, Ep)),
            wspec((Ep, Ep)),
            wspec((Ep, Hp)),
            wspec((Hp, Hp)),
            wspec((Hp, Hp)),
        ],
        out_specs=(seq_out_spec, seq_out_spec, seq_out_spec),
        compiler_params=pltpu.CompilerParams(
            dimension_semantics=("parallel",)),   # v7x: split batch over 2 TCs
    )(x_tm, w_ie_p, w_ehh_p, w_ff_p, w_pih_p, w_phh_p)

    def to_bf(a):                                  # back to (N, T, H)
        return jnp.transpose(a[:, :N, :H], (1, 0, 2))

    return to_bf(y_tm), to_bf(h_tm), to_bf(obs_next_tm)


# ----------------------------------------------------------------------------
# Pure-JAX reference (mirrors the PyTorch forward) for a correctness check.
# ----------------------------------------------------------------------------
def rnn2l_reference(obs, act, params):
    N, _, obs_size = obs.shape
    _, L, act_size = act.shape
    act_p = jnp.concatenate([act, jnp.zeros((N, 1, act_size), act.dtype)], axis=1)
    obs_p = jnp.concatenate(
        [obs, jnp.zeros((N, 1, obs_size), obs.dtype)], axis=1)[:, :-1, :]
    x = jnp.concatenate([obs_p, act_p], axis=2)                      # (N, T, Din)

    x1 = jnp.einsum("ntd,de->nte", x, params["w_in"],
                    precision=lax.Precision.HIGHEST)
    E = params["w_in"].shape[1]
    H = params["w_ff"].shape[1]

    def enc_cell(h, xt):
        h = jax.nn.relu(xt @ params["w_enc_ih"] + h @ params["w_enc_hh"])
        return h, h

    _, e = lax.scan(enc_cell, jnp.zeros((N, E), jnp.float32),
                    jnp.swapaxes(x1, 0, 1))
    e = jnp.swapaxes(e, 0, 1)                                        # (N, T, E)
    ff = jnp.einsum("nte,eh->nth", e, params["w_ff"],
                    precision=lax.Precision.HIGHEST)
    T = ff.shape[1]
    odd = ((jnp.arange(T) % 2) == 1)[None, :, None]
    obs_next = jnp.where(odd, ff, 0.0)
    obs_in = jnp.where(odd, 0.0, ff)

    def p_cell(h, xt):
        h = jax.nn.relu(xt @ params["w_p_ih"] + h @ params["w_p_hh"])
        return h, h

    _, hs = lax.scan(p_cell, jnp.zeros((N, H), jnp.float32),
                     jnp.swapaxes(obs_in, 0, 1))
    hs = jnp.swapaxes(hs, 0, 1)
    y = jnp.where(odd, hs, 0.0)
    return y, hs, obs_next


# ----------------------------------------------------------------------------
# Deterministic synthetic parameter init (shapes from the module __init__).
# ----------------------------------------------------------------------------
def init_params(key, obs_size, act_size, encsize, hidden_size):
    input_size = obs_size + act_size
    ks = jax.random.split(key, 6)

    def u(k, shape, fan_in):
        bound = 1.0 / (fan_in ** 0.5)
        return jax.random.uniform(k, shape, jnp.float32, -bound, bound)

    return dict(
        w_in=u(ks[0], (input_size, encsize), input_size),
        w_enc_ih=u(ks[1], (encsize, encsize), encsize),
        w_enc_hh=u(ks[2], (encsize, encsize), encsize)
        + 0.5 * jnp.eye(encsize, dtype=jnp.float32),                 # W_enc += I/2
        w_ff=u(ks[3], (encsize, hidden_size), encsize),
        w_p_ih=u(ks[4], (hidden_size, hidden_size), hidden_size),
        w_p_hh=u(ks[5], (hidden_size, hidden_size), hidden_size)
        + 0.5 * jnp.eye(hidden_size, dtype=jnp.float32),             # W += I/2
    )


if __name__ == "__main__":
    obs_size, act_size = 6, 4
    encsize, hidden_size = 32, 64
    N, L = 2, 7          # act has L steps, obs has L+1 -> T = L + 1 = 8

    key = jax.random.PRNGKey(0)
    kp, ko, ka = jax.random.split(key, 3)
    params = init_params(kp, obs_size, act_size, encsize, hidden_size)
    obs = jax.random.normal(ko, (N, L + 1, obs_size), jnp.float32)
    act = jax.random.normal(ka, (N, L, act_size), jnp.float32)

    y, h, obs_next = jax.block_until_ready(
        jax.jit(rnn2l_forward)(obs, act, params))
    y_ref, h_ref, obs_next_ref = rnn2l_reference(obs, act, params)

    assert y.shape == (N, L + 1, hidden_size)
    assert h.shape == (N, L + 1, hidden_size)
    assert obs_next.shape == (N, L + 1, hidden_size)
    assert jnp.allclose(y, y_ref, rtol=1e-2, atol=1e-3), "y mismatch"
    assert jnp.allclose(h, h_ref, rtol=1e-2, atol=1e-3), "h mismatch"
    assert jnp.allclose(obs_next, obs_next_ref, rtol=1e-2, atol=1e-3), \
        "obs_next mismatch"

    print("KERNEL_OK")
</pallas_src>

<mosaic_0001>
module attributes {stable_mosaic.version = 11 : i64} {
  func.func @rnn2l_kernel(%arg0: i32, %arg1: memref<8x8x10xf32, #tpu.memory_space<vmem>>, %arg2: memref<10x128xf32, #tpu.memory_space<vmem>>, %arg3: memref<128x128xf32, #tpu.memory_space<vmem>>, %arg4: memref<128x128xf32, #tpu.memory_space<vmem>>, %arg5: memref<128x128xf32, #tpu.memory_space<vmem>>, %arg6: memref<128x128xf32, #tpu.memory_space<vmem>>, %arg7: memref<8x8x128xf32, #tpu.memory_space<vmem>>, %arg8: memref<8x8x128xf32, #tpu.memory_space<vmem>>, %arg9: memref<8x8x128xf32, #tpu.memory_space<vmem>>) attributes {dimension_semantics = [#tpu.dimension_semantics<parallel>], iteration_bounds = array<i64: 1>, scalar_prefetch = 0 : i64, scratch_operands = 0 : i64, tpu.core_type = #tpu.core_type<tc>, window_params = [{transform_indices = @transform_0, window_bounds = array<i64: 8, 8, 10>}, {pipeline_mode = #tpu.pipeline_mode<synchronous>, transform_indices = @transform_1, window_bounds = array<i64: 10, 128>}, {pipeline_mode = #tpu.pipeline_mode<synchronous>, transform_indices = @transform_2, window_bounds = array<i64: 128, 128>}, {pipeline_mode = #tpu.pipeline_mode<synchronous>, transform_indices = @transform_3, window_bounds = array<i64: 128, 128>}, {pipeline_mode = #tpu.pipeline_mode<synchronous>, transform_indices = @transform_4, window_bounds = array<i64: 128, 128>}, {pipeline_mode = #tpu.pipeline_mode<synchronous>, transform_indices = @transform_5, window_bounds = array<i64: 128, 128>}, {transform_indices = @transform_6, window_bounds = array<i64: 8, 8, 128>}, {transform_indices = @transform_7, window_bounds = array<i64: 8, 8, 128>}, {transform_indices = @transform_8, window_bounds = array<i64: 8, 8, 128>}]} {
    %cst = arith.constant 0.000000e+00 : f32
    %0 = vector.broadcast %cst : f32 to vector<8x128xf32>
    %cst_0 = arith.constant 0.000000e+00 : f32
    %1 = vector.broadcast %cst_0 : f32 to vector<8x128xf32>
    %cst_1 = arith.constant 0.000000e+00 : f32
    %2 = vector.broadcast %cst_1 : f32 to vector<8x128xf32>
    %c0 = arith.constant 0 : index
    %c0_2 = arith.constant 0 : index
    %c0_3 = arith.constant 0 : index
    %3 = vector.load %arg1[%c0, %c0_2, %c0_3] : memref<8x8x10xf32, #tpu.memory_space<vmem>>, vector<1x8x10xf32>
    %4 = vector.shape_cast %3 : vector<1x8x10xf32> to vector<8x10xf32>
    %c0_4 = arith.constant 0 : index
    %c0_5 = arith.constant 0 : index
    %5 = vector.load %arg2[%c0_4, %c0_5] : memref<10x128xf32, #tpu.memory_space<vmem>>, vector<10x128xf32>
    %cst_6 = arith.constant dense<0.000000e+00> : vector<8x128xf32>
    %6 = tpu.matmul %4, %5, %cst_6 {dimension_numbers = #tpu.dot_dimension_numbers<[1], [0], [0], [1], [0, 0, 1, 1], [], []>} : vector<8x10xf32>, vector<10x128xf32>, vector<8x128xf32> -> vector<8x128xf32>
    %c0_7 = arith.constant 0 : index
    %c0_8 = arith.constant 0 : index
    %7 = vector.load %arg3[%c0_7, %c0_8] : memref<128x128xf32, #tpu.memory_space<vmem>>, vector<128x128xf32>
    %cst_9 = arith.constant dense<0.000000e+00> : vector<8x128xf32>
    %8 = tpu.matmul %1, %7, %cst_9 {dimension_numbers = #tpu.dot_dimension_numbers<[1], [0], [0], [1], [0, 0, 1, 1], [], []>} : vector<8x128xf32>, vector<128x128xf32>, vector<8x128xf32> -> vector<8x128xf32>
    %9 = arith.addf %6, %8 : vector<8x128xf32>
    %cst_10 = arith.constant 0.000000e+00 : f32
    %10 = vector.broadcast %cst_10 : f32 to vector<8x128xf32>
    %11 = arith.maximumf %9, %10 : vector<8x128xf32>
    %c0_11 = arith.constant 0 : index
    %c0_12 = arith.constant 0 : index
    %12 = vector.load %arg4[%c0_11, %c0_12] : memref<128x128xf32, #tpu.memory_space<vmem>>, vector<128x128xf32>
    %cst_13 = arith.constant dense<0.000000e+00> : vector<8x128xf32>
    %13 = tpu.matmul %11, %12, %cst_13 {dimension_numbers = #tpu.dot_dimension_numbers<[1], [0], [0], [1], [0, 0, 1, 1], [], []>} : vector<8x128xf32>, vector<128x128xf32>, vector<8x128xf32> -> vector<8x128xf32>
    %c0_14 = arith.constant 0 : index
    %c0_15 = arith.constant 0 : index
    %14 = vector.load %arg5[%c0_14, %c0_15] : memref<128x128xf32, #tpu.memory_space<vmem>>, vector<128x128xf32>
    %cst_16 = arith.constant dense<0.000000e+00> : vector<8x128xf32>
    %15 = tpu.matmul %13, %14, %cst_16 {dimension_numbers = #tpu.dot_dimension_numbers<[1], [0], [0], [1], [0, 0, 1, 1], [], []>} : vector<8x128xf32>, vector<128x128xf32>, vector<8x128xf32> -> vector<8x128xf32>
    %c0_17 = arith.constant 0 : index
    %c0_18 = arith.constant 0 : index
    %16 = vector.load %arg6[%c0_17, %c0_18] : memref<128x128xf32, #tpu.memory_space<vmem>>, vector<128x128xf32>
    %cst_19 = arith.constant dense<0.000000e+00> : vector<8x128xf32>
    %17 = tpu.matmul %2, %16, %cst_19 {dimension_numbers = #tpu.dot_dimension_numbers<[1], [0], [0], [1], [0, 0, 1, 1], [], []>} : vector<8x128xf32>, vector<128x128xf32>, vector<8x128xf32> -> vector<8x128xf32>
    %18 = arith.addf %15, %17 : vector<8x128xf32>
    %cst_20 = arith.constant 0.000000e+00 : f32
    %19 = vector.broadcast %cst_20 : f32 to vector<8x128xf32>
    %20 = arith.maximumf %18, %19 : vector<8x128xf32>
    %c0_21 = arith.constant 0 : index
    %c0_22 = arith.constant 0 : index
    %c0_23 = arith.constant 0 : index
    %21 = vector.load %arg8[%c0_21, %c0_22, %c0_23] : memref<8x8x128xf32, #tpu.memory_space<vmem>>, vector<1x8x128xf32>
    %22 = vector.shape_cast %21 : vector<1x8x128xf32> to vector<8x128xf32>
    %23 = vector.shape_cast %20 : vector<8x128xf32> to vector<1x8x128xf32>
    tpu.vector_store %arg8[%c0_21, %c0_22, %c0_23], %23 {strides = array<i32>} : memref<8x8x128xf32, #tpu.memory_space<vmem>>, vector<1x8x128xf32>,
    %c0_24 = arith.constant 0 : index
    %c0_25 = arith.constant 0 : index
    %c0_26 = arith.constant 0 : index
    %24 = vector.load %arg7[%c0_24, %c0_25, %c0_26] : memref<8x8x128xf32, #tpu.memory_space<vmem>>, vector<1x8x128xf32>
    %25 = vector.shape_cast %24 : vector<1x8x128xf32> to vector<8x128xf32>
    %26 = vector.shape_cast %0 : vector<8x128xf32> to vector<1x8x128xf32>
    tpu.vector_store %arg7[%c0_24, %c0_25, %c0_26], %26 {strides = array<i32>} : memref<8x8x128xf32, #tpu.memory_space<vmem>>, vector<1x8x128xf32>,
    %c0_27 = arith.constant 0 : index
    %c0_28 = arith.constant 0 : index
    %c0_29 = arith.constant 0 : index
    %27 = vector.load %arg9[%c0_27, %c0_28, %c0_29] : memref<8x8x128xf32, #tpu.memory_space<vmem>>, vector<1x8x128xf32>
    %28 = vector.shape_cast %27 : vector<1x8x128xf32> to vector<8x128xf32>
    %29 = vector.shape_cast %0 : vector<8x128xf32> to vector<1x8x128xf32>
    tpu.vector_store %arg9[%c0_27, %c0_28, %c0_29], %29 {strides = array<i32>} : memref<8x8x128xf32, #tpu.memory_space<vmem>>, vector<1x8x128xf32>,
    %c1 = arith.constant 1 : index
    %c0_30 = arith.constant 0 : index
    %c0_31 = arith.constant 0 : index
    %30 = vector.load %arg1[%c1, %c0_30, %c0_31] : memref<8x8x10xf32, #tpu.memory_space<vmem>>, vector<1x8x10xf32>
    %31 = vector.shape_cast %30 : vector<1x8x10xf32> to vector<8x10xf32>
    %c0_32 = arith.constant 0 : index
    %c0_33 = arith.constant 0 : index
    %32 = vector.load %arg2[%c0_32, %c0_33] : memref<10x128xf32, #tpu.memory_space<vmem>>, vector<10x128xf32>
    %cst_34 = arith.constant dense<0.000000e+00> : vector<8x128xf32>
    %33 = tpu.matmul %31, %32, %cst_34 {dimension_numbers = #tpu.dot_dimension_numbers<[1], [0], [0], [1], [0, 0, 1, 1], [], []>} : vector<8x10xf32>, vector<10x128xf32>, vector<8x128xf32> -> vector<8x128xf32>
    %c0_35 = arith.constant 0 : index
    %c0_36 = arith.constant 0 : index
    %34 = vector.load %arg3[%c0_35, %c0_36] : memref<128x128xf32, #tpu.memory_space<vmem>>, vector<128x128xf32>
    %cst_37 = arith.constant dense<0.000000e+00> : vector<8x128xf32>
    %35 = tpu.matmul %11, %34, %cst_37 {dimension_numbers = #tpu.dot_dimension_numbers<[1], [0], [0], [1], [0, 0, 1, 1], [], []>} : vector<8x128xf32>, vector<128x128xf32>, vector<8x128xf32> -> vector<8x128xf32>
    %36 = arith.addf %33, %35 : vector<8x128xf32>
    %cst_38 = arith.constant 0.000000e+00 : f32
    %37 = vector.broadcast %cst_38 : f32 to vector<8x128xf32>
    %38 = arith.maximumf %36, %37 : vector<8x128xf32>
    %c0_39 = arith.constant 0 : index
    %c0_40 = arith.constant 0 : index
    %39 = vector.load %arg4[%c0_39, %c0_40] : memref<128x128xf32, #tpu.memory_space<vmem>>, vector<128x128xf32>
    %cst_41 = arith.constant dense<0.000000e+00> : vector<8x128xf32>
    %40 = tpu.matmul %38, %39, %cst_41 {dimension_numbers = #tpu.dot_dimension_numbers<[1], [0], [0], [1], [0, 0, 1, 1], [], []>} : vector<8x128xf32>, vector<128x128xf32>, vector<8x128xf32> -> vector<8x128xf32>
    %c0_42 = arith.constant 0 : index
    %c0_43 = arith.constant 0 : index
    %41 = vector.load %arg6[%c0_42, %c0_43] : memref<128x128xf32, #tpu.memory_space<vmem>>, vector<128x128xf32>
    %cst_44 = arith.constant dense<0.000000e+00> : vector<8x128xf32>
    %42 = tpu.matmul %20, %41, %cst_44 {dimension_numbers = #tpu.dot_dimension_numbers<[1], [0], [0], [1], [0, 0, 1, 1], [], []>} : vector<8x128xf32>, vector<128x128xf32>, vector<8x128xf32> -> vector<8x128xf32>
    %cst_45 = arith.constant 0.000000e+00 : f32
    %43 = vector.broadcast %cst_45 : f32 to vector<8x128xf32>
    %44 = arith.maximumf %42, %43 : vector<8x128xf32>
    %c1_46 = arith.constant 1 : index
    %c0_47 = arith.constant 0 : index
    %c0_48 = arith.constant 0 : index
    %45 = vector.load %arg8[%c1_46, %c0_47, %c0_48] : memref<8x8x128xf32, #tpu.memory_space<vmem>>, vector<1x8x128xf32>
    %46 = vector.shape_cast %45 : vector<1x8x128xf32> to vector<8x128xf32>
    %47 = vector.shape_cast %44 : vector<8x128xf32> to vector<1x8x128xf32>
    tpu.vector_store %arg8[%c1_46, %c0_47, %c0_48], %47 {strides = array<i32>} : memref<8x8x128xf32, #tpu.memory_space<vmem>>, vector<1x8x128xf32>,
    %c1_49 = arith.constant 1 : index
    %c0_50 = arith.constant 0 : index
    %c0_51 = arith.constant 0 : index
    %48 = vector.load %arg7[%c1_49, %c0_50, %c0_51] : memref<8x8x128xf32, #tpu.memory_space<vmem>>, vector<1x8x128xf32>
    %49 = vector.shape_cast %48 : vector<1x8x128xf32> to vector<8x128xf32>
    %50 = vector.shape_cast %44 : vector<8x128xf32> to vector<1x8x128xf32>
    tpu.vector_store %arg7[%c1_49, %c0_50, %c0_51], %50 {strides = array<i32>} : memref<8x8x128xf32, #tpu.memory_space<vmem>>, vector<1x8x128xf32>,
    %c1_52 = arith.constant 1 : index
    %c0_53 = arith.constant 0 : index
    %c0_54 = arith.constant 0 : index
    %51 = vector.load %arg9[%c1_52, %c0_53, %c0_54] : memref<8x8x128xf32, #tpu.memory_space<vmem>>, vector<1x8x128xf32>
    %52 = vector.shape_cast %51 : vector<1x8x128xf32> to vector<8x128xf32>
    %53 = vector.shape_cast %40 : vector<8x128xf32> to vector<1x8x128xf32>
    tpu.vector_store %arg9[%c1_52, %c0_53, %c0_54], %53 {strides = array<i32>} : memref<8x8x128xf32, #tpu.memory_space<vmem>>, vector<1x8x128xf32>,
    %c2 = arith.constant 2 : index
    %c0_55 = arith.constant 0 : index
    %c0_56 = arith.constant 0 : index
    %54 = vector.load %arg1[%c2, %c0_55, %c0_56] : memref<8x8x10xf32, #tpu.memory_space<vmem>>, vector<1x8x10xf32>
    %55 = vector.shape_cast %54 : vector<1x8x10xf32> to vector<8x10xf32>
    %c0_57 = arith.constant 0 : index
    %c0_58 = arith.constant 0 : index
    %56 = vector.load %arg2[%c0_57, %c0_58] : memref<10x128xf32, #tpu.memory_space<vmem>>, vector<10x128xf32>
    %cst_59 = arith.constant dense<0.000000e+00> : vector<8x128xf32>
    %57 = tpu.matmul %55, %56, %cst_59 {dimension_numbers = #tpu.dot_dimension_numbers<[1], [0], [0], [1], [0, 0, 1, 1], [], []>} : vector<8x10xf32>, vector<10x128xf32>, vector<8x128xf32> -> vector<8x128xf32>
    %c0_60 = arith.constant 0 : index
    %c0_61 = arith.constant 0 : index
    %58 = vector.load %arg3[%c0_60, %c0_61] : memref<128x128xf32, #tpu.memory_space<vmem>>, vector<128x128xf32>
    %cst_62 = arith.constant dense<0.000000e+00> : vector<8x128xf32>
    %59 = tpu.matmul %38, %58, %cst_62 {dimension_numbers = #tpu.dot_dimension_numbers<[1], [0], [0], [1], [0, 0, 1, 1], [], []>} : vector<8x128xf32>, vector<128x128xf32>, vector<8x128xf32> -> vector<8x128xf32>
    %60 = arith.addf %57, %59 : vector<8x128xf32>
    %cst_63 = arith.constant 0.000000e+00 : f32
    %61 = vector.broadcast %cst_63 : f32 to vector<8x128xf32>
    %62 = arith.maximumf %60, %61 : vector<8x128xf32>
    %c0_64 = arith.constant 0 : index
    %c0_65 = arith.constant 0 : index
    %63 = vector.load %arg4[%c0_64, %c0_65] : memref<128x128xf32, #tpu.memory_space<vmem>>, vector<128x128xf32>
    %cst_66 = arith.constant dense<0.000000e+00> : vector<8x128xf32>
    %64 = tpu.matmul %62, %63, %cst_66 {dimension_numbers = #tpu.dot_dimension_numbers<[1], [0], [0], [1], [0, 0, 1, 1], [], []>} : vector<8x128xf32>, vector<128x128xf32>, vector<8x128xf32> -> vector<8x128xf32>
    %c0_67 = arith.constant 0 : index
    %c0_68 = arith.constant 0 : index
    %65 = vector.load %arg5[%c0_67, %c0_68] : memref<128x128xf32, #tpu.memory_space<vmem>>, vector<128x128xf32>
    %cst_69 = arith.constant dense<0.000000e+00> : vector<8x128xf32>
    %66 = tpu.matmul %64, %65, %cst_69 {dimension_numbers = #tpu.dot_dimension_numbers<[1], [0], [0], [1], [0, 0, 1, 1], [], []>} : vector<8x128xf32>, vector<128x128xf32>, vector<8x128xf32> -> vector<8x128xf32>
    %c0_70 = arith.constant 0 : index
    %c0_71 = arith.constant 0 : index
    %67 = vector.load %arg6[%c0_70, %c0_71] : memref<128x128xf32, #tpu.memory_space<vmem>>, vector<128x128xf32>
    %cst_72 = arith.constant dense<0.000000e+00> : vector<8x128xf32>
    %68 = tpu.matmul %44, %67, %cst_72 {dimension_numbers = #tpu.dot_dimension_numbers<[1], [0], [0], [1], [0, 0, 1, 1], [], []>} : vector<8x128xf32>, vector<128x128xf32>, vector<8x128xf32> -> vector<8x128xf32>
    %69 = arith.addf %66, %68 : vector<8x128xf32>
    %cst_73 = arith.constant 0.000000e+00 : f32
    %70 = vector.broadcast %cst_73 : f32 to vector<8x128xf32>
    %71 = arith.maximumf %69, %70 : vector<8x128xf32>
    %c2_74 = arith.constant 2 : index
    %c0_75 = arith.constant 0 : index
    %c0_76 = arith.constant 0 : index
    %72 = vector.load %arg8[%c2_74, %c0_75, %c0_76] : memref<8x8x128xf32, #tpu.memory_space<vmem>>, vector<1x8x128xf32>
    %73 = vector.shape_cast %72 : vector<1x8x128xf32> to vector<8x128xf32>
    %74 = vector.shape_cast %71 : vector<8x128xf32> to vector<1x8x128xf32>
    tpu.vector_store %arg8[%c2_74, %c0_75, %c0_76], %74 {strides = array<i32>} : memref<8x8x128xf32, #tpu.memory_space<vmem>>, vector<1x8x128xf32>,
    %c2_77 = arith.constant 2 : index
    %c0_78 = arith.constant 0 : index
    %c0_79 = arith.constant 0 : index
    %75 = vector.load %arg7[%c2_77, %c0_78, %c0_79] : memref<8x8x128xf32, #tpu.memory_space<vmem>>, vector<1x8x128xf32>
    %76 = vector.shape_cast %75 : vector<1x8x128xf32> to vector<8x128xf32>
    %77 = vector.shape_cast %0 : vector<8x128xf32> to vector<1x8x128xf32>
    tpu.vector_store %arg7[%c2_77, %c0_78, %c0_79], %77 {strides = array<i32>} : memref<8x8x128xf32, #tpu.memory_space<vmem>>, vector<1x8x128xf32>,
    %c2_80 = arith.constant 2 : index
    %c0_81 = arith.constant 0 : index
    %c0_82 = arith.constant 0 : index
    %78 = vector.load %arg9[%c2_80, %c0_81, %c0_82] : memref<8x8x128xf32, #tpu.memory_space<vmem>>, vector<1x8x128xf32>
    %79 = vector.shape_cast %78 : vector<1x8x128xf32> to vector<8x128xf32>
    %80 = vector.shape_cast %0 : vector<8x128xf32> to vector<1x8x128xf32>
    tpu.vector_store %arg9[%c2_80, %c0_81, %c0_82], %80 {strides = array<i32>} : memref<8x8x128xf32, #tpu.memory_space<vmem>>, vector<1x8x128xf32>,
    %c3 = arith.constant 3 : index
    %c0_83 = arith.constant 0 : index
    %c0_84 = arith.constant 0 : index
    %81 = vector.load %arg1[%c3, %c0_83, %c0_84] : memref<8x8x10xf32, #tpu.memory_space<vmem>>, vector<1x8x10xf32>
    %82 = vector.shape_cast %81 : vector<1x8x10xf32> to vector<8x10xf32>
    %c0_85 = arith.constant 0 : index
    %c0_86 = arith.constant 0 : index
    %83 = vector.load %arg2[%c0_85, %c0_86] : memref<10x128xf32, #tpu.memory_space<vmem>>, vector<10x128xf32>
    %cst_87 = arith.constant dense<0.000000e+00> : vector<8x128xf32>
    %84 = tpu.matmul %82, %83, %cst_87 {dimension_numbers = #tpu.dot_dimension_numbers<[1], [0], [0], [1], [0, 0, 1, 1], [], []>} : vector<8x10xf32>, vector<10x128xf32>, vector<8x128xf32> -> vector<8x128xf32>
    %c0_88 = arith.constant 0 : index
    %c0_89 = arith.constant 0 : index
    %85 = vector.load %arg3[%c0_88, %c0_89] : memref<128x128xf32, #tpu.memory_space<vmem>>, vector<128x128xf32>
    %cst_90 = arith.constant dense<0.000000e+00> : vector<8x128xf32>
    %86 = tpu.matmul %62, %85, %cst_90 {dimension_numbers = #tpu.dot_dimension_numbers<[1], [0], [0], [1], [0, 0, 1, 1], [], []>} : vector<8x128xf32>, vector<128x128xf32>, vector<8x128xf32> -> vector<8x128xf32>
    %87 = arith.addf %84, %86 : vector<8x128xf32>
    %cst_91 = arith.constant 0.000000e+00 : f32
    %88 = vector.broadcast %cst_91 : f32 to vector<8x128xf32>
    %89 = arith.maximumf %87, %88 : vector<8x128xf32>
    %c0_92 = arith.constant 0 : index
    %c0_93 = arith.constant 0 : index
    %90 = vector.load %arg4[%c0_92, %c0_93] : memref<128x128xf32, #tpu.memory_space<vmem>>, vector<128x128xf32>
    %cst_94 = arith.constant dense<0.000000e+00> : vector<8x128xf32>
    %91 = tpu.matmul %89, %90, %cst_94 {dimension_numbers = #tpu.dot_dimension_numbers<[1], [0], [0], [1], [0, 0, 1, 1], [], []>} : vector<8x128xf32>, vector<128x128xf32>, vector<8x128xf32> -> vector<8x128xf32>
    %c0_95 = arith.constant 0 : index
    %c0_96 = arith.constant 0 : index
    %92 = vector.load %arg6[%c0_95, %c0_96] : memref<128x128xf32, #tpu.memory_space<vmem>>, vector<128x128xf32>
    %cst_97 = arith.constant dense<0.000000e+00> : vector<8x128xf32>
    %93 = tpu.matmul %71, %92, %cst_97 {dimension_numbers = #tpu.dot_dimension_numbers<[1], [0], [0], [1], [0, 0, 1, 1], [], []>} : vector<8x128xf32>, vector<128x128xf32>, vector<8x128xf32> -> vector<8x128xf32>
    %cst_98 = arith.constant 0.000000e+00 : f32
    %94 = vector.broadcast %cst_98 : f32 to vector<8x128xf32>
    %95 = arith.maximumf %93, %94 : vector<8x128xf32>
    %c3_99 = arith.constant 3 : index
    %c0_100 = arith.constant 0 : index
    %c0_101 = arith.constant 0 : index
    %96 = vector.load %arg8[%c3_99, %c0_100, %c0_101] : memref<8x8x128xf32, #tpu.memory_space<vmem>>, vector<1x8x128xf32>
    %97 = vector.shape_cast %96 : vector<1x8x128xf32> to vector<8x128xf32>
    %98 = vector.shape_cast %95 : vector<8x128xf32> to vector<1x8x128xf32>
    tpu.vector_store %arg8[%c3_99, %c0_100, %c0_101], %98 {strides = array<i32>} : memref<8x8x128xf32, #tpu.memory_space<vmem>>, vector<1x8x128xf32>,
    %c3_102 = arith.constant 3 : index
    %c0_103 = arith.constant 0 : index
    %c0_104 = arith.constant 0 : index
    %99 = vector.load %arg7[%c3_102, %c0_103, %c0_104] : memref<8x8x128xf32, #tpu.memory_space<vmem>>, vector<1x8x128xf32>
    %100 = vector.shape_cast %99 : vector<1x8x128xf32> to vector<8x128xf32>
    %101 = vector.shape_cast %95 : vector<8x128xf32> to vector<1x8x128xf32>
    tpu.vector_store %arg7[%c3_102, %c0_103, %c0_104], %101 {strides = array<i32>} : memref<8x8x128xf32, #tpu.memory_space<vmem>>, vector<1x8x128xf32>,
    %c3_105 = arith.constant 3 : index
    %c0_106 = arith.constant 0 : index
    %c0_107 = arith.constant 0 : index
    %102 = vector.load %arg9[%c3_105, %c0_106, %c0_107] : memref<8x8x128xf32, #tpu.memory_space<vmem>>, vector<1x8x128xf32>
    %103 = vector.shape_cast %102 : vector<1x8x128xf32> to vector<8x128xf32>
    %104 = vector.shape_cast %91 : vector<8x128xf32> to vector<1x8x128xf32>
    tpu.vector_store %arg9[%c3_105, %c0_106, %c0_107], %104 {strides = array<i32>} : memref<8x8x128xf32, #tpu.memory_space<vmem>>, vector<1x8x128xf32>,
    %c4 = arith.constant 4 : index
    %c0_108 = arith.constant 0 : index
    %c0_109 = arith.constant 0 : index
    %105 = vector.load %arg1[%c4, %c0_108, %c0_109] : memref<8x8x10xf32, #tpu.memory_space<vmem>>, vector<1x8x10xf32>
    %106 = vector.shape_cast %105 : vector<1x8x10xf32> to vector<8x10xf32>
    %c0_110 = arith.constant 0 : index
    %c0_111 = arith.constant 0 : index
    %107 = vector.load %arg2[%c0_110, %c0_111] : memref<10x128xf32, #tpu.memory_space<vmem>>, vector<10x128xf32>
    %cst_112 = arith.constant dense<0.000000e+00> : vector<8x128xf32>
    %108 = tpu.matmul %106, %107, %cst_112 {dimension_numbers = #tpu.dot_dimension_numbers<[1], [0], [0], [1], [0, 0, 1, 1], [], []>} : vector<8x10xf32>, vector<10x128xf32>, vector<8x128xf32> -> vector<8x128xf32>
    %c0_113 = arith.constant 0 : index
    %c0_114 = arith.constant 0 : index
    %109 = vector.load %arg3[%c0_113, %c0_114] : memref<128x128xf32, #tpu.memory_space<vmem>>, vector<128x128xf32>
    %cst_115 = arith.constant dense<0.000000e+00> : vector<8x128xf32>
    %110 = tpu.matmul %89, %109, %cst_115 {dimension_numbers = #tpu.dot_dimension_numbers<[1], [0], [0], [1], [0, 0, 1, 1], [], []>} : vector<8x128xf32>, vector<128x128xf32>, vector<8x128xf32> -> vector<8x128xf32>
    %111 = arith.addf %108, %110 : vector<8x128xf32>
    %cst_116 = arith.constant 0.000000e+00 : f32
    %112 = vector.broadcast %cst_116 : f32 to vector<8x128xf32>
    %113 = arith.maximumf %111, %112 : vector<8x128xf32>
    %c0_117 = arith.constant 0 : index
    %c0_118 = arith.constant 0 : index
    %114 = vector.load %arg4[%c0_117, %c0_118] : memref<128x128xf32, #tpu.memory_space<vmem>>, vector<128x128xf32>
    %cst_119 = arith.constant dense<0.000000e+00> : vector<8x128xf32>
    %115 = tpu.matmul %113, %114, %cst_119 {dimension_numbers = #tpu.dot_dimension_numbers<[1], [0], [0], [1], [0, 0, 1, 1], [], []>} : vector<8x128xf32>, vector<128x128xf32>, vector<8x128xf32> -> vector<8x128xf32>
    %c0_120 = arith.constant 0 : index
    %c0_121 = arith.constant 0 : index
    %116 = vector.load %arg5[%c0_120, %c0_121] : memref<128x128xf32, #tpu.memory_space<vmem>>, vector<128x128xf32>
    %cst_122 = arith.constant dense<0.000000e+00> : vector<8x128xf32>
    %117 = tpu.matmul %115, %116, %cst_122 {dimension_numbers = #tpu.dot_dimension_numbers<[1], [0], [0], [1], [0, 0, 1, 1], [], []>} : vector<8x128xf32>, vector<128x128xf32>, vector<8x128xf32> -> vector<8x128xf32>
    %c0_123 = arith.constant 0 : index
    %c0_124 = arith.constant 0 : index
    %118 = vector.load %arg6[%c0_123, %c0_124] : memref<128x128xf32, #tpu.memory_space<vmem>>, vector<128x128xf32>
    %cst_125 = arith.constant dense<0.000000e+00> : vector<8x128xf32>
    %119 = tpu.matmul %95, %118, %cst_125 {dimension_numbers = #tpu.dot_dimension_numbers<[1], [0], [0], [1], [0, 0, 1, 1], [], []>} : vector<8x128xf32>, vector<128x128xf32>, vector<8x128xf32> -> vector<8x128xf32>
    %120 = arith.addf %117, %119 : vector<8x128xf32>
    %cst_126 = arith.constant 0.000000e+00 : f32
    %121 = vector.broadcast %cst_126 : f32 to vector<8x128xf32>
    %122 = arith.maximumf %120, %121 : vector<8x128xf32>
    %c4_127 = arith.constant 4 : index
    %c0_128 = arith.constant 0 : index
    %c0_129 = arith.constant 0 : index
    %123 = vector.load %arg8[%c4_127, %c0_128, %c0_129] : memref<8x8x128xf32, #tpu.memory_space<vmem>>, vector<1x8x128xf32>
    %124 = vector.shape_cast %123 : vector<1x8x128xf32> to vector<8x128xf32>
    %125 = vector.shape_cast %122 : vector<8x128xf32> to vector<1x8x128xf32>
    tpu.vector_store %arg8[%c4_127, %c0_128, %c0_129], %125 {strides = array<i32>} : memref<8x8x128xf32, #tpu.memory_space<vmem>>, vector<1x8x128xf32>,
    %c4_130 = arith.constant 4 : index
    %c0_131 = arith.constant 0 : index
    %c0_132 = arith.constant 0 : index
    %126 = vector.load %arg7[%c4_130, %c0_131, %c0_132] : memref<8x8x128xf32, #tpu.memory_space<vmem>>, vector<1x8x128xf32>
    %127 = vector.shape_cast %126 : vector<1x8x128xf32> to vector<8x128xf32>
    %128 = vector.shape_cast %0 : vector<8x128xf32> to vector<1x8x128xf32>
    tpu.vector_store %arg7[%c4_130, %c0_131, %c0_132], %128 {strides = array<i32>} : memref<8x8x128xf32, #tpu.memory_space<vmem>>, vector<1x8x128xf32>,
    %c4_133 = arith.constant 4 : index
    %c0_134 = arith.constant 0 : index
    %c0_135 = arith.constant 0 : index
    %129 = vector.load %arg9[%c4_133, %c0_134, %c0_135] : memref<8x8x128xf32, #tpu.memory_space<vmem>>, vector<1x8x128xf32>
    %130 = vector.shape_cast %129 : vector<1x8x128xf32> to vector<8x128xf32>
    %131 = vector.shape_cast %0 : vector<8x128xf32> to vector<1x8x128xf32>
    tpu.vector_store %arg9[%c4_133, %c0_134, %c0_135], %131 {strides = array<i32>} : memref<8x8x128xf32, #tpu.memory_space<vmem>>, vector<1x8x128xf32>,
    %c5 = arith.constant 5 : index
    %c0_136 = arith.constant 0 : index
    %c0_137 = arith.constant 0 : index
    %132 = vector.load %arg1[%c5, %c0_136, %c0_137] : memref<8x8x10xf32, #tpu.memory_space<vmem>>, vector<1x8x10xf32>
    %133 = vector.shape_cast %132 : vector<1x8x10xf32> to vector<8x10xf32>
    %c0_138 = arith.constant 0 : index
    %c0_139 = arith.constant 0 : index
    %134 = vector.load %arg2[%c0_138, %c0_139] : memref<10x128xf32, #tpu.memory_space<vmem>>, vector<10x128xf32>
    %cst_140 = arith.constant dense<0.000000e+00> : vector<8x128xf32>
    %135 = tpu.matmul %133, %134, %cst_140 {dimension_numbers = #tpu.dot_dimension_numbers<[1], [0], [0], [1], [0, 0, 1, 1], [], []>} : vector<8x10xf32>, vector<10x128xf32>, vector<8x128xf32> -> vector<8x128xf32>
    %c0_141 = arith.constant 0 : index
    %c0_142 = arith.constant 0 : index
    %136 = vector.load %arg3[%c0_141, %c0_142] : memref<128x128xf32, #tpu.memory_space<vmem>>, vector<128x128xf32>
    %cst_143 = arith.constant dense<0.000000e+00> : vector<8x128xf32>
    %137 = tpu.matmul %113, %136, %cst_143 {dimension_numbers = #tpu.dot_dimension_numbers<[1], [0], [0], [1], [0, 0, 1, 1], [], []>} : vector<8x128xf32>, vector<128x128xf32>, vector<8x128xf32> -> vector<8x128xf32>
    %138 = arith.addf %135, %137 : vector<8x128xf32>
    %cst_144 = arith.constant 0.000000e+00 : f32
    %139 = vector.broadcast %cst_144 : f32 to vector<8x128xf32>
    %140 = arith.maximumf %138, %139 : vector<8x128xf32>
    %c0_145 = arith.constant 0 : index
    %c0_146 = arith.constant 0 : index
    %141 = vector.load %arg4[%c0_145, %c0_146] : memref<128x128xf32, #tpu.memory_space<vmem>>, vector<128x128xf32>
    %cst_147 = arith.constant dense<0.000000e+00> : vector<8x128xf32>
    %142 = tpu.matmul %140, %141, %cst_147 {dimension_numbers = #tpu.dot_dimension_numbers<[1], [0], [0], [1], [0, 0, 1, 1], [], []>} : vector<8x128xf32>, vector<128x128xf32>, vector<8x128xf32> -> vector<8x128xf32>
    %c0_148 = arith.constant 0 : index
    %c0_149 = arith.constant 0 : index
    %143 = vector.load %arg6[%c0_148, %c0_149] : memref<128x128xf32, #tpu.memory_space<vmem>>, vector<128x128xf32>
    %cst_150 = arith.constant dense<0.000000e+00> : vector<8x128xf32>
    %144 = tpu.matmul %122, %143, %cst_150 {dimension_numbers = #tpu.dot_dimension_numbers<[1], [0], [0], [1], [0, 0, 1, 1], [], []>} : vector<8x128xf32>, vector<128x128xf32>, vector<8x128xf32> -> vector<8x128xf32>
    %cst_151 = arith.constant 0.000000e+00 : f32
    %145 = vector.broadcast %cst_151 : f32 to vector<8x128xf32>
    %146 = arith.maximumf %144, %145 : vector<8x128xf32>
    %c5_152 = arith.constant 5 : index
    %c0_153 = arith.constant 0 : index
    %c0_154 = arith.constant 0 : index
    %147 = vector.load %arg8[%c5_152, %c0_153, %c0_154] : memref<8x8x128xf32, #tpu.memory_space<vmem>>, vector<1x8x128xf32>
    %148 = vector.shape_cast %147 : vector<1x8x128xf32> to vector<8x128xf32>
    %149 = vector.shape_cast %146 : vector<8x128xf32> to vector<1x8x128xf32>
    tpu.vector_store %arg8[%c5_152, %c0_153, %c0_154], %149 {strides = array<i32>} : memref<8x8x128xf32, #tpu.memory_space<vmem>>, vector<1x8x128xf32>,
    %c5_155 = arith.constant 5 : index
    %c0_156 = arith.constant 0 : index
    %c0_157 = arith.constant 0 : index
    %150 = vector.load %arg7[%c5_155, %c0_156, %c0_157] : memref<8x8x128xf32, #tpu.memory_space<vmem>>, vector<1x8x128xf32>
    %151 = vector.shape_cast %150 : vector<1x8x128xf32> to vector<8x128xf32>
    %152 = vector.shape_cast %146 : vector<8x128xf32> to vector<1x8x128xf32>
    tpu.vector_store %arg7[%c5_155, %c0_156, %c0_157], %152 {strides = array<i32>} : memref<8x8x128xf32, #tpu.memory_space<vmem>>, vector<1x8x128xf32>,
    %c5_158 = arith.constant 5 : index
    %c0_159 = arith.constant 0 : index
    %c0_160 = arith.constant 0 : index
    %153 = vector.load %arg9[%c5_158, %c0_159, %c0_160] : memref<8x8x128xf32, #tpu.memory_space<vmem>>, vector<1x8x128xf32>
    %154 = vector.shape_cast %153 : vector<1x8x128xf32> to vector<8x128xf32>
    %155 = vector.shape_cast %142 : vector<8x128xf32> to vector<1x8x128xf32>
    tpu.vector_store %arg9[%c5_158, %c0_159, %c0_160], %155 {strides = array<i32>} : memref<8x8x128xf32, #tpu.memory_space<vmem>>, vector<1x8x128xf32>,
    %c6 = arith.constant 6 : index
    %c0_161 = arith.constant 0 : index
    %c0_162 = arith.constant 0 : index
    %156 = vector.load %arg1[%c6, %c0_161, %c0_162] : memref<8x8x10xf32, #tpu.memory_space<vmem>>, vector<1x8x10xf32>
    %157 = vector.shape_cast %156 : vector<1x8x10xf32> to vector<8x10xf32>
    %c0_163 = arith.constant 0 : index
    %c0_164 = arith.constant 0 : index
    %158 = vector.load %arg2[%c0_163, %c0_164] : memref<10x128xf32, #tpu.memory_space<vmem>>, vector<10x128xf32>
    %cst_165 = arith.constant dense<0.000000e+00> : vector<8x128xf32>
    %159 = tpu.matmul %157, %158, %cst_165 {dimension_numbers = #tpu.dot_dimension_numbers<[1], [0], [0], [1], [0, 0, 1, 1], [], []>} : vector<8x10xf32>, vector<10x128xf32>, vector<8x128xf32> -> vector<8x128xf32>
    %c0_166 = arith.constant 0 : index
    %c0_167 = arith.constant 0 : index
    %160 = vector.load %arg3[%c0_166, %c0_167] : memref<128x128xf32, #tpu.memory_space<vmem>>, vector<128x128xf32>
    %cst_168 = arith.constant dense<0.000000e+00> : vector<8x128xf32>
    %161 = tpu.matmul %140, %160, %cst_168 {dimension_numbers = #tpu.dot_dimension_numbers<[1], [0], [0], [1], [0, 0, 1, 1], [], []>} : vector<8x128xf32>, vector<128x128xf32>, vector<8x128xf32> -> vector<8x128xf32>
    %162 = arith.addf %159, %161 : vector<8x128xf32>
    %cst_169 = arith.constant 0.000000e+00 : f32
    %163 = vector.broadcast %cst_169 : f32 to vector<8x128xf32>
    %164 = arith.maximumf %162, %163 : vector<8x128xf32>
    %c0_170 = arith.constant 0 : index
    %c0_171 = arith.constant 0 : index
    %165 = vector.load %arg4[%c0_170, %c0_171] : memref<128x128xf32, #tpu.memory_space<vmem>>, vector<128x128xf32>
    %cst_172 = arith.constant dense<0.000000e+00> : vector<8x128xf32>
    %166 = tpu.matmul %164, %165, %cst_172 {dimension_numbers = #tpu.dot_dimension_numbers<[1], [0], [0], [1], [0, 0, 1, 1], [], []>} : vector<8x128xf32>, vector<128x128xf32>, vector<8x128xf32> -> vector<8x128xf32>
    %c0_173 = arith.constant 0 : index
    %c0_174 = arith.constant 0 : index
    %167 = vector.load %arg5[%c0_173, %c0_174] : memref<128x128xf32, #tpu.memory_space<vmem>>, vector<128x128xf32>
    %cst_175 = arith.constant dense<0.000000e+00> : vector<8x128xf32>
    %168 = tpu.matmul %166, %167, %cst_175 {dimension_numbers = #tpu.dot_dimension_numbers<[1], [0], [0], [1], [0, 0, 1, 1], [], []>} : vector<8x128xf32>, vector<128x128xf32>, vector<8x128xf32> -> vector<8x128xf32>
    %c0_176 = arith.constant 0 : index
    %c0_177 = arith.constant 0 : index
    %169 = vector.load %arg6[%c0_176, %c0_177] : memref<128x128xf32, #tpu.memory_space<vmem>>, vector<128x128xf32>
    %cst_178 = arith.constant dense<0.000000e+00> : vector<8x128xf32>
    %170 = tpu.matmul %146, %169, %cst_178 {dimension_numbers = #tpu.dot_dimension_numbers<[1], [0], [0], [1], [0, 0, 1, 1], [], []>} : vector<8x128xf32>, vector<128x128xf32>, vector<8x128xf32> -> vector<8x128xf32>
    %171 = arith.addf %168, %170 : vector<8x128xf32>
    %cst_179 = arith.constant 0.000000e+00 : f32
    %172 = vector.broadcast %cst_179 : f32 to vector<8x128xf32>
    %173 = arith.maximumf %171, %172 : vector<8x128xf32>
    %c6_180 = arith.constant 6 : index
    %c0_181 = arith.constant 0 : index
    %c0_182 = arith.constant 0 : index
    %174 = vector.load %arg8[%c6_180, %c0_181, %c0_182] : memref<8x8x128xf32, #tpu.memory_space<vmem>>, vector<1x8x128xf32>
    %175 = vector.shape_cast %174 : vector<1x8x128xf32> to vector<8x128xf32>
    %176 = vector.shape_cast %173 : vector<8x128xf32> to vector<1x8x128xf32>
    tpu.vector_store %arg8[%c6_180, %c0_181, %c0_182], %176 {strides = array<i32>} : memref<8x8x128xf32, #tpu.memory_space<vmem>>, vector<1x8x128xf32>,
    %c6_183 = arith.constant 6 : index
    %c0_184 = arith.constant 0 : index
    %c0_185 = arith.constant 0 : index
    %177 = vector.load %arg7[%c6_183, %c0_184, %c0_185] : memref<8x8x128xf32, #tpu.memory_space<vmem>>, vector<1x8x128xf32>
    %178 = vector.shape_cast %177 : vector<1x8x128xf32> to vector<8x128xf32>
    %179 = vector.shape_cast %0 : vector<8x128xf32> to vector<1x8x128xf32>
    tpu.vector_store %arg7[%c6_183, %c0_184, %c0_185], %179 {strides = array<i32>} : memref<8x8x128xf32, #tpu.memory_space<vmem>>, vector<1x8x128xf32>,
    %c6_186 = arith.constant 6 : index
    %c0_187 = arith.constant 0 : index
    %c0_188 = arith.constant 0 : index
    %180 = vector.load %arg9[%c6_186, %c0_187, %c0_188] : memref<8x8x128xf32, #tpu.memory_space<vmem>>, vector<1x8x128xf32>
    %181 = vector.shape_cast %180 : vector<1x8x128xf32> to vector<8x128xf32>
    %182 = vector.shape_cast %0 : vector<8x128xf32> to vector<1x8x128xf32>
    tpu.vector_store %arg9[%c6_186, %c0_187, %c0_188], %182 {strides = array<i32>} : memref<8x8x128xf32, #tpu.memory_space<vmem>>, vector<1x8x128xf32>,
    %c7 = arith.constant 7 : index
    %c0_189 = arith.constant 0 : index
    %c0_190 = arith.constant 0 : index
    %183 = vector.load %arg1[%c7, %c0_189, %c0_190] : memref<8x8x10xf32, #tpu.memory_space<vmem>>, vector<1x8x10xf32>
    %184 = vector.shape_cast %183 : vector<1x8x10xf32> to vector<8x10xf32>
    %c0_191 = arith.constant 0 : index
    %c0_192 = arith.constant 0 : index
    %185 = vector.load %arg2[%c0_191, %c0_192] : memref<10x128xf32, #tpu.memory_space<vmem>>, vector<10x128xf32>
    %cst_193 = arith.constant dense<0.000000e+00> : vector<8x128xf32>
    %186 = tpu.matmul %184, %185, %cst_193 {dimension_numbers = #tpu.dot_dimension_numbers<[1], [0], [0], [1], [0, 0, 1, 1], [], []>} : vector<8x10xf32>, vector<10x128xf32>, vector<8x128xf32> -> vector<8x128xf32>
    %c0_194 = arith.constant 0 : index
    %c0_195 = arith.constant 0 : index
    %187 = vector.load %arg3[%c0_194, %c0_195] : memref<128x128xf32, #tpu.memory_space<vmem>>, vector<128x128xf32>
    %cst_196 = arith.constant dense<0.000000e+00> : vector<8x128xf32>
    %188 = tpu.matmul %164, %187, %cst_196 {dimension_numbers = #tpu.dot_dimension_numbers<[1], [0], [0], [1], [0, 0, 1, 1], [], []>} : vector<8x128xf32>, vector<128x128xf32>, vector<8x128xf32> -> vector<8x128xf32>
    %189 = arith.addf %186, %188 : vector<8x128xf32>
    %cst_197 = arith.constant 0.000000e+00 : f32
    %190 = vector.broadcast %cst_197 : f32 to vector<8x128xf32>
    %191 = arith.maximumf %189, %190 : vector<8x128xf32>
    %c0_198 = arith.constant 0 : index
    %c0_199 = arith.constant 0 : index
    %192 = vector.load %arg4[%c0_198, %c0_199] : memref<128x128xf32, #tpu.memory_space<vmem>>, vector<128x128xf32>
    %cst_200 = arith.constant dense<0.000000e+00> : vector<8x128xf32>
    %193 = tpu.matmul %191, %192, %cst_200 {dimension_numbers = #tpu.dot_dimension_numbers<[1], [0], [0], [1], [0, 0, 1, 1], [], []>} : vector<8x128xf32>, vector<128x128xf32>, vector<8x128xf32> -> vector<8x128xf32>
    %c0_201 = arith.constant 0 : index
    %c0_202 = arith.constant 0 : index
    %194 = vector.load %arg6[%c0_201, %c0_202] : memref<128x128xf32, #tpu.memory_space<vmem>>, vector<128x128xf32>
    %cst_203 = arith.constant dense<0.000000e+00> : vector<8x128xf32>
    %195 = tpu.matmul %173, %194, %cst_203 {dimension_numbers = #tpu.dot_dimension_numbers<[1], [0], [0], [1], [0, 0, 1, 1], [], []>} : vector<8x128xf32>, vector<128x128xf32>, vector<8x128xf32> -> vector<8x128xf32>
    %cst_204 = arith.constant 0.000000e+00 : f32
    %196 = vector.broadcast %cst_204 : f32 to vector<8x128xf32>
    %197 = arith.maximumf %195, %196 : vector<8x128xf32>
    %c7_205 = arith.constant 7 : index
    %c0_206 = arith.constant 0 : index
    %c0_207 = arith.constant 0 : index
    %198 = vector.load %arg8[%c7_205, %c0_206, %c0_207] : memref<8x8x128xf32, #tpu.memory_space<vmem>>, vector<1x8x128xf32>
    %199 = vector.shape_cast %198 : vector<1x8x128xf32> to vector<8x128xf32>
    %200 = vector.shape_cast %197 : vector<8x128xf32> to vector<1x8x128xf32>
    tpu.vector_store %arg8[%c7_205, %c0_206, %c0_207], %200 {strides = array<i32>} : memref<8x8x128xf32, #tpu.memory_space<vmem>>, vector<1x8x128xf32>,
    %c7_208 = arith.constant 7 : index
    %c0_209 = arith.constant 0 : index
    %c0_210 = arith.constant 0 : index
    %201 = vector.load %arg7[%c7_208, %c0_209, %c0_210] : memref<8x8x128xf32, #tpu.memory_space<vmem>>, vector<1x8x128xf32>
    %202 = vector.shape_cast %201 : vector<1x8x128xf32> to vector<8x128xf32>
    %203 = vector.shape_cast %197 : vector<8x128xf32> to vector<1x8x128xf32>
    tpu.vector_store %arg7[%c7_208, %c0_209, %c0_210], %203 {strides = array<i32>} : memref<8x8x128xf32, #tpu.memory_space<vmem>>, vector<1x8x128xf32>,
    %c7_211 = arith.constant 7 : index
    %c0_212 = arith.constant 0 : index
    %c0_213 = arith.constant 0 : index
    %204 = vector.load %arg9[%c7_211, %c0_212, %c0_213] : memref<8x8x128xf32, #tpu.memory_space<vmem>>, vector<1x8x128xf32>
    %205 = vector.shape_cast %204 : vector<1x8x128xf32> to vector<8x128xf32>
    %206 = vector.shape_cast %193 : vector<8x128xf32> to vector<1x8x128xf32>
    tpu.vector_store %arg9[%c7_211, %c0_212, %c0_213], %206 {strides = array<i32>} : memref<8x8x128xf32, #tpu.memory_space<vmem>>, vector<1x8x128xf32>,
    return
  }
  func.func @transform_0(%arg0: i32) -> (i32, i32, i32) {
    %c0_i32 = arith.constant 0 : i32
    %c0_i32_0 = arith.constant 0 : i32
    %c0_i32_1 = arith.constant 0 : i32
    return %c0_i32, %arg0, %c0_i32_0 : i32, i32, i32
  }
  func.func @transform_1(%arg0: i32) -> (i32, i32) {
    %c0_i32 = arith.constant 0 : i32
    %c0_i32_0 = arith.constant 0 : i32
    %c0_i32_1 = arith.constant 0 : i32
    return %c0_i32, %c0_i32_0 : i32, i32
  }
  func.func @transform_2(%arg0: i32) -> (i32, i32) {
    %c0_i32 = arith.constant 0 : i32
    %c0_i32_0 = arith.constant 0 : i32
    %c0_i32_1 = arith.constant 0 : i32
    return %c0_i32, %c0_i32_0 : i32, i32
  }
  func.func @transform_3(%arg0: i32) -> (i32, i32) {
    %c0_i32 = arith.constant 0 : i32
    %c0_i32_0 = arith.constant 0 : i32
    %c0_i32_1 = arith.constant 0 : i32
    return %c0_i32, %c0_i32_0 : i32, i32
  }
  func.func @transform_4(%arg0: i32) -> (i32, i32) {
    %c0_i32 = arith.constant 0 : i32
    %c0_i32_0 = arith.constant 0 : i32
    %c0_i32_1 = arith.constant 0 : i32
    return %c0_i32, %c0_i32_0 : i32, i32
  }
  func.func @transform_5(%arg0: i32) -> (i32, i32) {
    %c0_i32 = arith.constant 0 : i32
    %c0_i32_0 = arith.constant 0 : i32
    %c0_i32_1 = arith.constant 0 : i32
    return %c0_i32, %c0_i32_0 : i32, i32
  }
  func.func @transform_6(%arg0: i32) -> (i32, i32, i32) {
    %c0_i32 = arith.constant 0 : i32
    %c0_i32_0 = arith.constant 0 : i32
    %c0_i32_1 = arith.constant 0 : i32
    return %c0_i32, %arg0, %c0_i32_0 : i32, i32, i32
  }
  func.func @transform_7(%arg0: i32) -> (i32, i32, i32) {
    %c0_i32 = arith.constant 0 : i32
    %c0_i32_0 = arith.constant 0 : i32
    %c0_i32_1 = arith.constant 0 : i32
    return %c0_i32, %arg0, %c0_i32_0 : i32, i32, i32
  }
  func.func @transform_8(%arg0: i32) -> (i32, i32, i32) {
    %c0_i32 = arith.constant 0 : i32
    %c0_i32_0 = arith.constant 0 : i32
    %c0_i32_1 = arith.constant 0 : i32
    return %c0_i32, %arg0, %c0_i32_0 : i32, i32, i32
  }
}

</mosaic_0001>

<llo_original>
// kernel: rnn2l_forward.1
$region0: #{rnn2l_forward.1}
  #allocation0 [shape = 'u32[]', space=smem, size = 0x4, offset = 0x4, fixed_abs, tag = 'smem constant byte address 0x4 - core index']
  #allocation1 [shape = 'u32[144,128]{1,0:T(1,128)}', space=vmem, size = 0x12000, scoped, tag = 'internal scratch']
  %s0 = inlined_call_operand.vmem [shape: f32[8,8,10], index: 0, kind: input, shape index: {}]
  %s1 = inlined_call_operand.vmem [shape: f32[10,128], index: 1, kind: input, shape index: {}]
  %s2 = inlined_call_operand.vmem [shape: f32[128,128], index: 2, kind: input, shape index: {}]
  %s3 = inlined_call_operand.vmem [shape: f32[128,128], index: 3, kind: input, shape index: {}]
  %s4 = inlined_call_operand.vmem [shape: f32[128,128], index: 4, kind: input, shape index: {}]
  %s5 = inlined_call_operand.vmem [shape: f32[128,128], index: 5, kind: input, shape index: {}]
  %s6 = inlined_call_operand.vmem [shape: f32[8,8,128], index: 6, kind: output, shape index: {0}]
  %s7 = inlined_call_operand.vmem [shape: f32[8,8,128], index: 7, kind: output, shape index: {1}]
  %s8 = inlined_call_operand.vmem [shape: f32[8,8,128], index: 8, kind: output, shape index: {2}]
  %9 = xla_tuple %s6, %s7, %s8
  %s10 = sld [smem:[#allocation0]]
  $region50: #{rnn2l_forward.1} parent=0
    _
  %s12 = ssub.s32 1, %s10
  %s13 = scalar_select 0, %s12, %s10
  // Predicated region
  $region2: #{rnn2l_forward.1} parent=0 // pred_check
    _
  $region3: #{rnn2l_forward.1} parent=0 // pred_check_branch
    %15 = sbr.rel (0) target = $region5
  $region4: #{rnn2l_forward.1} parent=0 // pred_region
    _
  $region5: #{rnn2l_forward.1} parent=0 // pred_fallthru
    _
  // Predicated region
  $region6: #{rnn2l_forward.1} parent=0 // pred_check
    _
  $region7: #{rnn2l_forward.1} parent=0 // pred_check_branch
    %17 = sbr.rel (0) target = $region9
  $region8: #{rnn2l_forward.1} parent=0 // pred_region
    _
  $region9: #{rnn2l_forward.1} parent=0 // pred_fallthru
    _
  // Predicated region
  $region10: #{rnn2l_forward.1} parent=0 // pred_check
    _
  $region11: #{rnn2l_forward.1} parent=0 // pred_check_branch
    %19 = sbr.rel (0) target = $region13
  $region12: #{rnn2l_forward.1} parent=0 // pred_region
    _
  $region13: #{rnn2l_forward.1} parent=0 // pred_fallthru
    _
  // Predicated region
  $region14: #{rnn2l_forward.1} parent=0 // pred_check
    _
  $region15: #{rnn2l_forward.1} parent=0 // pred_check_branch
    %21 = sbr.rel (0) target = $region17
  $region16: #{rnn2l_forward.1} parent=0 // pred_region
    _
  $region17: #{rnn2l_forward.1} parent=0 // pred_fallthru
    _
  // Predicated region
  $region18: #{rnn2l_forward.1} parent=0 // pred_check
    _
  $region19: #{rnn2l_forward.1} parent=0 // pred_check_branch
    %23 = sbr.rel (0) target = $region21
  $region20: #{rnn2l_forward.1} parent=0 // pred_region
    _
  $region21: #{rnn2l_forward.1} parent=0 // pred_fallthru
    _
  // Predicated region
  $region22: #{rnn2l_forward.1} parent=0 // pred_check
    _
  $region23: #{rnn2l_forward.1} parent=0 // pred_check_branch
    %25 = sbr.rel (0) target = $region25
  $region24: #{rnn2l_forward.1} parent=0 // pred_region
    _
  $region25: #{rnn2l_forward.1} parent=0 // pred_fallthru
    _
  %v26 = vld [vmem:[%s0] sm:$0xff]
  %v27 = vld [vmem:[%s1] sm:$0xff]
  %v28 = vld [vmem:[%s1 + $0x8] sm:$0x3]
  %v29 = vld [vmem:[%s2] sm:$0xff]
  %v30 = vld [vmem:[%s2 + $0x8] sm:$0xff]
  %v31 = vld [vmem:[%s2 + $0x10] sm:$0xff]
  %v32 = vld [vmem:[%s2 + $0x18] sm:$0xff]
  %v33 = vld [vmem:[%s2 + $0x20] sm:$0xff]
  %v34 = vld [vmem:[%s2 + $0x28] sm:$0xff]
  %v35 = vld [vmem:[%s2 + $0x30] sm:$0xff]
  %v36 = vld [vmem:[%s2 + $0x38] sm:$0xff]
  %v37 = vld [vmem:[%s2 + $0x40] sm:$0xff]
  %v38 = vld [vmem:[%s2 + $0x48] sm:$0xff]
  %v39 = vld [vmem:[%s2 + $0x50] sm:$0xff]
  %v40 = vld [vmem:[%s2 + $0x58] sm:$0xff]
  %v41 = vld [vmem:[%s2 + $0x60] sm:$0xff]
  %v42 = vld [vmem:[%s2 + $0x68] sm:$0xff]
  %v43 = vld [vmem:[%s2 + $0x70] sm:$0xff]
  %v44 = vld [vmem:[%s2 + $0x78] sm:$0xff]
  %45 = vmatprep.subr.mxu0 0.0
  %46 = vmatpush1.msra.mxu0 %v29
  %47 = vmatprep.subr.mxu0 0.0
  %48 = vmatpush1.msra.mxu0 %v30
  %49 = vmatprep.subr.mxu0 0.0
  %50 = vmatpush1.msra.mxu0 %v31
  %51 = vmatprep.subr.mxu0 0.0
  %52 = vmatpush1.msra.mxu0 %v32
  %53 = vmatprep.subr.mxu0 0.0
  %54 = vmatpush1.msra.mxu0 %v33
  %55 = vmatprep.subr.mxu0 0.0
  %56 = vmatpush1.msra.mxu0 %v34
  %57 = vmatprep.subr.mxu0 0.0
  %58 = vmatpush1.msra.mxu0 %v35
  %59 = vmatprep.subr.mxu0 0.0
  %60 = vmatpush1.msra.mxu0 %v36
  %61 = vmatprep.subr.mxu0 0.0
  %62 = vmatpush1.msra.mxu0 %v37
  %63 = vmatprep.subr.mxu0 0.0
  %64 = vmatpush1.msra.mxu0 %v38
  %65 = vmatprep.subr.mxu0 0.0
  %66 = vmatpush1.msra.mxu0 %v39
  %67 = vmatprep.subr.mxu0 0.0
  %68 = vmatpush1.msra.mxu0 %v40
  %69 = vmatprep.subr.mxu0 0.0
  %70 = vmatpush1.msra.mxu0 %v41
  %71 = vmatprep.subr.mxu0 0.0
  %72 = vmatpush1.msra.mxu0 %v42
  %73 = vmatprep.subr.mxu0 0.0
  %74 = vmatpush1.msra.mxu0 %v43
  %75 = vmatprep.subr.mxu0 0.0
  %76 = vmatpush1.msra.mxu0 %v44
  %77 = vmatprep.subr.mxu0 0.0
  %78 = vmatpush1.msra.mxu0 0.0
  %79 = vmatprep.subr.mxu0 0.0
  %80 = vmatpush1.msra.mxu0 0.0
  %81 = vmatprep.subr.mxu0 0.0
  %82 = vmatpush1.msra.mxu0 0.0
  %83 = vmatprep.subr.mxu0 0.0
  %84 = vmatpush1.msra.mxu0 0.0
  %85 = vmatprep.subr.mxu0 0.0
  %86 = vmatpush1.msra.mxu0 0.0
  %87 = vmatprep.subr.mxu0 0.0
  %88 = vmatpush1.msra.mxu0 0.0
  %89 = vmatprep.subr.mxu0 0.0
  %90 = vmatpush1.msra.mxu0 0.0
  %91 = vmatprep.subr.mxu0 0.0
  %92 = vmatpush1.msra.mxu0 0.0
  %93 = vmatprep.subr.mxu0 0.0
  %94 = vmatpush1.msra.mxu0 0.0
  %95 = vmatprep.subr.mxu0 0.0
  %96 = vmatpush1.msra.mxu0 0.0
  %97 = vmatprep.subr.mxu0 0.0
  %98 = vmatpush1.msra.mxu0 0.0
  %99 = vmatprep.subr.mxu0 0.0
  %100 = vmatpush1.msra.mxu0 0.0
  %101 = vmatprep.subr.mxu0 0.0
  %102 = vmatpush1.msra.mxu0 0.0
  %103 = vmatprep.subr.mxu0 0.0
  %104 = vmatpush1.msra.mxu0 0.0
  %105 = vmatprep.subr.mxu0 0.0
  %106 = vmatpush1.msra.mxu0 0.0
  %107 = vmatprep.subr.mxu0 0.0
  %108 = vmatpush1.msra.mxu0 0.0
  %109 = vmatprep.mubr.f32.mxu0 0.0
  %110 = vmatmul.mubr.f32.gmra.mrb[0].mxu0 0.0
  %v111 = vpop.f32.mrb[0].mxu0
  %v112 = vadd.f32 0.0, %v111
  %v113 = vpop.f32.mrb[0].mxu0
  %114 = vdwg.mxu0
  %vm115 = vcmask 80896
  %v117 = vsel %vm115, %v26, 0
  %vm119 = vcmask 1041408
  %v121 = vsel %vm119, %v28, 0
  %123 = vmatprep.subr.mxu0 0.0
  %124 = vmatpush1.msra.mxu0 %v27
  %125 = vmatprep.subr.mxu0 0.0
  %126 = vmatpush1.msra.mxu0 %v121
  %127 = vmatprep.subr.mxu0 0.0
  %128 = vmatpush1.msra.mxu0 0.0
  %129 = vmatprep.subr.mxu0 0.0
  %130 = vmatpush1.msra.mxu0 0.0
  %131 = vmatprep.subr.mxu0 0.0
  %132 = vmatpush1.msra.mxu0 0.0
  %133 = vmatprep.subr.mxu0 0.0
  %134 = vmatpush1.msra.mxu0 0.0
  %135 = vmatprep.subr.mxu0 0.0
  %136 = vmatpush1.msra.mxu0 0.0
  %137 = vmatprep.subr.mxu0 0.0
  %138 = vmatpush1.msra.mxu0 0.0
  %139 = vmatprep.subr.mxu0 0.0
  %140 = vmatpush1.msra.mxu0 0.0
  %141 = vmatprep.subr.mxu0 0.0
  %142 = vmatpush1.msra.mxu0 0.0
  %143 = vmatprep.subr.mxu0 0.0
  %144 = vmatpush1.msra.mxu0 0.0
  %145 = vmatprep.subr.mxu0 0.0
  %146 = vmatpush1.msra.mxu0 0.0
  %147 = vmatprep.subr.mxu0 0.0
  %148 = vmatpush1.msra.mxu0 0.0
  %149 = vmatprep.subr.mxu0 0.0
  %150 = vmatpush1.msra.mxu0 0.0
  %151 = vmatprep.subr.mxu0 0.0
  %152 = vmatpush1.msra.mxu0 0.0
  %153 = vmatprep.subr.mxu0 0.0
  %154 = vmatpush1.msra.mxu0 0.0
  %155 = vmatprep.subr.mxu0 0.0
  %156 = vmatpush1.msra.mxu0 0.0
  %157 = vmatprep.subr.mxu0 0.0
  %158 = vmatpush1.msra.mxu0 0.0
  %159 = vmatprep.subr.mxu0 0.0
  %160 = vmatpush1.msra.mxu0 0.0
  %161 = vmatprep.subr.mxu0 0.0
  %162 = vmatpush1.msra.mxu0 0.0
  %163 = vmatprep.subr.mxu0 0.0
  %164 = vmatpush1.msra.mxu0 0.0
  %165 = vmatprep.subr.mxu0 0.0
  %166 = vmatpush1.msra.mxu0 0.0
  %167 = vmatprep.subr.mxu0 0.0
  %168 = vmatpush1.msra.mxu0 0.0
  %169 = vmatprep.subr.mxu0 0.0
  %170 = vmatpush1.msra.mxu0 0.0
  %171 = vmatprep.subr.mxu0 0.0
  %172 = vmatpush1.msra.mxu0 0.0
  %173 = vmatprep.subr.mxu0 0.0
  %174 = vmatpush1.msra.mxu0 0.0
  %175 = vmatprep.subr.mxu0 0.0
  %176 = vmatpush1.msra.mxu0 0.0
  %177 = vmatprep.subr.mxu0 0.0
  %178 = vmatpush1.msra.mxu0 0.0
  %179 = vmatprep.subr.mxu0 0.0
  %180 = vmatpush1.msra.mxu0 0.0
  %181 = vmatprep.subr.mxu0 0.0
  %182 = vmatpush1.msra.mxu0 0.0
  %183 = vmatprep.subr.mxu0 0.0
  %184 = vmatpush1.msra.mxu0 0.0
  %185 = vmatprep.subr.mxu0 0.0
  %186 = vmatpush1.msra.mxu0 0.0
  %187 = vmatprep.mubr.f32.mxu0 0.0
  %188 = vmatmul.mubr.f32.gmra.mrb[0].mxu0 %v117
  %v189 = vpop.f32.mrb[0].mxu0
  %v190 = vadd.f32 %v112, %v189
  %v191 = vpop.f32.mrb[0].mxu0
  %192 = vdwg.mxu0
  %v193 = vmax.f32 %v190, 0.0
  %v194 = vld [vmem:[%s3] sm:$0xff]
  %v195 = vld [vmem:[%s3 + $0x8] sm:$0xff]
  %v196 = vld [vmem:[%s3 + $0x10] sm:$0xff]
  %v197 = vld [vmem:[%s3 + $0x18] sm:$0xff]
  %v198 = vld [vmem:[%s3 + $0x20] sm:$0xff]
  %v199 = vld [vmem:[%s3 + $0x28] sm:$0xff]
  %v200 = vld [vmem:[%s3 + $0x30] sm:$0xff]
  %v201 = vld [vmem:[%s3 + $0x38] sm:$0xff]
  %v202 = vld [vmem:[%s3 + $0x40] sm:$0xff]
  %v203 = vld [vmem:[%s3 + $0x48] sm:$0xff]
  %v204 = vld [vmem:[%s3 + $0x50] sm:$0xff]
  %v205 = vld [vmem:[%s3 + $0x58] sm:$0xff]
  %v206 = vld [vmem:[%s3 + $0x60] sm:$0xff]
  %v207 = vld [vmem:[%s3 + $0x68] sm:$0xff]
  %v208 = vld [vmem:[%s3 + $0x70] sm:$0xff]
  %v209 = vld [vmem:[%s3 + $0x78] sm:$0xff]
  %210 = vmatprep.subr.mxu0 0.0
  %211 = vmatpush1.msra.mxu0 %v194
  %212 = vmatprep.subr.mxu0 0.0
  %213 = vmatpush1.msra.mxu0 %v195
  %214 = vmatprep.subr.mxu0 0.0
  %215 = vmatpush1.msra.mxu0 %v196
  %216 = vmatprep.subr.mxu0 0.0
  %217 = vmatpush1.msra.mxu0 %v197
  %218 = vmatprep.subr.mxu0 0.0
  %219 = vmatpush1.msra.mxu0 %v198
  %220 = vmatprep.subr.mxu0 0.0
  %221 = vmatpush1.msra.mxu0 %v199
  %222 = vmatprep.subr.mxu0 0.0
  %223 = vmatpush1.msra.mxu0 %v200
  %224 = vmatprep.subr.mxu0 0.0
  %225 = vmatpush1.msra.mxu0 %v201
  %226 = vmatprep.subr.mxu0 0.0
  %227 = vmatpush1.msra.mxu0 %v202
  %228 = vmatprep.subr.mxu0 0.0
  %229 = vmatpush1.msra.mxu0 %v203
  %230 = vmatprep.subr.mxu0 0.0
  %231 = vmatpush1.msra.mxu0 %v204
  %232 = vmatprep.subr.mxu0 0.0
  %233 = vmatpush1.msra.mxu0 %v205
  %234 = vmatprep.subr.mxu0 0.0
  %235 = vmatpush1.msra.mxu0 %v206
  %236 = vmatprep.subr.mxu0 0.0
  %237 = vmatpush1.msra.mxu0 %v207
  %238 = vmatprep.subr.mxu0 0.0
  %239 = vmatpush1.msra.mxu0 %v208
  %240 = vmatprep.subr.mxu0 0.0
  %241 = vmatpush1.msra.mxu0 %v209
  %242 = vmatprep.subr.mxu0 0.0
  %243 = vmatpush1.msra.mxu0 0.0
  %244 = vmatprep.subr.mxu0 0.0
  %245 = vmatpush1.msra.mxu0 0.0
  %246 = vmatprep.subr.mxu0 0.0
  %247 = vmatpush1.msra.mxu0 0.0
  %248 = vmatprep.subr.mxu0 0.0
  %249 = vmatpush1.msra.mxu0 0.0
  %250 = vmatprep.subr.mxu0 0.0
  %251 = vmatpush1.msra.mxu0 0.0
  %252 = vmatprep.subr.mxu0 0.0
  %253 = vmatpush1.msra.mxu0 0.0
  %254 = vmatprep.subr.mxu0 0.0
  %255 = vmatpush1.msra.mxu0 0.0
  %256 = vmatprep.subr.mxu0 0.0
  %257 = vmatpush1.msra.mxu0 0.0
  %258 = vmatprep.subr.mxu0 0.0
  %259 = vmatpush1.msra.mxu0 0.0
  %260 = vmatprep.subr.mxu0 0.0
  %261 = vmatpush1.msra.mxu0 0.0
  %262 = vmatprep.subr.mxu0 0.0
  %263 = vmatpush1.msra.mxu0 0.0
  %264 = vmatprep.subr.mxu0 0.0
  %265 = vmatpush1.msra.mxu0 0.0
  %266 = vmatprep.subr.mxu0 0.0
  %267 = vmatpush1.msra.mxu0 0.0
  %268 = vmatprep.subr.mxu0 0.0
  %269 = vmatpush1.msra.mxu0 0.0
  %270 = vmatprep.subr.mxu0 0.0
  %271 = vmatpush1.msra.mxu0 0.0
  %272 = vmatprep.subr.mxu0 0.0
  %273 = vmatpush1.msra.mxu0 0.0
  %274 = vmatprep.mubr.f32.mxu0 0.0
  %275 = vmatmul.mubr.f32.gmra.mrb[0].mxu0 %v193
  %v276 = vpop.f32.mrb[0].mxu0
  %v277 = vadd.f32 0.0, %v276
  %v278 = vpop.f32.mrb[0].mxu0
  %279 = vdwg.mxu0
  %v280 = vld [vmem:[%s4] sm:$0xff]
  %v281 = vld [vmem:[%s4 + $0x8] sm:$0xff]
  %v282 = vld [vmem:[%s4 + $0x10] sm:$0xff]
  %v283 = vld [vmem:[%s4 + $0x18] sm:$0xff]
  %v284 = vld [vmem:[%s4 + $0x20] sm:$0xff]
  %v285 = vld [vmem:[%s4 + $0x28] sm:$0xff]
  %v286 = vld [vmem:[%s4 + $0x30] sm:$0xff]
  %v287 = vld [vmem:[%s4 + $0x38] sm:$0xff]
  %v288 = vld [vmem:[%s4 + $0x40] sm:$0xff]
  %v289 = vld [vmem:[%s4 + $0x48] sm:$0xff]
  %v290 = vld [vmem:[%s4 + $0x50] sm:$0xff]
  %v291 = vld [vmem:[%s4 + $0x58] sm:$0xff]
  %v292 = vld [vmem:[%s4 + $0x60] sm:$0xff]
  %v293 = vld [vmem:[%s4 + $0x68] sm:$0xff]
  %v294 = vld [vmem:[%s4 + $0x70] sm:$0xff]
  %v295 = vld [vmem:[%s4 + $0x78] sm:$0xff]
  %v296 = vld [vmem:[%s5] sm:$0xff]
  %v297 = vld [vmem:[%s5 + $0x8] sm:$0xff]
  %v298 = vld [vmem:[%s5 + $0x10] sm:$0xff]
  %v299 = vld [vmem:[%s5 + $0x18] sm:$0xff]
  %v300 = vld [vmem:[%s5 + $0x20] sm:$0xff]
  %v301 = vld [vmem:[%s5 + $0x28] sm:$0xff]
  %v302 = vld [vmem:[%s5 + $0x30] sm:$0xff]
  %v303 = vld [vmem:[%s5 + $0x38] sm:$0xff]
  %v304 = vld [vmem:[%s5 + $0x40] sm:$0xff]
  %v305 = vld [vmem:[%s5 + $0x48] sm:$0xff]
  %v306 = vld [vmem:[%s5 + $0x50] sm:$0xff]
  %v307 = vld [vmem:[%s5 + $0x58] sm:$0xff]
  %v308 = vld [vmem:[%s5 + $0x60] sm:$0xff]
  %v309 = vld [vmem:[%s5 + $0x68] sm:$0xff]
  %v310 = vld [vmem:[%s5 + $0x70] sm:$0xff]
  %v311 = vld [vmem:[%s5 + $0x78] sm:$0xff]
  %312 = vmatprep.subr.mxu0 0.0
  %313 = vmatpush1.msra.mxu0 %v296
  %314 = vmatprep.subr.mxu0 0.0
  %315 = vmatpush1.msra.mxu0 %v297
  %316 = vmatprep.subr.mxu0 0.0
  %317 = vmatpush1.msra.mxu0 %v298
  %318 = vmatprep.subr.mxu0 0.0
  %319 = vmatpush1.msra.mxu0 %v299
  %320 = vmatprep.subr.mxu0 0.0
  %321 = vmatpush1.msra.mxu0 %v300
  %322 = vmatprep.subr.mxu0 0.0
  %323 = vmatpush1.msra.mxu0 %v301
  %324 = vmatprep.subr.mxu0 0.0
  %325 = vmatpush1.msra.mxu0 %v302
  %326 = vmatprep.subr.mxu0 0.0
  %327 = vmatpush1.msra.mxu0 %v303
  %328 = vmatprep.subr.mxu0 0.0
  %329 = vmatpush1.msra.mxu0 %v304
  %330 = vmatprep.subr.mxu0 0.0
  %331 = vmatpush1.msra.mxu0 %v305
  %332 = vmatprep.subr.mxu0 0.0
  %333 = vmatpush1.msra.mxu0 %v306
  %334 = vmatprep.subr.mxu0 0.0
  %335 = vmatpush1.msra.mxu0 %v307
  %336 = vmatprep.subr.mxu0 0.0
  %337 = vmatpush1.msra.mxu0 %v308
  %338 = vmatprep.subr.mxu0 0.0
  %339 = vmatpush1.msra.mxu0 %v309
  %340 = vmatprep.subr.mxu0 0.0
  %341 = vmatpush1.msra.mxu0 %v310
  %342 = vmatprep.subr.mxu0 0.0
  %343 = vmatpush1.msra.mxu0 %v311
  %344 = vmatprep.subr.mxu0 0.0
  %345 = vmatpush1.msra.mxu0 0.0
  %346 = vmatprep.subr.mxu0 0.0
  %347 = vmatpush1.msra.mxu0 0.0
  %348 = vmatprep.subr.mxu0 0.0
  %349 = vmatpush1.msra.mxu0 0.0
  %350 = vmatprep.subr.mxu0 0.0
  %351 = vmatpush1.msra.mxu0 0.0
  %352 = vmatprep.subr.mxu0 0.0
  %353 = vmatpush1.msra.mxu0 0.0
  %354 = vmatprep.subr.mxu0 0.0
  %355 = vmatpush1.msra.mxu0 0.0
  %356 = vmatprep.subr.mxu0 0.0
  %357 = vmatpush1.msra.mxu0 0.0
  %358 = vmatprep.subr.mxu0 0.0
  %359 = vmatpush1.msra.mxu0 0.0
  %360 = vmatprep.subr.mxu0 0.0
  %361 = vmatpush1.msra.mxu0 0.0
  %362 = vmatprep.subr.mxu0 0.0
  %363 = vmatpush1.msra.mxu0 0.0
  %364 = vmatprep.subr.mxu0 0.0
  %365 = vmatpush1.msra.mxu0 0.0
  %366 = vmatprep.subr.mxu0 0.0
  %367 = vmatpush1.msra.mxu0 0.0
  %368 = vmatprep.subr.mxu0 0.0
  %369 = vmatpush1.msra.mxu0 0.0
  %370 = vmatprep.subr.mxu0 0.0
  %371 = vmatpush1.msra.mxu0 0.0
  %372 = vmatprep.subr.mxu0 0.0
  %373 = vmatpush1.msra.mxu0 0.0
  %374 = vmatprep.subr.mxu0 0.0
  %375 = vmatpush1.msra.mxu0 0.0
  %376 = vmatprep.mubr.f32.mxu0 0.0
  %377 = vmatmul.mubr.f32.gmra.mrb[0].mxu0 0.0
  %v378 = vpop.f32.mrb[0].mxu0
  %v379 = vadd.f32 0.0, %v378
  %v380 = vpop.f32.mrb[0].mxu0
  %381 = vdwg.mxu0
  %382 = vmatprep.subr.mxu0 0.0
  %383 = vmatpush1.msra.mxu0 %v280
  %384 = vmatprep.subr.mxu0 0.0
  %385 = vmatpush1.msra.mxu0 %v281
  %386 = vmatprep.subr.mxu0 0.0
  %387 = vmatpush1.msra.mxu0 %v282
  %388 = vmatprep.subr.mxu0 0.0
  %389 = vmatpush1.msra.mxu0 %v283
  %390 = vmatprep.subr.mxu0 0.0
  %391 = vmatpush1.msra.mxu0 %v284
  %392 = vmatprep.subr.mxu0 0.0
  %393 = vmatpush1.msra.mxu0 %v285
  %394 = vmatprep.subr.mxu0 0.0
  %395 = vmatpush1.msra.mxu0 %v286
  %396 = vmatprep.subr.mxu0 0.0
  %397 = vmatpush1.msra.mxu0 %v287
  %398 = vmatprep.subr.mxu0 0.0
  %399 = vmatpush1.msra.mxu0 %v288
  %400 = vmatprep.subr.mxu0 0.0
  %401 = vmatpush1.msra.mxu0 %v289
  %402 = vmatprep.subr.mxu0 0.0
  %403 = vmatpush1.msra.mxu0 %v290
  %404 = vmatprep.subr.mxu0 0.0
  %405 = vmatpush1.msra.mxu0 %v291
  %406 = vmatprep.subr.mxu0 0.0
  %407 = vmatpush1.msra.mxu0 %v292
  %408 = vmatprep.subr.mxu0 0.0
  %409 = vmatpush1.msra.mxu0 %v293
  %410 = vmatprep.subr.mxu0 0.0
  %411 = vmatpush1.msra.mxu0 %v294
  %412 = vmatprep.subr.mxu0 0.0
  %413 = vmatpush1.msra.mxu0 %v295
  %414 = vmatprep.subr.mxu0 0.0
  %415 = vmatpush1.msra.mxu0 0.0
  %416 = vmatprep.subr.mxu0 0.0
  %417 = vmatpush1.msra.mxu0 0.0
  %418 = vmatprep.subr.mxu0 0.0
  %419 = vmatpush1.msra.mxu0 0.0
  %420 = vmatprep.subr.mxu0 0.0
  %421 = vmatpush1.msra.mxu0 0.0
  %422 = vmatprep.subr.mxu0 0.0
  %423 = vmatpush1.msra.mxu0 0.0
  %424 = vmatprep.subr.mxu0 0.0
  %425 = vmatpush1.msra.mxu0 0.0
  %426 = vmatprep.subr.mxu0 0.0
  %427 = vmatpush1.msra.mxu0 0.0
  %428 = vmatprep.subr.mxu0 0.0
  %429 = vmatpush1.msra.mxu0 0.0
  %430 = vmatprep.subr.mxu0 0.0
  %431 = vmatpush1.msra.mxu0 0.0
  %432 = vmatprep.subr.mxu0 0.0
  %433 = vmatpush1.msra.mxu0 0.0
  %434 = vmatprep.subr.mxu0 0.0
  %435 = vmatpush1.msra.mxu0 0.0
  %436 = vmatprep.subr.mxu0 0.0
  %437 = vmatpush1.msra.mxu0 0.0
  %438 = vmatprep.subr.mxu0 0.0
  %439 = vmatpush1.msra.mxu0 0.0
  %440 = vmatprep.subr.mxu0 0.0
  %441 = vmatpush1.msra.mxu0 0.0
  %442 = vmatprep.subr.mxu0 0.0
  %443 = vmatpush1.msra.mxu0 0.0
  %444 = vmatprep.subr.mxu0 0.0
  %445 = vmatpush1.msra.mxu0 0.0
  %446 = vmatprep.mubr.f32.mxu0 0.0
  %447 = vmatmul.mubr.f32.gmra.mrb[0].mxu0 %v277
  %v448 = vpop.f32.mrb[0].mxu0
  %v449 = vadd.f32 %v379, %v448
  %v450 = vpop.f32.mrb[0].mxu0
  %451 = vdwg.mxu0
  %v452 = vmax.f32 %v449, 0.0
  %453 = vst [vmem:[%s7] sm:$0xff] %v452
  %454 = vst [vmem:[%s6] sm:$0xff] 0.0
  %455 = vst [vmem:[%s8] sm:$0xff] 0.0
  %s456 = scalar_lea.vmem %s0, 8
  %v457 = vld [vmem:[%s456] sm:$0xff]
  %v458 = vld [vmem:[%s1] sm:$0xff]
  %v459 = vld [vmem:[%s1 + $0x8] sm:$0x3]
  %v460 = vld [vmem:[%s2] sm:$0xff]
  %v461 = vld [vmem:[%s2 + $0x8] sm:$0xff]
  %v462 = vld [vmem:[%s2 + $0x10] sm:$0xff]
  %v463 = vld [vmem:[%s2 + $0x18] sm:$0xff]
  %v464 = vld [vmem:[%s2 + $0x20] sm:$0xff]
  %v465 = vld [vmem:[%s2 + $0x28] sm:$0xff]
  %v466 = vld [vmem:[%s2 + $0x30] sm:$0xff]
  %v467 = vld [vmem:[%s2 + $0x38] sm:$0xff]
  %v468 = vld [vmem:[%s2 + $0x40] sm:$0xff]
  %v469 = vld [vmem:[%s2 + $0x48] sm:$0xff]
  %v470 = vld [vmem:[%s2 + $0x50] sm:$0xff]
  %v471 = vld [vmem:[%s2 + $0x58] sm:$0xff]
  %v472 = vld [vmem:[%s2 + $0x60] sm:$0xff]
  %v473 = vld [vmem:[%s2 + $0x68] sm:$0xff]
  %v474 = vld [vmem:[%s2 + $0x70] sm:$0xff]
  %v475 = vld [vmem:[%s2 + $0x78] sm:$0xff]
  %476 = vmatprep.subr.mxu0 0.0
  %477 = vmatpush1.msra.mxu0 %v460
  %478 = vmatprep.subr.mxu0 0.0
  %479 = vmatpush1.msra.mxu0 %v461
  %480 = vmatprep.subr.mxu0 0.0
  %481 = vmatpush1.msra.mxu0 %v462
  %482 = vmatprep.subr.mxu0 0.0
  %483 = vmatpush1.msra.mxu0 %v463
  %484 = vmatprep.subr.mxu0 0.0
  %485 = vmatpush1.msra.mxu0 %v464
  %486 = vmatprep.subr.mxu0 0.0
  %487 = vmatpush1.msra.mxu0 %v465
  %488 = vmatprep.subr.mxu0 0.0
  %489 = vmatpush1.msra.mxu0 %v466
  %490 = vmatprep.subr.mxu0 0.0
  %491 = vmatpush1.msra.mxu0 %v467
  %492 = vmatprep.subr.mxu0 0.0
  %493 = vmatpush1.msra.mxu0 %v468
  %494 = vmatprep.subr.mxu0 0.0
  %495 = vmatpush1.msra.mxu0 %v469
  %496 = vmatprep.subr.mxu0 0.0
  %497 = vmatpush1.msra.mxu0 %v470
  %498 = vmatprep.subr.mxu0 0.0
  %499 = vmatpush1.msra.mxu0 %v471
  %500 = vmatprep.subr.mxu0 0.0
  %501 = vmatpush1.msra.mxu0 %v472
  %502 = vmatprep.subr.mxu0 0.0
  %503 = vmatpush1.msra.mxu0 %v473
  %504 = vmatprep.subr.mxu0 0.0
  %505 = vmatpush1.msra.mxu0 %v474
  %506 = vmatprep.subr.mxu0 0.0
  %507 = vmatpush1.msra.mxu0 %v475
  %508 = vmatprep.subr.mxu0 0.0
  %509 = vmatpush1.msra.mxu0 0.0
  %510 = vmatprep.subr.mxu0 0.0
  %511 = vmatpush1.msra.mxu0 0.0
  %512 = vmatprep.subr.mxu0 0.0
  %513 = vmatpush1.msra.mxu0 0.0
  %514 = vmatprep.subr.mxu0 0.0
  %515 = vmatpush1.msra.mxu0 0.0
  %516 = vmatprep.subr.mxu0 0.0
  %517 = vmatpush1.msra.mxu0 0.0
  %518 = vmatprep.subr.mxu0 0.0
  %519 = vmatpush1.msra.mxu0 0.0
  %520 = vmatprep.subr.mxu0 0.0
  %521 = vmatpush1.msra.mxu0 0.0
  %522 = vmatprep.subr.mxu0 0.0
  %523 = vmatpush1.msra.mxu0 0.0
  %524 = vmatprep.subr.mxu0 0.0
  %525 = vmatpush1.msra.mxu0 0.0
  %526 = vmatprep.subr.mxu0 0.0
  %527 = vmatpush1.msra.mxu0 0.0
  %528 = vmatprep.subr.mxu0 0.0
  %529 = vmatpush1.msra.mxu0 0.0
  %530 = vmatprep.subr.mxu0 0.0
  %531 = vmatpush1.msra.mxu0 0.0
  %532 = vmatprep.subr.mxu0 0.0
  %533 = vmatpush1.msra.mxu0 0.0
  %534 = vmatprep.subr.mxu0 0.0
  %535 = vmatpush1.msra.mxu0 0.0
  %536 = vmatprep.subr.mxu0 0.0
  %537 = vmatpush1.msra.mxu0 0.0
  %538 = vmatprep.subr.mxu0 0.0
  %539 = vmatpush1.msra.mxu0 0.0
  %540 = vmatprep.mubr.f32.mxu0 0.0
  %541 = vmatmul.mubr.f32.gmra.mrb[0].mxu0 %v193
  %v542 = vpop.f32.mrb[0].mxu0
  %v543 = vadd.f32 0.0, %v542
  %v544 = vpop.f32.mrb[0].mxu0
  %545 = vdwg.mxu0
  %v547 = vsel %vm115, %v457, 0
  %v550 = vsel %vm119, %v459, 0
  %552 = vmatprep.subr.mxu0 0.0
  %553 = vmatpush1.msra.mxu0 %v458
  %554 = vmatprep.subr.mxu0 0.0
  %555 = vmatpush1.msra.mxu0 %v550
  %556 = vmatprep.subr.mxu0 0.0
  %557 = vmatpush1.msra.mxu0 0.0
  %558 = vmatprep.subr.mxu0 0.0
  %559 = vmatpush1.msra.mxu0 0.0
  %560 = vmatprep.subr.mxu0 0.0
  %561 = vmatpush1.msra.mxu0 0.0
  %562 = vmatprep.subr.mxu0 0.0
  %563 = vmatpush1.msra.mxu0 0.0
  %564 = vmatprep.subr.mxu0 0.0
  %565 = vmatpush1.msra.mxu0 0.0
  %566 = vmatprep.subr.mxu0 0.0
  %567 = vmatpush1.msra.mxu0 0.0
  %568 = vmatprep.subr.mxu0 0.0
  %569 = vmatpush1.msra.mxu0 0.0
  %570 = vmatprep.subr.mxu0 0.0
  %571 = vmatpush1.msra.mxu0 0.0
  %572 = vmatprep.subr.mxu0 0.0
  %573 = vmatpush1.msra.mxu0 0.0
  %574 = vmatprep.subr.mxu0 0.0
  %575 = vmatpush1.msra.mxu0 0.0
  %576 = vmatprep.subr.mxu0 0.0
  %577 = vmatpush1.msra.mxu0 0.0
  %578 = vmatprep.subr.mxu0 0.0
  %579 = vmatpush1.msra.mxu0 0.0
  %580 = vmatprep.subr.mxu0 0.0
  %581 = vmatpush1.msra.mxu0 0.0
  %582 = vmatprep.subr.mxu0 0.0
  %583 = vmatpush1.msra.mxu0 0.0
  %584 = vmatprep.subr.mxu0 0.0
  %585 = vmatpush1.msra.mxu0 0.0
  %586 = vmatprep.subr.mxu0 0.0
  %587 = vmatpush1.msra.mxu0 0.0
  %588 = vmatprep.subr.mxu0 0.0
  %589 = vmatpush1.msra.mxu0 0.0
  %590 = vmatprep.subr.mxu0 0.0
  %591 = vmatpush1.msra.mxu0 0.0
  %592 = vmatprep.subr.mxu0 0.0
  %593 = vmatpush1.msra.mxu0 0.0
  %594 = vmatprep.subr.mxu0 0.0
  %595 = vmatpush1.msra.mxu0 0.0
  %596 = vmatprep.subr.mxu0 0.0
  %597 = vmatpush1.msra.mxu0 0.0
  %598 = vmatprep.subr.mxu0 0.0
  %599 = vmatpush1.msra.mxu0 0.0
  %600 = vmatprep.subr.mxu0 0.0
  %601 = vmatpush1.msra.mxu0 0.0
  %602 = vmatprep.subr.mxu0 0.0
  %603 = vmatpush1.msra.mxu0 0.0
  %604 = vmatprep.subr.mxu0 0.0
  %605 = vmatpush1.msra.mxu0 0.0
  %606 = vmatprep.subr.mxu0 0.0
  %607 = vmatpush1.msra.mxu0 0.0
  %608 = vmatprep.subr.mxu0 0.0
  %609 = vmatpush1.msra.mxu0 0.0
  %610 = vmatprep.subr.mxu0 0.0
  %611 = vmatpush1.msra.mxu0 0.0
  %612 = vmatprep.subr.mxu0 0.0
  %613 = vmatpush1.msra.mxu0 0.0
  %614 = vmatprep.subr.mxu0 0.0
  %615 = vmatpush1.msra.mxu0 0.0
  %616 = vmatprep.mubr.f32.mxu0 0.0
  %617 = vmatmul.mubr.f32.gmra.mrb[0].mxu0 %v547
  %v618 = vpop.f32.mrb[0].mxu0
  %v619 = vadd.f32 %v543, %v618
  %v620 = vpop.f32.mrb[0].mxu0
  %621 = vdwg.mxu0
  %v622 = vmax.f32 %v619, 0.0
  %v623 = vld [vmem:[%s3] sm:$0xff]
  %v624 = vld [vmem:[%s3 + $0x8] sm:$0xff]
  %v625 = vld [vmem:[%s3 + $0x10] sm:$0xff]
  %v626 = vld [vmem:[%s3 + $0x18] sm:$0xff]
  %v627 = vld [vmem:[%s3 + $0x20] sm:$0xff]
  %v628 = vld [vmem:[%s3 + $0x28] sm:$0xff]
  %v629 = vld [vmem:[%s3 + $0x30] sm:$0xff]
  %v630 = vld [vmem:[%s3 + $0x38] sm:$0xff]
  %v631 = vld [vmem:[%s3 + $0x40] sm:$0xff]
  %v632 = vld [vmem:[%s3 + $0x48] sm:$0xff]
  %v633 = vld [vmem:[%s3 + $0x50] sm:$0xff]
  %v634 = vld [vmem:[%s3 + $0x58] sm:$0xff]
  %v635 = vld [vmem:[%s3 + $0x60] sm:$0xff]
  %v636 = vld [vmem:[%s3 + $0x68] sm:$0xff]
  %v637 = vld [vmem:[%s3 + $0x70] sm:$0xff]
  %v638 = vld [vmem:[%s3 + $0x78] sm:$0xff]
  %639 = vmatprep.subr.mxu0 0.0
  %640 = vmatpush1.msra.mxu0 %v623
  %641 = vmatprep.subr.mxu0 0.0
  %642 = vmatpush1.msra.mxu0 %v624
  %643 = vmatprep.subr.mxu0 0.0
  %644 = vmatpush1.msra.mxu0 %v625
  %645 = vmatprep.subr.mxu0 0.0
  %646 = vmatpush1.msra.mxu0 %v626
  %647 = vmatprep.subr.mxu0 0.0
  %648 = vmatpush1.msra.mxu0 %v627
  %649 = vmatprep.subr.mxu0 0.0
  %650 = vmatpush1.msra.mxu0 %v628
  %651 = vmatprep.subr.mxu0 0.0
  %652 = vmatpush1.msra.mxu0 %v629
  %653 = vmatprep.subr.mxu0 0.0
  %654 = vmatpush1.msra.mxu0 %v630
  %655 = vmatprep.subr.mxu0 0.0
  %656 = vmatpush1.msra.mxu0 %v631
  %657 = vmatprep.subr.mxu0 0.0
  %658 = vmatpush1.msra.mxu0 %v632
  %659 = vmatprep.subr.mxu0 0.0
  %660 = vmatpush1.msra.mxu0 %v633
  %661 = vmatprep.subr.mxu0 0.0
  %662 = vmatpush1.msra.mxu0 %v634
  %663 = vmatprep.subr.mxu0 0.0
  %664 = vmatpush1.msra.mxu0 %v635
  %665 = vmatprep.subr.mxu0 0.0
  %666 = vmatpush1.msra.mxu0 %v636
  %667 = vmatprep.subr.mxu0 0.0
  %668 = vmatpush1.msra.mxu0 %v637
  %669 = vmatprep.subr.mxu0 0.0
  %670 = vmatpush1.msra.mxu0 %v638
  %671 = vmatprep.subr.mxu0 0.0
  %672 = vmatpush1.msra.mxu0 0.0
  %673 = vmatprep.subr.mxu0 0.0
  %674 = vmatpush1.msra.mxu0 0.0
  %675 = vmatprep.subr.mxu0 0.0
  %676 = vmatpush1.msra.mxu0 0.0
  %677 = vmatprep.subr.mxu0 0.0
  %678 = vmatpush1.msra.mxu0 0.0
  %679 = vmatprep.subr.mxu0 0.0
  %680 = vmatpush1.msra.mxu0 0.0
  %681 = vmatprep.subr.mxu0 0.0
  %682 = vmatpush1.msra.mxu0 0.0
  %683 = vmatprep.subr.mxu0 0.0
  %684 = vmatpush1.msra.mxu0 0.0
  %685 = vmatprep.subr.mxu0 0.0
  %686 = vmatpush1.msra.mxu0 0.0
  %687 = vmatprep.subr.mxu0 0.0
  %688 = vmatpush1.msra.mxu0 0.0
  %689 = vmatprep.subr.mxu0 0.0
  %690 = vmatpush1.msra.mxu0 0.0
  %691 = vmatprep.subr.mxu0 0.0
  %692 = vmatpush1.msra.mxu0 0.0
  %693 = vmatprep.subr.mxu0 0.0
  %694 = vmatpush1.msra.mxu0 0.0
  %695 = vmatprep.subr.mxu0 0.0
  %696 = vmatpush1.msra.mxu0 0.0
  %697 = vmatprep.subr.mxu0 0.0
  %698 = vmatpush1.msra.mxu0 0.0
  %699 = vmatprep.subr.mxu0 0.0
  %700 = vmatpush1.msra.mxu0 0.0
  %701 = vmatprep.subr.mxu0 0.0
  %702 = vmatpush1.msra.mxu0 0.0
  %703 = vmatprep.mubr.f32.mxu0 0.0
  %704 = vmatmul.mubr.f32.gmra.mrb[0].mxu0 %v622
  %v705 = vpop.f32.mrb[0].mxu0
  %v706 = vadd.f32 0.0, %v705
  %v707 = vpop.f32.mrb[0].mxu0
  %708 = vdwg.mxu0
  %v709 = vld [vmem:[%s5] sm:$0xff]
  %v710 = vld [vmem:[%s5 + $0x8] sm:$0xff]
  %v711 = vld [vmem:[%s5 + $0x10] sm:$0xff]
  %v712 = vld [vmem:[%s5 + $0x18] sm:$0xff]
  %v713 = vld [vmem:[%s5 + $0x20] sm:$0xff]
  %v714 = vld [vmem:[%s5 + $0x28] sm:$0xff]
  %v715 = vld [vmem:[%s5 + $0x30] sm:$0xff]
  %v716 = vld [vmem:[%s5 + $0x38] sm:$0xff]
  %v717 = vld [vmem:[%s5 + $0x40] sm:$0xff]
  %v718 = vld [vmem:[%s5 + $0x48] sm:$0xff]
  %v719 = vld [vmem:[%s5 + $0x50] sm:$0xff]
  %v720 = vld [vmem:[%s5 + $0x58] sm:$0xff]
  %v721 = vld [vmem:[%s5 + $0x60] sm:$0xff]
  %v722 = vld [vmem:[%s5 + $0x68] sm:$0xff]
  %v723 = vld [vmem:[%s5 + $0x70] sm:$0xff]
  %v724 = vld [vmem:[%s5 + $0x78] sm:$0xff]
  %725 = vmatprep.subr.mxu0 0.0
  %726 = vmatpush1.msra.mxu0 %v709
  %727 = vmatprep.subr.mxu0 0.0
  %728 = vmatpush1.msra.mxu0 %v710
  %729 = vmatprep.subr.mxu0 0.0
  %730 = vmatpush1.msra.mxu0 %v711
  %731 = vmatprep.subr.mxu0 0.0
  %732 = vmatpush1.msra.mxu0 %v712
  %733 = vmatprep.subr.mxu0 0.0
  %734 = vmatpush1.msra.mxu0 %v713
  %735 = vmatprep.subr.mxu0 0.0
  %736 = vmatpush1.msra.mxu0 %v714
  %737 = vmatprep.subr.mxu0 0.0
  %738 = vmatpush1.msra.mxu0 %v715
  %739 = vmatprep.subr.mxu0 0.0
  %740 = vmatpush1.msra.mxu0 %v716
  %741 = vmatprep.subr.mxu0 0.0
  %742 = vmatpush1.msra.mxu0 %v717
  %743 = vmatprep.subr.mxu0 0.0
  %744 = vmatpush1.msra.mxu0 %v718
  %745 = vmatprep.subr.mxu0 0.0
  %746 = vmatpush1.msra.mxu0 %v719
  %747 = vmatprep.subr.mxu0 0.0
  %748 = vmatpush1.msra.mxu0 %v720
  %749 = vmatprep.subr.mxu0 0.0
  %750 = vmatpush1.msra.mxu0 %v721
  %751 = vmatprep.subr.mxu0 0.0
  %752 = vmatpush1.msra.mxu0 %v722
  %753 = vmatprep.subr.mxu0 0.0
  %754 = vmatpush1.msra.mxu0 %v723
  %755 = vmatprep.subr.mxu0 0.0
  %756 = vmatpush1.msra.mxu0 %v724
  %757 = vmatprep.subr.mxu0 0.0
  %758 = vmatpush1.msra.mxu0 0.0
  %759 = vmatprep.subr.mxu0 0.0
  %760 = vmatpush1.msra.mxu0 0.0
  %761 = vmatprep.subr.mxu0 0.0
  %762 = vmatpush1.msra.mxu0 0.0
  %763 = vmatprep.subr.mxu0 0.0
  %764 = vmatpush1.msra.mxu0 0.0
  %765 = vmatprep.subr.mxu0 0.0
  %766 = vmatpush1.msra.mxu0 0.0
  %767 = vmatprep.subr.mxu0 0.0
  %768 = vmatpush1.msra.mxu0 0.0
  %769 = vmatprep.subr.mxu0 0.0
  %770 = vmatpush1.msra.mxu0 0.0
  %771 = vmatprep.subr.mxu0 0.0
  %772 = vmatpush1.msra.mxu0 0.0
  %773 = vmatprep.subr.mxu0 0.0
  %774 = vmatpush1.msra.mxu0 0.0
  %775 = vmatprep.subr.mxu0 0.0
  %776 = vmatpush1.msra.mxu0 0.0
  %777 = vmatprep.subr.mxu0 0.0
  %778 = vmatpush1.msra.mxu0 0.0
  %779 = vmatprep.subr.mxu0 0.0
  %780 = vmatpush1.msra.mxu0 0.0
  %781 = vmatprep.subr.mxu0 0.0
  %782 = vmatpush1.msra.mxu0 0.0
  %783 = vmatprep.subr.mxu0 0.0
  %784 = vmatpush1.msra.mxu0 0.0
  %785 = vmatprep.subr.mxu0 0.0
  %786 = vmatpush1.msra.mxu0 0.0
  %787 = vmatprep.subr.mxu0 0.0
  %788 = vmatpush1.msra.mxu0 0.0
  %789 = vmatprep.mubr.f32.mxu0 0.0
  %790 = vmatmul.mubr.f32.gmra.mrb[0].mxu0 %v452
  %v791 = vpop.f32.mrb[0].mxu0
  %v792 = vadd.f32 0.0, %v791
  %v793 = vpop.f32.mrb[0].mxu0
  %794 = vdwg.mxu0
  %v795 = vmax.f32 %v792, 0.0
  %s796 = scalar_lea.vmem %s7, 8
  %797 = vst [vmem:[%s796] sm:$0xff] %v795
  %s798 = scalar_lea.vmem %s6, 8
  %799 = vst [vmem:[%s798] sm:$0xff] %v795
  %s800 = scalar_lea.vmem %s8, 8
  %801 = vst [vmem:[%s800] sm:$0xff] %v706
  %s802 = scalar_lea.vmem %s0, 16
  %v803 = vld [vmem:[%s802] sm:$0xff]
  %v804 = vld [vmem:[%s1] sm:$0xff]
  %v805 = vld [vmem:[%s1 + $0x8] sm:$0x3]
  %v806 = vld [vmem:[%s2] sm:$0xff]
  %v807 = vld [vmem:[%s2 + $0x8] sm:$0xff]
  %v808 = vld [vmem:[%s2 + $0x10] sm:$0xff]
  %v809 = vld [vmem:[%s2 + $0x18] sm:$0xff]
  %v810 = vld [vmem:[%s2 + $0x20] sm:$0xff]
  %v811 = vld [vmem:[%s2 + $0x28] sm:$0xff]
  %v812 = vld [vmem:[%s2 + $0x30] sm:$0xff]
  %v813 = vld [vmem:[%s2 + $0x38] sm:$0xff]
  %v814 = vld [vmem:[%s2 + $0x40] sm:$0xff]
  %v815 = vld [vmem:[%s2 + $0x48] sm:$0xff]
  %v816 = vld [vmem:[%s2 + $0x50] sm:$0xff]
  %v817 = vld [vmem:[%s2 + $0x58] sm:$0xff]
  %v818 = vld [vmem:[%s2 + $0x60] sm:$0xff]
  %v819 = vld [vmem:[%s2 + $0x68] sm:$0xff]
  %v820 = vld [vmem:[%s2 + $0x70] sm:$0xff]
  %v821 = vld [vmem:[%s2 + $0x78] sm:$0xff]
  %822 = vmatprep.subr.mxu0 0.0
  %823 = vmatpush1.msra.mxu0 %v806
  %824 = vmatprep.subr.mxu0 0.0
  %825 = vmatpush1.msra.mxu0 %v807
  %826 = vmatprep.subr.mxu0 0.0
  %827 = vmatpush1.msra.mxu0 %v808
  %828 = vmatprep.subr.mxu0 0.0
  %829 = vmatpush1.msra.mxu0 %v809
  %830 = vmatprep.subr.mxu0 0.0
  %831 = vmatpush1.msra.mxu0 %v810
  %832 = vmatprep.subr.mxu0 0.0
  %833 = vmatpush1.msra.mxu0 %v811
  %834 = vmatprep.subr.mxu0 0.0
  %835 = vmatpush1.msra.mxu0 %v812
  %836 = vmatprep.subr.mxu0 0.0
  %837 = vmatpush1.msra.mxu0 %v813
  %838 = vmatprep.subr.mxu0 0.0
  %839 = vmatpush1.msra.mxu0 %v814
  %840 = vmatprep.subr.mxu0 0.0
  %841 = vmatpush1.msra.mxu0 %v815
  %842 = vmatprep.subr.mxu0 0.0
  %843 = vmatpush1.msra.mxu0 %v816
  %844 = vmatprep.subr.mxu0 0.0
  %845 = vmatpush1.msra.mxu0 %v817
  %846 = vmatprep.subr.mxu0 0.0
  %847 = vmatpush1.msra.mxu0 %v818
  %848 = vmatprep.subr.mxu0 0.0
  %849 = vmatpush1.msra.mxu0 %v819
  %850 = vmatprep.subr.mxu0 0.0
  %851 = vmatpush1.msra.mxu0 %v820
  %852 = vmatprep.subr.mxu0 0.0
  %853 = vmatpush1.msra.mxu0 %v821
  %854 = vmatprep.subr.mxu0 0.0
  %855 = vmatpush1.msra.mxu0 0.0
  %856 = vmatprep.subr.mxu0 0.0
  %857 = vmatpush1.msra.mxu0 0.0
  %858 = vmatprep.subr.mxu0 0.0
  %859 = vmatpush1.msra.mxu0 0.0
  %860 = vmatprep.subr.mxu0 0.0
  %861 = vmatpush1.msra.mxu0 0.0
  %862 = vmatprep.subr.mxu0 0.0
  %863 = vmatpush1.msra.mxu0 0.0
  %864 = vmatprep.subr.mxu0 0.0
  %865 = vmatpush1.msra.mxu0 0.0
  %866 = vmatprep.subr.mxu0 0.0
  %867 = vmatpush1.msra.mxu0 0.0
  %868 = vmatprep.subr.mxu0 0.0
  %869 = vmatpush1.msra.mxu0 0.0
  %870 = vmatprep.subr.mxu0 0.0
  %871 = vmatpush1.msra.mxu0 0.0
  %872 = vmatprep.subr.mxu0 0.0
  %873 = vmatpush1.msra.mxu0 0.0
  %874 = vmatprep.subr.mxu0 0.0
  %875 = vmatpush1.msra.mxu0 0.0
  %876 = vmatprep.subr.mxu0 0.0
  %877 = vmatpush1.msra.mxu0 0.0
  %878 = vmatprep.subr.mxu0 0.0
  %879 = vmatpush1.msra.mxu0 0.0
  %880 = vmatprep.subr.mxu0 0.0
  %881 = vmatpush1.msra.mxu0 0.0
  %882 = vmatprep.subr.mxu0 0.0
  %883 = vmatpush1.msra.mxu0 0.0
  %884 = vmatprep.subr.mxu0 0.0
  %885 = vmatpush1.msra.mxu0 0.0
  %886 = vmatprep.mubr.f32.mxu0 0.0
  %887 = vmatmul.mubr.f32.gmra.mrb[0].mxu0 %v622
  %v888 = vpop.f32.mrb[0].mxu0
  %v889 = vadd.f32 0.0, %v888
  %v890 = vpop.f32.mrb[0].mxu0
  %891 = vdwg.mxu0
  %v893 = vsel %vm115, %v803, 0
  %v896 = vsel %vm119, %v805, 0
  %898 = vmatprep.subr.mxu0 0.0
  %899 = vmatpush1.msra.mxu0 %v804
  %900 = vmatprep.subr.mxu0 0.0
  %901 = vmatpush1.msra.mxu0 %v896
  %902 = vmatprep.subr.mxu0 0.0
  %903 = vmatpush1.msra.mxu0 0.0
  %904 = vmatprep.subr.mxu0 0.0
  %905 = vmatpush1.msra.mxu0 0.0
  %906 = vmatprep.subr.mxu0 0.0
  %907 = vmatpush1.msra.mxu0 0.0
  %908 = vmatprep.subr.mxu0 0.0
  %909 = vmatpush1.msra.mxu0 0.0
  %910 = vmatprep.subr.mxu0 0.0
  %911 = vmatpush1.msra.mxu0 0.0
  %912 = vmatprep.subr.mxu0 0.0
  %913 = vmatpush1.msra.mxu0 0.0
  %914 = vmatprep.subr.mxu0 0.0
  %915 = vmatpush1.msra.mxu0 0.0
  %916 = vmatprep.subr.mxu0 0.0
  %917 = vmatpush1.msra.mxu0 0.0
  %918 = vmatprep.subr.mxu0 0.0
  %919 = vmatpush1.msra.mxu0 0.0
  %920 = vmatprep.subr.mxu0 0.0
  %921 = vmatpush1.msra.mxu0 0.0
  %922 = vmatprep.subr.mxu0 0.0
  %923 = vmatpush1.msra.mxu0 0.0
  %924 = vmatprep.subr.mxu0 0.0
  %925 = vmatpush1.msra.mxu0 0.0
  %926 = vmatprep.subr.mxu0 0.0
  %927 = vmatpush1.msra.mxu0 0.0
  %928 = vmatprep.subr.mxu0 0.0
  %929 = vmatpush1.msra.mxu0 0.0
  %930 = vmatprep.subr.mxu0 0.0
  %931 = vmatpush1.msra.mxu0 0.0
  %932 = vmatprep.subr.mxu0 0.0
  %933 = vmatpush1.msra.mxu0 0.0
  %934 = vmatprep.subr.mxu0 0.0
  %935 = vmatpush1.msra.mxu0 0.0
  %936 = vmatprep.subr.mxu0 0.0
  %937 = vmatpush1.msra.mxu0 0.0
  %938 = vmatprep.subr.mxu0 0.0
  %939 = vmatpush1.msra.mxu0 0.0
  %940 = vmatprep.subr.mxu0 0.0
  %941 = vmatpush1.msra.mxu0 0.0
  %942 = vmatprep.subr.mxu0 0.0
  %943 = vmatpush1.msra.mxu0 0.0
  %944 = vmatprep.subr.mxu0 0.0
  %945 = vmatpush1.msra.mxu0 0.0
  %946 = vmatprep.subr.mxu0 0.0
  %947 = vmatpush1.msra.mxu0 0.0
  %948 = vmatprep.subr.mxu0 0.0
  %949 = vmatpush1.msra.mxu0 0.0
  %950 = vmatprep.subr.mxu0 0.0
  %951 = vmatpush1.msra.mxu0 0.0
  %952 = vmatprep.subr.mxu0 0.0
  %953 = vmatpush1.msra.mxu0 0.0
  %954 = vmatprep.subr.mxu0 0.0
  %955 = vmatpush1.msra.mxu0 0.0
  %956 = vmatprep.subr.mxu0 0.0
  %957 = vmatpush1.msra.mxu0 0.0
  %958 = vmatprep.subr.mxu0 0.0
  %959 = vmatpush1.msra.mxu0 0.0
  %960 = vmatprep.subr.mxu0 0.0
  %961 = vmatpush1.msra.mxu0 0.0
  %962 = vmatprep.mubr.f32.mxu0 0.0
  %963 = vmatmul.mubr.f32.gmra.mrb[0].mxu0 %v893
  %v964 = vpop.f32.mrb[0].mxu0
  %v965 = vadd.f32 %v889, %v964
  %v966 = vpop.f32.mrb[0].mxu0
  %967 = vdwg.mxu0
  %v968 = vmax.f32 %v965, 0.0
  %v969 = vld [vmem:[%s3] sm:$0xff]
  %v970 = vld [vmem:[%s3 + $0x8] sm:$0xff]
  %v971 = vld [vmem:[%s3 + $0x10] sm:$0xff]
  %v972 = vld [vmem:[%s3 + $0x18] sm:$0xff]
  %v973 = vld [vmem:[%s3 + $0x20] sm:$0xff]
  %v974 = vld [vmem:[%s3 + $0x28] sm:$0xff]
  %v975 = vld [vmem:[%s3 + $0x30] sm:$0xff]
  %v976 = vld [vmem:[%s3 + $0x38] sm:$0xff]
  %v977 = vld [vmem:[%s3 + $0x40] sm:$0xff]
  %v978 = vld [vmem:[%s3 + $0x48] sm:$0xff]
  %v979 = vld [vmem:[%s3 + $0x50] sm:$0xff]
  %v980 = vld [vmem:[%s3 + $0x58] sm:$0xff]
  %v981 = vld [vmem:[%s3 + $0x60] sm:$0xff]
  %v982 = vld [vmem:[%s3 + $0x68] sm:$0xff]
  %v983 = vld [vmem:[%s3 + $0x70] sm:$0xff]
  %v984 = vld [vmem:[%s3 + $0x78] sm:$0xff]
  %985 = vmatprep.subr.mxu0 0.0
  %986 = vmatpush1.msra.mxu0 %v969
  %987 = vmatprep.subr.mxu0 0.0
  %988 = vmatpush1.msra.mxu0 %v970
  %989 = vmatprep.subr.mxu0 0.0
  %990 = vmatpush1.msra.mxu0 %v971
  %991 = vmatprep.subr.mxu0 0.0
  %992 = vmatpush1.msra.mxu0 %v972
  %993 = vmatprep.subr.mxu0 0.0
  %994 = vmatpush1.msra.mxu0 %v973
  %995 = vmatprep.subr.mxu0 0.0
  %996 = vmatpush1.msra.mxu0 %v974
  %997 = vmatprep.subr.mxu0 0.0
  %998 = vmatpush1.msra.mxu0 %v975
  %999 = vmatprep.subr.mxu0 0.0
  %1000 = vmatpush1.msra.mxu0 %v976
  %1001 = vmatprep.subr.mxu0 0.0
  %1002 = vmatpush1.msra.mxu0 %v977
  %1003 = vmatprep.subr.mxu0 0.0
  %1004 = vmatpush1.msra.mxu0 %v978
  %1005 = vmatprep.subr.mxu0 0.0
  %1006 = vmatpush1.msra.mxu0 %v979
  %1007 = vmatprep.subr.mxu0 0.0
  %1008 = vmatpush1.msra.mxu0 %v980
  %1009 = vmatprep.subr.mxu0 0.0
  %1010 = vmatpush1.msra.mxu0 %v981
  %1011 = vmatprep.subr.mxu0 0.0
  %1012 = vmatpush1.msra.mxu0 %v982
  %1013 = vmatprep.subr.mxu0 0.0
  %1014 = vmatpush1.msra.mxu0 %v983
  %1015 = vmatprep.subr.mxu0 0.0
  %1016 = vmatpush1.msra.mxu0 %v984
  %1017 = vmatprep.subr.mxu0 0.0
  %1018 = vmatpush1.msra.mxu0 0.0
  %1019 = vmatprep.subr.mxu0 0.0
  %1020 = vmatpush1.msra.mxu0 0.0
  %1021 = vmatprep.subr.mxu0 0.0
  %1022 = vmatpush1.msra.mxu0 0.0
  %1023 = vmatprep.subr.mxu0 0.0
  %1024 = vmatpush1.msra.mxu0 0.0
  %1025 = vmatprep.subr.mxu0 0.0
  %1026 = vmatpush1.msra.mxu0 0.0
  %1027 = vmatprep.subr.mxu0 0.0
  %1028 = vmatpush1.msra.mxu0 0.0
  %1029 = vmatprep.subr.mxu0 0.0
  %1030 = vmatpush1.msra.mxu0 0.0
  %1031 = vmatprep.subr.mxu0 0.0
  %1032 = vmatpush1.msra.mxu0 0.0
  %1033 = vmatprep.subr.mxu0 0.0
  %1034 = vmatpush1.msra.mxu0 0.0
  %1035 = vmatprep.subr.mxu0 0.0
  %1036 = vmatpush1.msra.mxu0 0.0
  %1037 = vmatprep.subr.mxu0 0.0
  %1038 = vmatpush1.msra.mxu0 0.0
  %1039 = vmatprep.subr.mxu0 0.0
  %1040 = vmatpush1.msra.mxu0 0.0
  %1041 = vmatprep.subr.mxu0 0.0
  %1042 = vmatpush1.msra.mxu0 0.0
  %1043 = vmatprep.subr.mxu0 0.0
  %1044 = vmatpush1.msra.mxu0 0.0
  %1045 = vmatprep.subr.mxu0 0.0
  %1046 = vmatpush1.msra.mxu0 0.0
  %1047 = vmatprep.subr.mxu0 0.0
  %1048 = vmatpush1.msra.mxu0 0.0
  %1049 = vmatprep.mubr.f32.mxu0 0.0
  %1050 = vmatmul.mubr.f32.gmra.mrb[0].mxu0 %v968
  %v1051 = vpop.f32.mrb[0].mxu0
  %v1052 = vadd.f32 0.0, %v1051
  %v1053 = vpop.f32.mrb[0].mxu0
  %1054 = vdwg.mxu0
  %v1055 = vld [vmem:[%s4] sm:$0xff]
  %v1056 = vld [vmem:[%s4 + $0x8] sm:$0xff]
  %v1057 = vld [vmem:[%s4 + $0x10] sm:$0xff]
  %v1058 = vld [vmem:[%s4 + $0x18] sm:$0xff]
  %v1059 = vld [vmem:[%s4 + $0x20] sm:$0xff]
  %v1060 = vld [vmem:[%s4 + $0x28] sm:$0xff]
  %v1061 = vld [vmem:[%s4 + $0x30] sm:$0xff]
  %v1062 = vld [vmem:[%s4 + $0x38] sm:$0xff]
  %v1063 = vld [vmem:[%s4 + $0x40] sm:$0xff]
  %v1064 = vld [vmem:[%s4 + $0x48] sm:$0xff]
  %v1065 = vld [vmem:[%s4 + $0x50] sm:$0xff]
  %v1066 = vld [vmem:[%s4 + $0x58] sm:$0xff]
  %v1067 = vld [vmem:[%s4 + $0x60] sm:$0xff]
  %v1068 = vld [vmem:[%s4 + $0x68] sm:$0xff]
  %v1069 = vld [vmem:[%s4 + $0x70] sm:$0xff]
  %v1070 = vld [vmem:[%s4 + $0x78] sm:$0xff]
  %v1071 = vld [vmem:[%s5] sm:$0xff]
  %v1072 = vld [vmem:[%s5 + $0x8] sm:$0xff]
  %v1073 = vld [vmem:[%s5 + $0x10] sm:$0xff]
  %v1074 = vld [vmem:[%s5 + $0x18] sm:$0xff]
  %v1075 = vld [vmem:[%s5 + $0x20] sm:$0xff]
  %v1076 = vld [vmem:[%s5 + $0x28] sm:$0xff]
  %v1077 = vld [vmem:[%s5 + $0x30] sm:$0xff]
  %v1078 = vld [vmem:[%s5 + $0x38] sm:$0xff]
  %v1079 = vld [vmem:[%s5 + $0x40] sm:$0xff]
  %v1080 = vld [vmem:[%s5 + $0x48] sm:$0xff]
  %v1081 = vld [vmem:[%s5 + $0x50] sm:$0xff]
  %v1082 = vld [vmem:[%s5 + $0x58] sm:$0xff]
  %v1083 = vld [vmem:[%s5 + $0x60] sm:$0xff]
  %v1084 = vld [vmem:[%s5 + $0x68] sm:$0xff]
  %v1085 = vld [vmem:[%s5 + $0x70] sm:$0xff]
  %v1086 = vld [vmem:[%s5 + $0x78] sm:$0xff]
  %1087 = vmatprep.subr.mxu0 0.0
  %1088 = vmatpush1.msra.mxu0 %v1071
  %1089 = vmatprep.subr.mxu0 0.0
  %1090 = vmatpush1.msra.mxu0 %v1072
  %1091 = vmatprep.subr.mxu0 0.0
  %1092 = vmatpush1.msra.mxu0 %v1073
  %1093 = vmatprep.subr.mxu0 0.0
  %1094 = vmatpush1.msra.mxu0 %v1074
  %1095 = vmatprep.subr.mxu0 0.0
  %1096 = vmatpush1.msra.mxu0 %v1075
  %1097 = vmatprep.subr.mxu0 0.0
  %1098 = vmatpush1.msra.mxu0 %v1076
  %1099 = vmatprep.subr.mxu0 0.0
  %1100 = vmatpush1.msra.mxu0 %v1077
  %1101 = vmatprep.subr.mxu0 0.0
  %1102 = vmatpush1.msra.mxu0 %v1078
  %1103 = vmatprep.subr.mxu0 0.0
  %1104 = vmatpush1.msra.mxu0 %v1079
  %1105 = vmatprep.subr.mxu0 0.0
  %1106 = vmatpush1.msra.mxu0 %v1080
  %1107 = vmatprep.subr.mxu0 0.0
  %1108 = vmatpush1.msra.mxu0 %v1081
  %1109 = vmatprep.subr.mxu0 0.0
  %1110 = vmatpush1.msra.mxu0 %v1082
  %1111 = vmatprep.subr.mxu0 0.0
  %1112 = vmatpush1.msra.mxu0 %v1083
  %1113 = vmatprep.subr.mxu0 0.0
  %1114 = vmatpush1.msra.mxu0 %v1084
  %1115 = vmatprep.subr.mxu0 0.0
  %1116 = vmatpush1.msra.mxu0 %v1085
  %1117 = vmatprep.subr.mxu0 0.0
  %1118 = vmatpush1.msra.mxu0 %v1086
  %1119 = vmatprep.subr.mxu0 0.0
  %1120 = vmatpush1.msra.mxu0 0.0
  %1121 = vmatprep.subr.mxu0 0.0
  %1122 = vmatpush1.msra.mxu0 0.0
  %1123 = vmatprep.subr.mxu0 0.0
  %1124 = vmatpush1.msra.mxu0 0.0
  %1125 = vmatprep.subr.mxu0 0.0
  %1126 = vmatpush1.msra.mxu0 0.0
  %1127 = vmatprep.subr.mxu0 0.0
  %1128 = vmatpush1.msra.mxu0 0.0
  %1129 = vmatprep.subr.mxu0 0.0
  %1130 = vmatpush1.msra.mxu0 0.0
  %1131 = vmatprep.subr.mxu0 0.0
  %1132 = vmatpush1.msra.mxu0 0.0
  %1133 = vmatprep.subr.mxu0 0.0
  %1134 = vmatpush1.msra.mxu0 0.0
  %1135 = vmatprep.subr.mxu0 0.0
  %1136 = vmatpush1.msra.mxu0 0.0
  %1137 = vmatprep.subr.mxu0 0.0
  %1138 = vmatpush1.msra.mxu0 0.0
  %1139 = vmatprep.subr.mxu0 0.0
  %1140 = vmatpush1.msra.mxu0 0.0
  %1141 = vmatprep.subr.mxu0 0.0
  %1142 = vmatpush1.msra.mxu0 0.0
  %1143 = vmatprep.subr.mxu0 0.0
  %1144 = vmatpush1.msra.mxu0 0.0
  %1145 = vmatprep.subr.mxu0 0.0
  %1146 = vmatpush1.msra.mxu0 0.0
  %1147 = vmatprep.subr.mxu0 0.0
  %1148 = vmatpush1.msra.mxu0 0.0
  %1149 = vmatprep.subr.mxu0 0.0
  %1150 = vmatpush1.msra.mxu0 0.0
  %1151 = vmatprep.mubr.f32.mxu0 0.0
  %1152 = vmatmul.mubr.f32.gmra.mrb[0].mxu0 %v795
  %v1153 = vpop.f32.mrb[0].mxu0
  %v1154 = vadd.f32 0.0, %v1153
  %v1155 = vpop.f32.mrb[0].mxu0
  %1156 = vdwg.mxu0
  %1157 = vmatprep.subr.mxu0 0.0
  %1158 = vmatpush1.msra.mxu0 %v1055
  %1159 = vmatprep.subr.mxu0 0.0
  %1160 = vmatpush1.msra.mxu0 %v1056
  %1161 = vmatprep.subr.mxu0 0.0
  %1162 = vmatpush1.msra.mxu0 %v1057
  %1163 = vmatprep.subr.mxu0 0.0
  %1164 = vmatpush1.msra.mxu0 %v1058
  %1165 = vmatprep.subr.mxu0 0.0
  %1166 = vmatpush1.msra.mxu0 %v1059
  %1167 = vmatprep.subr.mxu0 0.0
  %1168 = vmatpush1.msra.mxu0 %v1060
  %1169 = vmatprep.subr.mxu0 0.0
  %1170 = vmatpush1.msra.mxu0 %v1061
  %1171 = vmatprep.subr.mxu0 0.0
  %1172 = vmatpush1.msra.mxu0 %v1062
  %1173 = vmatprep.subr.mxu0 0.0
  %1174 = vmatpush1.msra.mxu0 %v1063
  %1175 = vmatprep.subr.mxu0 0.0
  %1176 = vmatpush1.msra.mxu0 %v1064
  %1177 = vmatprep.subr.mxu0 0.0
  %1178 = vmatpush1.msra.mxu0 %v1065
  %1179 = vmatprep.subr.mxu0 0.0
  %1180 = vmatpush1.msra.mxu0 %v1066
  %1181 = vmatprep.subr.mxu0 0.0
  %1182 = vmatpush1.msra.mxu0 %v1067
  %1183 = vmatprep.subr.mxu0 0.0
  %1184 = vmatpush1.msra.mxu0 %v1068
  %1185 = vmatprep.subr.mxu0 0.0
  %1186 = vmatpush1.msra.mxu0 %v1069
  %1187 = vmatprep.subr.mxu0 0.0
  %1188 = vmatpush1.msra.mxu0 %v1070
  %1189 = vmatprep.subr.mxu0 0.0
  %1190 = vmatpush1.msra.mxu0 0.0
  %1191 = vmatprep.subr.mxu0 0.0
  %1192 = vmatpush1.msra.mxu0 0.0
  %1193 = vmatprep.subr.mxu0 0.0
  %1194 = vmatpush1.msra.mxu0 0.0
  %1195 = vmatprep.subr.mxu0 0.0
  %1196 = vmatpush1.msra.mxu0 0.0
  %1197 = vmatprep.subr.mxu0 0.0
  %1198 = vmatpush1.msra.mxu0 0.0
  %1199 = vmatprep.subr.mxu0 0.0
  %1200 = vmatpush1.msra.mxu0 0.0
  %1201 = vmatprep.subr.mxu0 0.0
  %1202 = vmatpush1.msra.mxu0 0.0
  %1203 = vmatprep.subr.mxu0 0.0
  %1204 = vmatpush1.msra.mxu0 0.0
  %1205 = vmatprep.subr.mxu0 0.0
  %1206 = vmatpush1.msra.mxu0 0.0
  %1207 = vmatprep.subr.mxu0 0.0
  %1208 = vmatpush1.msra.mxu0 0.0
  %1209 = vmatprep.subr.mxu0 0.0
  %1210 = vmatpush1.msra.mxu0 0.0
  %1211 = vmatprep.subr.mxu0 0.0
  %1212 = vmatpush1.msra.mxu0 0.0
  %1213 = vmatprep.subr.mxu0 0.0
  %1214 = vmatpush1.msra.mxu0 0.0
  %1215 = vmatprep.subr.mxu0 0.0
  %1216 = vmatpush1.msra.mxu0 0.0
  %1217 = vmatprep.subr.mxu0 0.0
  %1218 = vmatpush1.msra.mxu0 0.0
  %1219 = vmatprep.subr.mxu0 0.0
  %1220 = vmatpush1.msra.mxu0 0.0
  %1221 = vmatprep.mubr.f32.mxu0 0.0
  %1222 = vmatmul.mubr.f32.gmra.mrb[0].mxu0 %v1052
  %v1223 = vpop.f32.mrb[0].mxu0
  %v1224 = vadd.f32 %v1154, %v1223
  %v1225 = vpop.f32.mrb[0].mxu0
  %1226 = vdwg.mxu0
  %v1227 = vmax.f32 %v1224, 0.0
  %s1228 = scalar_lea.vmem %s7, 16
  %1229 = vst [vmem:[%s1228] sm:$0xff] %v1227
  %s1230 = scalar_lea.vmem %s6, 16
  %1231 = vst [vmem:[%s1230] sm:$0xff] 0.0
  %s1232 = scalar_lea.vmem %s8, 16
  %1233 = vst [vmem:[%s1232] sm:$0xff] 0.0
  %s1234 = scalar_lea.vmem %s0, 24
  %v1235 = vld [vmem:[%s1234] sm:$0xff]
  %v1236 = vld [vmem:[%s1] sm:$0xff]
  %v1237 = vld [vmem:[%s1 + $0x8] sm:$0x3]
  %v1238 = vld [vmem:[%s2] sm:$0xff]
  %v1239 = vld [vmem:[%s2 + $0x8] sm:$0xff]
  %v1240 = vld [vmem:[%s2 + $0x10] sm:$0xff]
  %v1241 = vld [vmem:[%s2 + $0x18] sm:$0xff]
  %v1242 = vld [vmem:[%s2 + $0x20] sm:$0xff]
  %v1243 = vld [vmem:[%s2 + $0x28] sm:$0xff]
  %v1244 = vld [vmem:[%s2 + $0x30] sm:$0xff]
  %v1245 = vld [vmem:[%s2 + $0x38] sm:$0xff]
  %v1246 = vld [vmem:[%s2 + $0x40] sm:$0xff]
  %v1247 = vld [vmem:[%s2 + $0x48] sm:$0xff]
  %v1248 = vld [vmem:[%s2 + $0x50] sm:$0xff]
  %v1249 = vld [vmem:[%s2 + $0x58] sm:$0xff]
  %v1250 = vld [vmem:[%s2 + $0x60] sm:$0xff]
  %v1251 = vld [vmem:[%s2 + $0x68] sm:$0xff]
  %v1252 = vld [vmem:[%s2 + $0x70] sm:$0xff]
  %v1253 = vld [vmem:[%s2 + $0x78] sm:$0xff]
  %1254 = vmatprep.subr.mxu0 0.0
  %1255 = vmatpush1.msra.mxu0 %v1238
  %1256 = vmatprep.subr.mxu0 0.0
  %1257 = vmatpush1.msra.mxu0 %v1239
  %1258 = vmatprep.subr.mxu0 0.0
  %1259 = vmatpush1.msra.mxu0 %v1240
  %1260 = vmatprep.subr.mxu0 0.0
  %1261 = vmatpush1.msra.mxu0 %v1241
  %1262 = vmatprep.subr.mxu0 0.0
  %1263 = vmatpush1.msra.mxu0 %v1242
  %1264 = vmatprep.subr.mxu0 0.0
  %1265 = vmatpush1.msra.mxu0 %v1243
  %1266 = vmatprep.subr.mxu0 0.0
  %1267 = vmatpush1.msra.mxu0 %v1244
  %1268 = vmatprep.subr.mxu0 0.0
  %1269 = vmatpush1.msra.mxu0 %v1245
  %1270 = vmatprep.subr.mxu0 0.0
  %1271 = vmatpush1.msra.mxu0 %v1246
  %1272 = vmatprep.subr.mxu0 0.0
  %1273 = vmatpush1.msra.mxu0 %v1247
  %1274 = vmatprep.subr.mxu0 0.0
  %1275 = vmatpush1.msra.mxu0 %v1248
  %1276 = vmatprep.subr.mxu0 0.0
  %1277 = vmatpush1.msra.mxu0 %v1249
  %1278 = vmatprep.subr.mxu0 0.0
  %1279 = vmatpush1.msra.mxu0 %v1250
  %1280 = vmatprep.subr.mxu0 0.0
  %1281 = vmatpush1.msra.mxu0 %v1251
  %1282 = vmatprep.subr.mxu0 0.0
  %1283 = vmatpush1.msra.mxu0 %v1252
  %1284 = vmatprep.subr.mxu0 0.0
  %1285 = vmatpush1.msra.mxu0 %v1253
  %1286 = vmatprep.subr.mxu0 0.0
  %1287 = vmatpush1.msra.mxu0 0.0
  %1288 = vmatprep.subr.mxu0 0.0
  %1289 = vmatpush1.msra.mxu0 0.0
  %1290 = vmatprep.subr.mxu0 0.0
  %1291 = vmatpush1.msra.mxu0 0.0
  %1292 = vmatprep.subr.mxu0 0.0
  %1293 = vmatpush1.msra.mxu0 0.0
  %1294 = vmatprep.subr.mxu0 0.0
  %1295 = vmatpush1.msra.mxu0 0.0
  %1296 = vmatprep.subr.mxu0 0.0
  %1297 = vmatpush1.msra.mxu0 0.0
  %1298 = vmatprep.subr.mxu0 0.0
  %1299 = vmatpush1.msra.mxu0 0.0
  %1300 = vmatprep.subr.mxu0 0.0
  %1301 = vmatpush1.msra.mxu0 0.0
  %1302 = vmatprep.subr.mxu0 0.0
  %1303 = vmatpush1.msra.mxu0 0.0
  %1304 = vmatprep.subr.mxu0 0.0
  %1305 = vmatpush1.msra.mxu0 0.0
  %1306 = vmatprep.subr.mxu0 0.0
  %1307 = vmatpush1.msra.mxu0 0.0
  %1308 = vmatprep.subr.mxu0 0.0
  %1309 = vmatpush1.msra.mxu0 0.0
  %1310 = vmatprep.subr.mxu0 0.0
  %1311 = vmatpush1.msra.mxu0 0.0
  %1312 = vmatprep.subr.mxu0 0.0
  %1313 = vmatpush1.msra.mxu0 0.0
  %1314 = vmatprep.subr.mxu0 0.0
  %1315 = vmatpush1.msra.mxu0 0.0
  %1316 = vmatprep.subr.mxu0 0.0
  %1317 = vmatpush1.msra.mxu0 0.0
  %1318 = vmatprep.mubr.f32.mxu0 0.0
  %1319 = vmatmul.mubr.f32.gmra.mrb[0].mxu0 %v968
  %v1320 = vpop.f32.mrb[0].mxu0
  %v1321 = vadd.f32 0.0, %v1320
  %v1322 = vpop.f32.mrb[0].mxu0
  %1323 = vdwg.mxu0
  %v1325 = vsel %vm115, %v1235, 0
  %v1328 = vsel %vm119, %v1237, 0
  %1330 = vmatprep.subr.mxu0 0.0
  %1331 = vmatpush1.msra.mxu0 %v1236
  %1332 = vmatprep.subr.mxu0 0.0
  %1333 = vmatpush1.msra.mxu0 %v1328
  %1334 = vmatprep.subr.mxu0 0.0
  %1335 = vmatpush1.msra.mxu0 0.0
  %1336 = vmatprep.subr.mxu0 0.0
  %1337 = vmatpush1.msra.mxu0 0.0
  %1338 = vmatprep.subr.mxu0 0.0
  %1339 = vmatpush1.msra.mxu0 0.0
  %1340 = vmatprep.subr.mxu0 0.0
  %1341 = vmatpush1.msra.mxu0 0.0
  %1342 = vmatprep.subr.mxu0 0.0
  %1343 = vmatpush1.msra.mxu0 0.0
  %1344 = vmatprep.subr.mxu0 0.0
  %1345 = vmatpush1.msra.mxu0 0.0
  %1346 = vmatprep.subr.mxu0 0.0
  %1347 = vmatpush1.msra.mxu0 0.0
  %1348 = vmatprep.subr.mxu0 0.0
  %1349 = vmatpush1.msra.mxu0 0.0
  %1350 = vmatprep.subr.mxu0 0.0
  %1351 = vmatpush1.msra.mxu0 0.0
  %1352 = vmatprep.subr.mxu0 0.0
  %1353 = vmatpush1.msra.mxu0 0.0
  %1354 = vmatprep.subr.mxu0 0.0
  %1355 = vmatpush1.msra.mxu0 0.0
  %1356 = vmatprep.subr.mxu0 0.0
  %1357 = vmatpush1.msra.mxu0 0.0
  %1358 = vmatprep.subr.mxu0 0.0
  %1359 = vmatpush1.msra.mxu0 0.0
  %1360 = vmatprep.subr.mxu0 0.0
  %1361 = vmatpush1.msra.mxu0 0.0
  %1362 = vmatprep.subr.mxu0 0.0
  %1363 = vmatpush1.msra.mxu0 0.0
  %1364 = vmatprep.subr.mxu0 0.0
  %1365 = vmatpush1.msra.mxu0 0.0
  %1366 = vmatprep.subr.mxu0 0.0
  %1367 = vmatpush1.msra.mxu0 0.0
  %1368 = vmatprep.subr.mxu0 0.0
  %1369 = vmatpush1.msra.mxu0 0.0
  %1370 = vmatprep.subr.mxu0 0.0
  %1371 = vmatpush1.msra.mxu0 0.0
  %1372 = vmatprep.subr.mxu0 0.0
  %1373 = vmatpush1.msra.mxu0 0.0
  %1374 = vmatprep.subr.mxu0 0.0
  %1375 = vmatpush1.msra.mxu0 0.0
  %1376 = vmatprep.subr.mxu0 0.0
  %1377 = vmatpush1.msra.mxu0 0.0
  %1378 = vmatprep.subr.mxu0 0.0
  %1379 = vmatpush1.msra.mxu0 0.0
  %1380 = vmatprep.subr.mxu0 0.0
  %1381 = vmatpush1.msra.mxu0 0.0
  %1382 = vmatprep.subr.mxu0 0.0
  %1383 = vmatpush1.msra.mxu0 0.0
  %1384 = vmatprep.subr.mxu0 0.0
  %1385 = vmatpush1.msra.mxu0 0.0
  %1386 = vmatprep.subr.mxu0 0.0
  %1387 = vmatpush1.msra.mxu0 0.0
  %1388 = vmatprep.subr.mxu0 0.0
  %1389 = vmatpush1.msra.mxu0 0.0
  %1390 = vmatprep.subr.mxu0 0.0
  %1391 = vmatpush1.msra.mxu0 0.0
  %1392 = vmatprep.subr.mxu0 0.0
  %1393 = vmatpush1.msra.mxu0 0.0
  %1394 = vmatprep.mubr.f32.mxu0 0.0
  %1395 = vmatmul.mubr.f32.gmra.mrb[0].mxu0 %v1325
  %v1396 = vpop.f32.mrb[0].mxu0
  %v1397 = vadd.f32 %v1321, %v1396
  %v1398 = vpop.f32.mrb[0].mxu0
  %1399 = vdwg.mxu0
  %v1400 = vmax.f32 %v1397, 0.0
  %v1401 = vld [vmem:[%s3] sm:$0xff]
  %v1402 = vld [vmem:[%s3 + $0x8] sm:$0xff]
  %v1403 = vld [vmem:[%s3 + $0x10] sm:$0xff]
  %v1404 = vld [vmem:[%s3 + $0x18] sm:$0xff]
  %v1405 = vld [vmem:[%s3 + $0x20] sm:$0xff]
  %v1406 = vld [vmem:[%s3 + $0x28] sm:$0xff]
  %v1407 = vld [vmem:[%s3 + $0x30] sm:$0xff]
  %v1408 = vld [vmem:[%s3 + $0x38] sm:$0xff]
  %v1409 = vld [vmem:[%s3 + $0x40] sm:$0xff]
  %v1410 = vld [vmem:[%s3 + $0x48] sm:$0xff]
  %v1411 = vld [vmem:[%s3 + $0x50] sm:$0xff]
  %v1412 = vld [vmem:[%s3 + $0x58] sm:$0xff]
  %v1413 = vld [vmem:[%s3 + $0x60] sm:$0xff]
  %v1414 = vld [vmem:[%s3 + $0x68] sm:$0xff]
  %v1415 = vld [vmem:[%s3 + $0x70] sm:$0xff]
  %v1416 = vld [vmem:[%s3 + $0x78] sm:$0xff]
  %1417 = vmatprep.subr.mxu0 0.0
  %1418 = vmatpush1.msra.mxu0 %v1401
  %1419 = vmatprep.subr.mxu0 0.0
  %1420 = vmatpush1.msra.mxu0 %v1402
  %1421 = vmatprep.subr.mxu0 0.0
  %1422 = vmatpush1.msra.mxu0 %v1403
  %1423 = vmatprep.subr.mxu0 0.0
  %1424 = vmatpush1.msra.mxu0 %v1404
  %1425 = vmatprep.subr.mxu0 0.0
  %1426 = vmatpush1.msra.mxu0 %v1405
  %1427 = vmatprep.subr.mxu0 0.0
  %1428 = vmatpush1.msra.mxu0 %v1406
  %1429 = vmatprep.subr.mxu0 0.0
  %1430 = vmatpush1.msra.mxu0 %v1407
  %1431 = vmatprep.subr.mxu0 0.0
  %1432 = vmatpush1.msra.mxu0 %v1408
  %1433 = vmatprep.subr.mxu0 0.0
  %1434 = vmatpush1.msra.mxu0 %v1409
  %1435 = vmatprep.subr.mxu0 0.0
  %1436 = vmatpush1.msra.mxu0 %v1410
  %1437 = vmatprep.subr.mxu0 0.0
  %1438 = vmatpush1.msra.mxu0 %v1411
  %1439 = vmatprep.subr.mxu0 0.0
  %1440 = vmatpush1.msra.mxu0 %v1412
  %1441 = vmatprep.subr.mxu0 0.0
  %1442 = vmatpush1.msra.mxu0 %v1413
  %1443 = vmatprep.subr.mxu0 0.0
  %1444 = vmatpush1.msra.mxu0 %v1414
  %1445 = vmatprep.subr.mxu0 0.0
  %1446 = vmatpush1.msra.mxu0 %v1415
  %1447 = vmatprep.subr.mxu0 0.0
  %1448 = vmatpush1.msra.mxu0 %v1416
  %1449 = vmatprep.subr.mxu0 0.0
  %1450 = vmatpush1.msra.mxu0 0.0
  %1451 = vmatprep.subr.mxu0 0.0
  %1452 = vmatpush1.msra.mxu0 0.0
  %1453 = vmatprep.subr.mxu0 0.0
  %1454 = vmatpush1.msra.mxu0 0.0
  %1455 = vmatprep.subr.mxu0 0.0
  %1456 = vmatpush1.msra.mxu0 0.0
  %1457 = vmatprep.subr.mxu0 0.0
  %1458 = vmatpush1.msra.mxu0 0.0
  %1459 = vmatprep.subr.mxu0 0.0
  %1460 = vmatpush1.msra.mxu0 0.0
  %1461 = vmatprep.subr.mxu0 0.0
  %1462 = vmatpush1.msra.mxu0 0.0
  %1463 = vmatprep.subr.mxu0 0.0
  %1464 = vmatpush1.msra.mxu0 0.0
  %1465 = vmatprep.subr.mxu0 0.0
  %1466 = vmatpush1.msra.mxu0 0.0
  %1467 = vmatprep.subr.mxu0 0.0
  %1468 = vmatpush1.msra.mxu0 0.0
  %1469 = vmatprep.subr.mxu0 0.0
  %1470 = vmatpush1.msra.mxu0 0.0
  %1471 = vmatprep.subr.mxu0 0.0
  %1472 = vmatpush1.msra.mxu0 0.0
  %1473 = vmatprep.subr.mxu0 0.0
  %1474 = vmatpush1.msra.mxu0 0.0
  %1475 = vmatprep.subr.mxu0 0.0
  %1476 = vmatpush1.msra.mxu0 0.0
  %1477 = vmatprep.subr.mxu0 0.0
  %1478 = vmatpush1.msra.mxu0 0.0
  %1479 = vmatprep.subr.mxu0 0.0
  %1480 = vmatpush1.msra.mxu0 0.0
  %1481 = vmatprep.mubr.f32.mxu0 0.0
  %1482 = vmatmul.mubr.f32.gmra.mrb[0].mxu0 %v1400
  %v1483 = vpop.f32.mrb[0].mxu0
  %v1484 = vadd.f32 0.0, %v1483
  %v1485 = vpop.f32.mrb[0].mxu0
  %1486 = vdwg.mxu0
  %v1487 = vld [vmem:[%s5] sm:$0xff]
  %v1488 = vld [vmem:[%s5 + $0x8] sm:$0xff]
  %v1489 = vld [vmem:[%s5 + $0x10] sm:$0xff]
  %v1490 = vld [vmem:[%s5 + $0x18] sm:$0xff]
  %v1491 = vld [vmem:[%s5 + $0x20] sm:$0xff]
  %v1492 = vld [vmem:[%s5 + $0x28] sm:$0xff]
  %v1493 = vld [vmem:[%s5 + $0x30] sm:$0xff]
  %v1494 = vld [vmem:[%s5 + $0x38] sm:$0xff]
  %v1495 = vld [vmem:[%s5 + $0x40] sm:$0xff]
  %v1496 = vld [vmem:[%s5 + $0x48] sm:$0xff]
  %v1497 = vld [vmem:[%s5 + $0x50] sm:$0xff]
  %v1498 = vld [vmem:[%s5 + $0x58] sm:$0xff]
  %v1499 = vld [vmem:[%s5 + $0x60] sm:$0xff]
  %v1500 = vld [vmem:[%s5 + $0x68] sm:$0xff]
  %v1501 = vld [vmem:[%s5 + $0x70] sm:$0xff]
  %v1502 = vld [vmem:[%s5 + $0x78] sm:$0xff]
  %1503 = vmatprep.subr.mxu0 0.0
  %1504 = vmatpush1.msra.mxu0 %v1487
  %1505 = vmatprep.subr.mxu0 0.0
  %1506 = vmatpush1.msra.mxu0 %v1488
  %1507 = vmatprep.subr.mxu0 0.0
  %1508 = vmatpush1.msra.mxu0 %v1489
  %1509 = vmatprep.subr.mxu0 0.0
  %1510 = vmatpush1.msra.mxu0 %v1490
  %1511 = vmatprep.subr.mxu0 0.0
  %1512 = vmatpush1.msra.mxu0 %v1491
  %1513 = vmatprep.subr.mxu0 0.0
  %1514 = vmatpush1.msra.mxu0 %v1492
  %1515 = vmatprep.subr.mxu0 0.0
  %1516 = vmatpush1.msra.mxu0 %v1493
  %1517 = vmatprep.subr.mxu0 0.0
  %1518 = vmatpush1.msra.mxu0 %v1494
  %1519 = vmatprep.subr.mxu0 0.0
  %1520 = vmatpush1.msra.mxu0 %v1495
  %1521 = vmatprep.subr.mxu0 0.0
  %1522 = vmatpush1.msra.mxu0 %v1496
  %1523 = vmatprep.subr.mxu0 0.0
  %1524 = vmatpush1.msra.mxu0 %v1497
  %1525 = vmatprep.subr.mxu0 0.0
  %1526 = vmatpush1.msra.mxu0 %v1498
  %1527 = vmatprep.subr.mxu0 0.0
  %1528 = vmatpush1.msra.mxu0 %v1499
  %1529 = vmatprep.subr.mxu0 0.0
  %1530 = vmatpush1.msra.mxu0 %v1500
  %1531 = vmatprep.subr.mxu0 0.0
  %1532 = vmatpush1.msra.mxu0 %v1501
  %1533 = vmatprep.subr.mxu0 0.0
  %1534 = vmatpush1.msra.mxu0 %v1502
  %1535 = vmatprep.subr.mxu0 0.0
  %1536 = vmatpush1.msra.mxu0 0.0
  %1537 = vmatprep.subr.mxu0 0.0
  %1538 = vmatpush1.msra.mxu0 0.0
  %1539 = vmatprep.subr.mxu0 0.0
  %1540 = vmatpush1.msra.mxu0 0.0
  %1541 = vmatprep.subr.mxu0 0.0
  %1542 = vmatpush1.msra.mxu0 0.0
  %1543 = vmatprep.subr.mxu0 0.0
  %1544 = vmatpush1.msra.mxu0 0.0
  %1545 = vmatprep.subr.mxu0 0.0
  %1546 = vmatpush1.msra.mxu0 0.0
  %1547 = vmatprep.subr.mxu0 0.0
  %1548 = vmatpush1.msra.mxu0 0.0
  %1549 = vmatprep.subr.mxu0 0.0
  %1550 = vmatpush1.msra.mxu0 0.0
  %1551 = vmatprep.subr.mxu0 0.0
  %1552 = vmatpush1.msra.mxu0 0.0
  %1553 = vmatprep.subr.mxu0 0.0
  %1554 = vmatpush1.msra.mxu0 0.0
  %1555 = vmatprep.subr.mxu0 0.0
  %1556 = vmatpush1.msra.mxu0 0.0
  %1557 = vmatprep.subr.mxu0 0.0
  %1558 = vmatpush1.msra.mxu0 0.0
  %1559 = vmatprep.subr.mxu0 0.0
  %1560 = vmatpush1.msra.mxu0 0.0
  %1561 = vmatprep.subr.mxu0 0.0
  %1562 = vmatpush1.msra.mxu0 0.0
  %1563 = vmatprep.subr.mxu0 0.0
  %1564 = vmatpush1.msra.mxu0 0.0
  %1565 = vmatprep.subr.mxu0 0.0
  %1566 = vmatpush1.msra.mxu0 0.0
  %1567 = vmatprep.mubr.f32.mxu0 0.0
  %1568 = vmatmul.mubr.f32.gmra.mrb[0].mxu0 %v1227
  %v1569 = vpop.f32.mrb[0].mxu0
  %v1570 = vadd.f32 0.0, %v1569
  %v1571 = vpop.f32.mrb[0].mxu0
  %1572 = vdwg.mxu0
  %v1573 = vmax.f32 %v1570, 0.0
  %s1574 = scalar_lea.vmem %s7, 24
  %1575 = vst [vmem:[%s1574] sm:$0xff] %v1573
  %s1576 = scalar_lea.vmem %s6, 24
  %1577 = vst [vmem:[%s1576] sm:$0xff] %v1573
  %s1578 = scalar_lea.vmem %s8, 24
  %1579 = vst [vmem:[%s1578] sm:$0xff] %v1484
  %s1580 = scalar_lea.vmem %s0, 32
  %v1581 = vld [vmem:[%s1580] sm:$0xff]
  %v1582 = vld [vmem:[%s1] sm:$0xff]
  %v1583 = vld [vmem:[%s1 + $0x8] sm:$0x3]
  %v1584 = vld [vmem:[%s2] sm:$0xff]
  %v1585 = vld [vmem:[%s2 + $0x8] sm:$0xff]
  %v1586 = vld [vmem:[%s2 + $0x10] sm:$0xff]
  %v1587 = vld [vmem:[%s2 + $0x18] sm:$0xff]
  %v1588 = vld [vmem:[%s2 + $0x20] sm:$0xff]
  %v1589 = vld [vmem:[%s2 + $0x28] sm:$0xff]
  %v1590 = vld [vmem:[%s2 + $0x30] sm:$0xff]
  %v1591 = vld [vmem:[%s2 + $0x38] sm:$0xff]
  %v1592 = vld [vmem:[%s2 + $0x40] sm:$0xff]
  %v1593 = vld [vmem:[%s2 + $0x48] sm:$0xff]
  %v1594 = vld [vmem:[%s2 + $0x50] sm:$0xff]
  %v1595 = vld [vmem:[%s2 + $0x58] sm:$0xff]
  %v1596 = vld [vmem:[%s2 + $0x60] sm:$0xff]
  %v1597 = vld [vmem:[%s2 + $0x68] sm:$0xff]
  %v1598 = vld [vmem:[%s2 + $0x70] sm:$0xff]
  %v1599 = vld [vmem:[%s2 + $0x78] sm:$0xff]
  %1600 = vmatprep.subr.mxu0 0.0
  %1601 = vmatpush1.msra.mxu0 %v1584
  %1602 = vmatprep.subr.mxu0 0.0
  %1603 = vmatpush1.msra.mxu0 %v1585
  %1604 = vmatprep.subr.mxu0 0.0
  %1605 = vmatpush1.msra.mxu0 %v1586
  %1606 = vmatprep.subr.mxu0 0.0
  %1607 = vmatpush1.msra.mxu0 %v1587
  %1608 = vmatprep.subr.mxu0 0.0
  %1609 = vmatpush1.msra.mxu0 %v1588
  %1610 = vmatprep.subr.mxu0 0.0
  %1611 = vmatpush1.msra.mxu0 %v1589
  %1612 = vmatprep.subr.mxu0 0.0
  %1613 = vmatpush1.msra.mxu0 %v1590
  %1614 = vmatprep.subr.mxu0 0.0
  %1615 = vmatpush1.msra.mxu0 %v1591
  %1616 = vmatprep.subr.mxu0 0.0
  %1617 = vmatpush1.msra.mxu0 %v1592
  %1618 = vmatprep.subr.mxu0 0.0
  %1619 = vmatpush1.msra.mxu0 %v1593
  %1620 = vmatprep.subr.mxu0 0.0
  %1621 = vmatpush1.msra.mxu0 %v1594
  %1622 = vmatprep.subr.mxu0 0.0
  %1623 = vmatpush1.msra.mxu0 %v1595
  %1624 = vmatprep.subr.mxu0 0.0
  %1625 = vmatpush1.msra.mxu0 %v1596
  %1626 = vmatprep.subr.mxu0 0.0
  %1627 = vmatpush1.msra.mxu0 %v1597
  %1628 = vmatprep.subr.mxu0 0.0
  %1629 = vmatpush1.msra.mxu0 %v1598
  %1630 = vmatprep.subr.mxu0 0.0
  %1631 = vmatpush1.msra.mxu0 %v1599
  %1632 = vmatprep.subr.mxu0 0.0
  %1633 = vmatpush1.msra.mxu0 0.0
  %1634 = vmatprep.subr.mxu0 0.0
  %1635 = vmatpush1.msra.mxu0 0.0
  %1636 = vmatprep.subr.mxu0 0.0
  %1637 = vmatpush1.msra.mxu0 0.0
  %1638 = vmatprep.subr.mxu0 0.0
  %1639 = vmatpush1.msra.mxu0 0.0
  %1640 = vmatprep.subr.mxu0 0.0
  %1641 = vmatpush1.msra.mxu0 0.0
  %1642 = vmatprep.subr.mxu0 0.0
  %1643 = vmatpush1.msra.mxu0 0.0
  %1644 = vmatprep.subr.mxu0 0.0
  %1645 = vmatpush1.msra.mxu0 0.0
  %1646 = vmatprep.subr.mxu0 0.0
  %1647 = vmatpush1.msra.mxu0 0.0
  %1648 = vmatprep.subr.mxu0 0.0
  %1649 = vmatpush1.msra.mxu0 0.0
  %1650 = vmatprep.subr.mxu0 0.0
  %1651 = vmatpush1.msra.mxu0 0.0
  %1652 = vmatprep.subr.mxu0 0.0
  %1653 = vmatpush1.msra.mxu0 0.0
  %1654 = vmatprep.subr.mxu0 0.0
  %1655 = vmatpush1.msra.mxu0 0.0
  %1656 = vmatprep.subr.mxu0 0.0
  %1657 = vmatpush1.msra.mxu0 0.0
  %1658 = vmatprep.subr.mxu0 0.0
  %1659 = vmatpush1.msra.mxu0 0.0
  %1660 = vmatprep.subr.mxu0 0.0
  %1661 = vmatpush1.msra.mxu0 0.0
  %1662 = vmatprep.subr.mxu0 0.0
  %1663 = vmatpush1.msra.mxu0 0.0
  %1664 = vmatprep.mubr.f32.mxu0 0.0
  %1665 = vmatmul.mubr.f32.gmra.mrb[0].mxu0 %v1400
  %v1666 = vpop.f32.mrb[0].mxu0
  %v1667 = vadd.f32 0.0, %v1666
  %v1668 = vpop.f32.mrb[0].mxu0
  %1669 = vdwg.mxu0
  %v1671 = vsel %vm115, %v1581, 0
  %v1674 = vsel %vm119, %v1583, 0
  %1676 = vmatprep.subr.mxu0 0.0
  %1677 = vmatpush1.msra.mxu0 %v1582
  %1678 = vmatprep.subr.mxu0 0.0
  %1679 = vmatpush1.msra.mxu0 %v1674
  %1680 = vmatprep.subr.mxu0 0.0
  %1681 = vmatpush1.msra.mxu0 0.0
  %1682 = vmatprep.subr.mxu0 0.0
  %1683 = vmatpush1.msra.mxu0 0.0
  %1684 = vmatprep.subr.mxu0 0.0
  %1685 = vmatpush1.msra.mxu0 0.0
  %1686 = vmatprep.subr.mxu0 0.0
  %1687 = vmatpush1.msra.mxu0 0.0
  %1688 = vmatprep.subr.mxu0 0.0
  %1689 = vmatpush1.msra.mxu0 0.0
  %1690 = vmatprep.subr.mxu0 0.0
  %1691 = vmatpush1.msra.mxu0 0.0
  %1692 = vmatprep.subr.mxu0 0.0
  %1693 = vmatpush1.msra.mxu0 0.0
  %1694 = vmatprep.subr.mxu0 0.0
  %1695 = vmatpush1.msra.mxu0 0.0
  %1696 = vmatprep.subr.mxu0 0.0
  %1697 = vmatpush1.msra.mxu0 0.0
  %1698 = vmatprep.subr.mxu0 0.0
  %1699 = vmatpush1.msra.mxu0 0.0
  %1700 = vmatprep.subr.mxu0 0.0
  %1701 = vmatpush1.msra.mxu0 0.0
  %1702 = vmatprep.subr.mxu0 0.0
  %1703 = vmatpush1.msra.mxu0 0.0
  %1704 = vmatprep.subr.mxu0 0.0
  %1705 = vmatpush1.msra.mxu0 0.0
  %1706 = vmatprep.subr.mxu0 0.0
  %1707 = vmatpush1.msra.mxu0 0.0
  %1708 = vmatprep.subr.mxu0 0.0
  %1709 = vmatpush1.msra.mxu0 0.0
  %1710 = vmatprep.subr.mxu0 0.0
  %1711 = vmatpush1.msra.mxu0 0.0
  %1712 = vmatprep.subr.mxu0 0.0
  %1713 = vmatpush1.msra.mxu0 0.0
  %1714 = vmatprep.subr.mxu0 0.0
  %1715 = vmatpush1.msra.mxu0 0.0
  %1716 = vmatprep.subr.mxu0 0.0
  %1717 = vmatpush1.msra.mxu0 0.0
  %1718 = vmatprep.subr.mxu0 0.0
  %1719 = vmatpush1.msra.mxu0 0.0
  %1720 = vmatprep.subr.mxu0 0.0
  %1721 = vmatpush1.msra.mxu0 0.0
  %1722 = vmatprep.subr.mxu0 0.0
  %1723 = vmatpush1.msra.mxu0 0.0
  %1724 = vmatprep.subr.mxu0 0.0
  %1725 = vmatpush1.msra.mxu0 0.0
  %1726 = vmatprep.subr.mxu0 0.0
  %1727 = vmatpush1.msra.mxu0 0.0
  %1728 = vmatprep.subr.mxu0 0.0
  %1729 = vmatpush1.msra.mxu0 0.0
  %1730 = vmatprep.subr.mxu0 0.0
  %1731 = vmatpush1.msra.mxu0 0.0
  %1732 = vmatprep.subr.mxu0 0.0
  %1733 = vmatpush1.msra.mxu0 0.0
  %1734 = vmatprep.subr.mxu0 0.0
  %1735 = vmatpush1.msra.mxu0 0.0
  %1736 = vmatprep.subr.mxu0 0.0
  %1737 = vmatpush1.msra.mxu0 0.0
  %1738 = vmatprep.subr.mxu0 0.0
  %1739 = vmatpush1.msra.mxu0 0.0
  %1740 = vmatprep.mubr.f32.mxu0 0.0
  %1741 = vmatmul.mubr.f32.gmra.mrb[0].mxu0 %v1671
  %v1742 = vpop.f32.mrb[0].mxu0
  %v1743 = vadd.f32 %v1667, %v1742
  %v1744 = vpop.f32.mrb[0].mxu0
  %1745 = vdwg.mxu0
  %v1746 = vmax.f32 %v1743, 0.0
  %v1747 = vld [vmem:[%s3] sm:$0xff]
  %v1748 = vld [vmem:[%s3 + $0x8] sm:$0xff]
  %v1749 = vld [vmem:[%s3 + $0x10] sm:$0xff]
  %v1750 = vld [vmem:[%s3 + $0x18] sm:$0xff]
  %v1751 = vld [vmem:[%s3 + $0x20] sm:$0xff]
  %v1752 = vld [vmem:[%s3 + $0x28] sm:$0xff]
  %v1753 = vld [vmem:[%s3 + $0x30] sm:$0xff]
  %v1754 = vld [vmem:[%s3 + $0x38] sm:$0xff]
  %v1755 = vld [vmem:[%s3 + $0x40] sm:$0xff]
  %v1756 = vld [vmem:[%s3 + $0x48] sm:$0xff]
  %v1757 = vld [vmem:[%s3 + $0x50] sm:$0xff]
  %v1758 = vld [vmem:[%s3 + $0x58] sm:$0xff]
  %v1759 = vld [vmem:[%s3 + $0x60] sm:$0xff]
  %v1760 = vld [vmem:[%s3 + $0x68] sm:$0xff]
  %v1761 = vld [vmem:[%s3 + $0x70] sm:$0xff]
  %v1762 = vld [vmem:[%s3 + $0x78] sm:$0xff]
  %1763 = vmatprep.subr.mxu0 0.0
  %1764 = vmatpush1.msra.mxu0 %v1747
  %1765 = vmatprep.subr.mxu0 0.0
  %1766 = vmatpush1.msra.mxu0 %v1748
  %1767 = vmatprep.subr.mxu0 0.0
  %1768 = vmatpush1.msra.mxu0 %v1749
  %1769 = vmatprep.subr.mxu0 0.0
  %1770 = vmatpush1.msra.mxu0 %v1750
  %1771 = vmatprep.subr.mxu0 0.0
  %1772 = vmatpush1.msra.mxu0 %v1751
  %1773 = vmatprep.subr.mxu0 0.0
  %1774 = vmatpush1.msra.mxu0 %v1752
  %1775 = vmatprep.subr.mxu0 0.0
  %1776 = vmatpush1.msra.mxu0 %v1753
  %1777 = vmatprep.subr.mxu0 0.0
  %1778 = vmatpush1.msra.mxu0 %v1754
  %1779 = vmatprep.subr.mxu0 0.0
  %1780 = vmatpush1.msra.mxu0 %v1755
  %1781 = vmatprep.subr.mxu0 0.0
  %1782 = vmatpush1.msra.mxu0 %v1756
  %1783 = vmatprep.subr.mxu0 0.0
  %1784 = vmatpush1.msra.mxu0 %v1757
  %1785 = vmatprep.subr.mxu0 0.0
  %1786 = vmatpush1.msra.mxu0 %v1758
  %1787 = vmatprep.subr.mxu0 0.0
  %1788 = vmatpush1.msra.mxu0 %v1759
  %1789 = vmatprep.subr.mxu0 0.0
  %1790 = vmatpush1.msra.mxu0 %v1760
  %1791 = vmatprep.subr.mxu0 0.0
  %1792 = vmatpush1.msra.mxu0 %v1761
  %1793 = vmatprep.subr.mxu0 0.0
  %1794 = vmatpush1.msra.mxu0 %v1762
  %1795 = vmatprep.subr.mxu0 0.0
  %1796 = vmatpush1.msra.mxu0 0.0
  %1797 = vmatprep.subr.mxu0 0.0
  %1798 = vmatpush1.msra.mxu0 0.0
  %1799 = vmatprep.subr.mxu0 0.0
  %1800 = vmatpush1.msra.mxu0 0.0
  %1801 = vmatprep.subr.mxu0 0.0
  %1802 = vmatpush1.msra.mxu0 0.0
  %1803 = vmatprep.subr.mxu0 0.0
  %1804 = vmatpush1.msra.mxu0 0.0
  %1805 = vmatprep.subr.mxu0 0.0
  %1806 = vmatpush1.msra.mxu0 0.0
  %1807 = vmatprep.subr.mxu0 0.0
  %1808 = vmatpush1.msra.mxu0 0.0
  %1809 = vmatprep.subr.mxu0 0.0
  %1810 = vmatpush1.msra.mxu0 0.0
  %1811 = vmatprep.subr.mxu0 0.0
  %1812 = vmatpush1.msra.mxu0 0.0
  %1813 = vmatprep.subr.mxu0 0.0
  %1814 = vmatpush1.msra.mxu0 0.0
  %1815 = vmatprep.subr.mxu0 0.0
  %1816 = vmatpush1.msra.mxu0 0.0
  %1817 = vmatprep.subr.mxu0 0.0
  %1818 = vmatpush1.msra.mxu0 0.0
  %1819 = vmatprep.subr.mxu0 0.0
  %1820 = vmatpush1.msra.mxu0 0.0
  %1821 = vmatprep.subr.mxu0 0.0
  %1822 = vmatpush1.msra.mxu0 0.0
  %1823 = vmatprep.subr.mxu0 0.0
  %1824 = vmatpush1.msra.mxu0 0.0
  %1825 = vmatprep.subr.mxu0 0.0
  %1826 = vmatpush1.msra.mxu0 0.0
  %1827 = vmatprep.mubr.f32.mxu0 0.0
  %1828 = vmatmul.mubr.f32.gmra.mrb[0].mxu0 %v1746
  %v1829 = vpop.f32.mrb[0].mxu0
  %v1830 = vadd.f32 0.0, %v1829
  %v1831 = vpop.f32.mrb[0].mxu0
  %1832 = vdwg.mxu0
  %v1833 = vld [vmem:[%s4] sm:$0xff]
  %v1834 = vld [vmem:[%s4 + $0x8] sm:$0xff]
  %v1835 = vld [vmem:[%s4 + $0x10] sm:$0xff]
  %v1836 = vld [vmem:[%s4 + $0x18] sm:$0xff]
  %v1837 = vld [vmem:[%s4 + $0x20] sm:$0xff]
  %v1838 = vld [vmem:[%s4 + $0x28] sm:$0xff]
  %v1839 = vld [vmem:[%s4 + $0x30] sm:$0xff]
  %v1840 = vld [vmem:[%s4 + $0x38] sm:$0xff]
  %v1841 = vld [vmem:[%s4 + $0x40] sm:$0xff]
  %v1842 = vld [vmem:[%s4 + $0x48] sm:$0xff]
  %v1843 = vld [vmem:[%s4 + $0x50] sm:$0xff]
  %v1844 = vld [vmem:[%s4 + $0x58] sm:$0xff]
  %v1845 = vld [vmem:[%s4 + $0x60] sm:$0xff]
  %v1846 = vld [vmem:[%s4 + $0x68] sm:$0xff]
  %v1847 = vld [vmem:[%s4 + $0x70] sm:$0xff]
  %v1848 = vld [vmem:[%s4 + $0x78] sm:$0xff]
  %v1849 = vld [vmem:[%s5] sm:$0xff]
  %v1850 = vld [vmem:[%s5 + $0x8] sm:$0xff]
  %v1851 = vld [vmem:[%s5 + $0x10] sm:$0xff]
  %v1852 = vld [vmem:[%s5 + $0x18] sm:$0xff]
  %v1853 = vld [vmem:[%s5 + $0x20] sm:$0xff]
  %v1854 = vld [vmem:[%s5 + $0x28] sm:$0xff]
  %v1855 = vld [vmem:[%s5 + $0x30] sm:$0xff]
  %v1856 = vld [vmem:[%s5 + $0x38] sm:$0xff]
  %v1857 = vld [vmem:[%s5 + $0x40] sm:$0xff]
  %v1858 = vld [vmem:[%s5 + $0x48] sm:$0xff]
  %v1859 = vld [vmem:[%s5 + $0x50] sm:$0xff]
  %v1860 = vld [vmem:[%s5 + $0x58] sm:$0xff]
  %v1861 = vld [vmem:[%s5 + $0x60] sm:$0xff]
  %v1862 = vld [vmem:[%s5 + $0x68] sm:$0xff]
  %v1863 = vld [vmem:[%s5 + $0x70] sm:$0xff]
  %v1864 = vld [vmem:[%s5 + $0x78] sm:$0xff]
  %1865 = vmatprep.subr.mxu0 0.0
  %1866 = vmatpush1.msra.mxu0 %v1849
  %1867 = vmatprep.subr.mxu0 0.0
  %1868 = vmatpush1.msra.mxu0 %v1850
  %1869 = vmatprep.subr.mxu0 0.0
  %1870 = vmatpush1.msra.mxu0 %v1851
  %1871 = vmatprep.subr.mxu0 0.0
  %1872 = vmatpush1.msra.mxu0 %v1852
  %1873 = vmatprep.subr.mxu0 0.0
  %1874 = vmatpush1.msra.mxu0 %v1853
  %1875 = vmatprep.subr.mxu0 0.0
  %1876 = vmatpush1.msra.mxu0 %v1854
  %1877 = vmatprep.subr.mxu0 0.0
  %1878 = vmatpush1.msra.mxu0 %v1855
  %1879 = vmatprep.subr.mxu0 0.0
  %1880 = vmatpush1.msra.mxu0 %v1856
  %1881 = vmatprep.subr.mxu0 0.0
  %1882 = vmatpush1.msra.mxu0 %v1857
  %1883 = vmatprep.subr.mxu0 0.0
  %1884 = vmatpush1.msra.mxu0 %v1858
  %1885 = vmatprep.subr.mxu0 0.0
  %1886 = vmatpush1.msra.mxu0 %v1859
  %1887 = vmatprep.subr.mxu0 0.0
  %1888 = vmatpush1.msra.mxu0 %v1860
  %1889 = vmatprep.subr.mxu0 0.0
  %1890 = vmatpush1.msra.mxu0 %v1861
  %1891 = vmatprep.subr.mxu0 0.0
  %1892 = vmatpush1.msra.mxu0 %v1862
  %1893 = vmatprep.subr.mxu0 0.0
  %1894 = vmatpush1.msra.mxu0 %v1863
  %1895 = vmatprep.subr.mxu0 0.0
  %1896 = vmatpush1.msra.mxu0 %v1864
  %1897 = vmatprep.subr.mxu0 0.0
  %1898 = vmatpush1.msra.mxu0 0.0
  %1899 = vmatprep.subr.mxu0 0.0
  %1900 = vmatpush1.msra.mxu0 0.0
  %1901 = vmatprep.subr.mxu0 0.0
  %1902 = vmatpush1.msra.mxu0 0.0
  %1903 = vmatprep.subr.mxu0 0.0
  %1904 = vmatpush1.msra.mxu0 0.0
  %1905 = vmatprep.subr.mxu0 0.0
  %1906 = vmatpush1.msra.mxu0 0.0
  %1907 = vmatprep.subr.mxu0 0.0
  %1908 = vmatpush1.msra.mxu0 0.0
  %1909 = vmatprep.subr.mxu0 0.0
  %1910 = vmatpush1.msra.mxu0 0.0
  %1911 = vmatprep.subr.mxu0 0.0
  %1912 = vmatpush1.msra.mxu0 0.0
  %1913 = vmatprep.subr.mxu0 0.0
  %1914 = vmatpush1.msra.mxu0 0.0
  %1915 = vmatprep.subr.mxu0 0.0
  %1916 = vmatpush1.msra.mxu0 0.0
  %1917 = vmatprep.subr.mxu0 0.0
  %1918 = vmatpush1.msra.mxu0 0.0
  %1919 = vmatprep.subr.mxu0 0.0
  %1920 = vmatpush1.msra.mxu0 0.0
  %1921 = vmatprep.subr.mxu0 0.0
  %1922 = vmatpush1.msra.mxu0 0.0
  %1923 = vmatprep.subr.mxu0 0.0
  %1924 = vmatpush1.msra.mxu0 0.0
  %1925 = vmatprep.subr.mxu0 0.0
  %1926 = vmatpush1.msra.mxu0 0.0
  %1927 = vmatprep.subr.mxu0 0.0
  %1928 = vmatpush1.msra.mxu0 0.0
  %1929 = vmatprep.mubr.f32.mxu0 0.0
  %1930 = vmatmul.mubr.f32.gmra.mrb[0].mxu0 %v1573
  %v1931 = vpop.f32.mrb[0].mxu0
  %v1932 = vadd.f32 0.0, %v1931
  %v1933 = vpop.f32.mrb[0].mxu0
  %1934 = vdwg.mxu0
  %1935 = vmatprep.subr.mxu0 0.0
  %1936 = vmatpush1.msra.mxu0 %v1833
  %1937 = vmatprep.subr.mxu0 0.0
  %1938 = vmatpush1.msra.mxu0 %v1834
  %1939 = vmatprep.subr.mxu0 0.0
  %1940 = vmatpush1.msra.mxu0 %v1835
  %1941 = vmatprep.subr.mxu0 0.0
  %1942 = vmatpush1.msra.mxu0 %v1836
  %1943 = vmatprep.subr.mxu0 0.0
  %1944 = vmatpush1.msra.mxu0 %v1837
  %1945 = vmatprep.subr.mxu0 0.0
  %1946 = vmatpush1.msra.mxu0 %v1838
  %1947 = vmatprep.subr.mxu0 0.0
  %1948 = vmatpush1.msra.mxu0 %v1839
  %1949 = vmatprep.subr.mxu0 0.0
  %1950 = vmatpush1.msra.mxu0 %v1840
  %1951 = vmatprep.subr.mxu0 0.0
  %1952 = vmatpush1.msra.mxu0 %v1841
  %1953 = vmatprep.subr.mxu0 0.0
  %1954 = vmatpush1.msra.mxu0 %v1842
  %1955 = vmatprep.subr.mxu0 0.0
  %1956 = vmatpush1.msra.mxu0 %v1843
  %1957 = vmatprep.subr.mxu0 0.0
  %1958 = vmatpush1.msra.mxu0 %v1844
  %1959 = vmatprep.subr.mxu0 0.0
  %1960 = vmatpush1.msra.mxu0 %v1845
  %1961 = vmatprep.subr.mxu0 0.0
  %1962 = vmatpush1.msra.mxu0 %v1846
  %1963 = vmatprep.subr.mxu0 0.0
  %1964 = vmatpush1.msra.mxu0 %v1847
  %1965 = vmatprep.subr.mxu0 0.0
  %1966 = vmatpush1.msra.mxu0 %v1848
  %1967 = vmatprep.subr.mxu0 0.0
  %1968 = vmatpush1.msra.mxu0 0.0
  %1969 = vmatprep.subr.mxu0 0.0
  %1970 = vmatpush1.msra.mxu0 0.0
  %1971 = vmatprep.subr.mxu0 0.0
  %1972 = vmatpush1.msra.mxu0 0.0
  %1973 = vmatprep.subr.mxu0 0.0
  %1974 = vmatpush1.msra.mxu0 0.0
  %1975 = vmatprep.subr.mxu0 0.0
  %1976 = vmatpush1.msra.mxu0 0.0
  %1977 = vmatprep.subr.mxu0 0.0
  %1978 = vmatpush1.msra.mxu0 0.0
  %1979 = vmatprep.subr.mxu0 0.0
  %1980 = vmatpush1.msra.mxu0 0.0
  %1981 = vmatprep.subr.mxu0 0.0
  %1982 = vmatpush1.msra.mxu0 0.0
  %1983 = vmatprep.subr.mxu0 0.0
  %1984 = vmatpush1.msra.mxu0 0.0
  %1985 = vmatprep.subr.mxu0 0.0
  %1986 = vmatpush1.msra.mxu0 0.0
  %1987 = vmatprep.subr.mxu0 0.0
  %1988 = vmatpush1.msra.mxu0 0.0
  %1989 = vmatprep.subr.mxu0 0.0
  %1990 = vmatpush1.msra.mxu0 0.0
  %1991 = vmatprep.subr.mxu0 0.0
  %1992 = vmatpush1.msra.mxu0 0.0
  %1993 = vmatprep.subr.mxu0 0.0
  %1994 = vmatpush1.msra.mxu0 0.0
  %1995 = vmatprep.subr.mxu0 0.0
  %1996 = vmatpush1.msra.mxu0 0.0
  %1997 = vmatprep.subr.mxu0 0.0
  %1998 = vmatpush1.msra.mxu0 0.0
  %1999 = vmatprep.mubr.f32.mxu0 0.0
  %2000 = vmatmul.mubr.f32.gmra.mrb[0].mxu0 %v1830
  %v2001 = vpop.f32.mrb[0].mxu0
  %v2002 = vadd.f32 %v1932, %v2001
  %v2003 = vpop.f32.mrb[0].mxu0
  %2004 = vdwg.mxu0
  %v2005 = vmax.f32 %v2002, 0.0
  %s2006 = scalar_lea.vmem %s7, 32
  %2007 = vst [vmem:[%s2006] sm:$0xff] %v2005
  %s2008 = scalar_lea.vmem %s6, 32
  %2009 = vst [vmem:[%s2008] sm:$0xff] 0.0
  %s2010 = scalar_lea.vmem %s8, 32
  %2011 = vst [vmem:[%s2010] sm:$0xff] 0.0
  %s2012 = scalar_lea.vmem %s0, 40
  %v2013 = vld [vmem:[%s2012] sm:$0xff]
  %v2014 = vld [vmem:[%s1] sm:$0xff]
  %v2015 = vld [vmem:[%s1 + $0x8] sm:$0x3]
  %v2016 = vld [vmem:[%s2] sm:$0xff]
  %v2017 = vld [vmem:[%s2 + $0x8] sm:$0xff]
  %v2018 = vld [vmem:[%s2 + $0x10] sm:$0xff]
  %v2019 = vld [vmem:[%s2 + $0x18] sm:$0xff]
  %v2020 = vld [vmem:[%s2 + $0x20] sm:$0xff]
  %v2021 = vld [vmem:[%s2 + $0x28] sm:$0xff]
  %v2022 = vld [vmem:[%s2 + $0x30] sm:$0xff]
  %v2023 = vld [vmem:[%s2 + $0x38] sm:$0xff]
  %v2024 = vld [vmem:[%s2 + $0x40] sm:$0xff]
  %v2025 = vld [vmem:[%s2 + $0x48] sm:$0xff]
  %v2026 = vld [vmem:[%s2 + $0x50] sm:$0xff]
  %v2027 = vld [vmem:[%s2 + $0x58] sm:$0xff]
  %v2028 = vld [vmem:[%s2 + $0x60] sm:$0xff]
  %v2029 = vld [vmem:[%s2 + $0x68] sm:$0xff]
  %v2030 = vld [vmem:[%s2 + $0x70] sm:$0xff]
  %v2031 = vld [vmem:[%s2 + $0x78] sm:$0xff]
  %2032 = vmatprep.subr.mxu0 0.0
  %2033 = vmatpush1.msra.mxu0 %v2016
  %2034 = vmatprep.subr.mxu0 0.0
  %2035 = vmatpush1.msra.mxu0 %v2017
  %2036 = vmatprep.subr.mxu0 0.0
  %2037 = vmatpush1.msra.mxu0 %v2018
  %2038 = vmatprep.subr.mxu0 0.0
  %2039 = vmatpush1.msra.mxu0 %v2019
  %2040 = vmatprep.subr.mxu0 0.0
  %2041 = vmatpush1.msra.mxu0 %v2020
  %2042 = vmatprep.subr.mxu0 0.0
  %2043 = vmatpush1.msra.mxu0 %v2021
  %2044 = vmatprep.subr.mxu0 0.0
  %2045 = vmatpush1.msra.mxu0 %v2022
  %2046 = vmatprep.subr.mxu0 0.0
  %2047 = vmatpush1.msra.mxu0 %v2023
  %2048 = vmatprep.subr.mxu0 0.0
  %2049 = vmatpush1.msra.mxu0 %v2024
  %2050 = vmatprep.subr.mxu0 0.0
  %2051 = vmatpush1.msra.mxu0 %v2025
  %2052 = vmatprep.subr.mxu0 0.0
  %2053 = vmatpush1.msra.mxu0 %v2026
  %2054 = vmatprep.subr.mxu0 0.0
  %2055 = vmatpush1.msra.mxu0 %v2027
  %2056 = vmatprep.subr.mxu0 0.0
  %2057 = vmatpush1.msra.mxu0 %v2028
  %2058 = vmatprep.subr.mxu0 0.0
  %2059 = vmatpush1.msra.mxu0 %v2029
  %2060 = vmatprep.subr.mxu0 0.0
  %2061 = vmatpush1.msra.mxu0 %v2030
  %2062 = vmatprep.subr.mxu0 0.0
  %2063 = vmatpush1.msra.mxu0 %v2031
  %2064 = vmatprep.subr.mxu0 0.0
  %2065 = vmatpush1.msra.mxu0 0.0
  %2066 = vmatprep.subr.mxu0 0.0
  %2067 = vmatpush1.msra.mxu0 0.0
  %2068 = vmatprep.subr.mxu0 0.0
  %2069 = vmatpush1.msra.mxu0 0.0
  %2070 = vmatprep.subr.mxu0 0.0
  %2071 = vmatpush1.msra.mxu0 0.0
  %2072 = vmatprep.subr.mxu0 0.0
  %2073 = vmatpush1.msra.mxu0 0.0
  %2074 = vmatprep.subr.mxu0 0.0
  %2075 = vmatpush1.msra.mxu0 0.0
  %2076 = vmatprep.subr.mxu0 0.0
  %2077 = vmatpush1.msra.mxu0 0.0
  %2078 = vmatprep.subr.mxu0 0.0
  %2079 = vmatpush1.msra.mxu0 0.0
  %2080 = vmatprep.subr.mxu0 0.0
  %2081 = vmatpush1.msra.mxu0 0.0
  %2082 = vmatprep.subr.mxu0 0.0
  %2083 = vmatpush1.msra.mxu0 0.0
  %2084 = vmatprep.subr.mxu0 0.0
  %2085 = vmatpush1.msra.mxu0 0.0
  %2086 = vmatprep.subr.mxu0 0.0
  %2087 = vmatpush1.msra.mxu0 0.0
  %2088 = vmatprep.subr.mxu0 0.0
  %2089 = vmatpush1.msra.mxu0 0.0
  %2090 = vmatprep.subr.mxu0 0.0
  %2091 = vmatpush1.msra.mxu0 0.0
  %2092 = vmatprep.subr.mxu0 0.0
  %2093 = vmatpush1.msra.mxu0 0.0
  %2094 = vmatprep.subr.mxu0 0.0
  %2095 = vmatpush1.msra.mxu0 0.0
  %2096 = vmatprep.mubr.f32.mxu0 0.0
  %2097 = vmatmul.mubr.f32.gmra.mrb[0].mxu0 %v1746
  %v2098 = vpop.f32.mrb[0].mxu0
  %v2099 = vadd.f32 0.0, %v2098
  %v2100 = vpop.f32.mrb[0].mxu0
  %2101 = vdwg.mxu0
  %v2103 = vsel %vm115, %v2013, 0
  %v2106 = vsel %vm119, %v2015, 0
  %2108 = vmatprep.subr.mxu0 0.0
  %2109 = vmatpush1.msra.mxu0 %v2014
  %2110 = vmatprep.subr.mxu0 0.0
  %2111 = vmatpush1.msra.mxu0 %v2106
  %2112 = vmatprep.subr.mxu0 0.0
  %2113 = vmatpush1.msra.mxu0 0.0
  %2114 = vmatprep.subr.mxu0 0.0
  %2115 = vmatpush1.msra.mxu0 0.0
  %2116 = vmatprep.subr.mxu0 0.0
  %2117 = vmatpush1.msra.mxu0 0.0
  %2118 = vmatprep.subr.mxu0 0.0
  %2119 = vmatpush1.msra.mxu0 0.0
  %2120 = vmatprep.subr.mxu0 0.0
  %2121 = vmatpush1.msra.mxu0 0.0
  %2122 = vmatprep.subr.mxu0 0.0
  %2123 = vmatpush1.msra.mxu0 0.0
  %2124 = vmatprep.subr.mxu0 0.0
  %2125 = vmatpush1.msra.mxu0 0.0
  %2126 = vmatprep.subr.mxu0 0.0
  %2127 = vmatpush1.msra.mxu0 0.0
  %2128 = vmatprep.subr.mxu0 0.0
  %2129 = vmatpush1.msra.mxu0 0.0
  %2130 = vmatprep.subr.mxu0 0.0
  %2131 = vmatpush1.msra.mxu0 0.0
  %2132 = vmatprep.subr.mxu0 0.0
  %2133 = vmatpush1.msra.mxu0 0.0
  %2134 = vmatprep.subr.mxu0 0.0
  %2135 = vmatpush1.msra.mxu0 0.0
  %2136 = vmatprep.subr.mxu0 0.0
  %2137 = vmatpush1.msra.mxu0 0.0
  %2138 = vmatprep.subr.mxu0 0.0
  %2139 = vmatpush1.msra.mxu0 0.0
  %2140 = vmatprep.subr.mxu0 0.0
  %2141 = vmatpush1.msra.mxu0 0.0
  %2142 = vmatprep.subr.mxu0 0.0
  %2143 = vmatpush1.msra.mxu0 0.0
  %2144 = vmatprep.subr.mxu0 0.0
  %2145 = vmatpush1.msra.mxu0 0.0
  %2146 = vmatprep.subr.mxu0 0.0
  %2147 = vmatpush1.msra.mxu0 0.0
  %2148 = vmatprep.subr.mxu0 0.0
  %2149 = vmatpush1.msra.mxu0 0.0
  %2150 = vmatprep.subr.mxu0 0.0
  %2151 = vmatpush1.msra.mxu0 0.0
  %2152 = vmatprep.subr.mxu0 0.0
  %2153 = vmatpush1.msra.mxu0 0.0
  %2154 = vmatprep.subr.mxu0 0.0
  %2155 = vmatpush1.msra.mxu0 0.0
  %2156 = vmatprep.subr.mxu0 0.0
  %2157 = vmatpush1.msra.mxu0 0.0
  %2158 = vmatprep.subr.mxu0 0.0
  %2159 = vmatpush1.msra.mxu0 0.0
  %2160 = vmatprep.subr.mxu0 0.0
  %2161 = vmatpush1.msra.mxu0 0.0
  %2162 = vmatprep.subr.mxu0 0.0
  %2163 = vmatpush1.msra.mxu0 0.0
  %2164 = vmatprep.subr.mxu0 0.0
  %2165 = vmatpush1.msra.mxu0 0.0
  %2166 = vmatprep.subr.mxu0 0.0
  %2167 = vmatpush1.msra.mxu0 0.0
  %2168 = vmatprep.subr.mxu0 0.0
  %2169 = vmatpush1.msra.mxu0 0.0
  %2170 = vmatprep.subr.mxu0 0.0
  %2171 = vmatpush1.msra.mxu0 0.0
  %2172 = vmatprep.mubr.f32.mxu0 0.0
  %2173 = vmatmul.mubr.f32.gmra.mrb[0].mxu0 %v2103
  %v2174 = vpop.f32.mrb[0].mxu0
  %v2175 = vadd.f32 %v2099, %v2174
  %v2176 = vpop.f32.mrb[0].mxu0
  %2177 = vdwg.mxu0
  %v2178 = vmax.f32 %v2175, 0.0
  %v2179 = vld [vmem:[%s3] sm:$0xff]
  %v2180 = vld [vmem:[%s3 + $0x8] sm:$0xff]
  %v2181 = vld [vmem:[%s3 + $0x10] sm:$0xff]
  %v2182 = vld [vmem:[%s3 + $0x18] sm:$0xff]
  %v2183 = vld [vmem:[%s3 + $0x20] sm:$0xff]
  %v2184 = vld [vmem:[%s3 + $0x28] sm:$0xff]
  %v2185 = vld [vmem:[%s3 + $0x30] sm:$0xff]
  %v2186 = vld [vmem:[%s3 + $0x38] sm:$0xff]
  %v2187 = vld [vmem:[%s3 + $0x40] sm:$0xff]
  %v2188 = vld [vmem:[%s3 + $0x48] sm:$0xff]
  %v2189 = vld [vmem:[%s3 + $0x50] sm:$0xff]
  %v2190 = vld [vmem:[%s3 + $0x58] sm:$0xff]
  %v2191 = vld [vmem:[%s3 + $0x60] sm:$0xff]
  %v2192 = vld [vmem:[%s3 + $0x68] sm:$0xff]
  %v2193 = vld [vmem:[%s3 + $0x70] sm:$0xff]
  %v2194 = vld [vmem:[%s3 + $0x78] sm:$0xff]
  %2195 = vmatprep.subr.mxu0 0.0
  %2196 = vmatpush1.msra.mxu0 %v2179
  %2197 = vmatprep.subr.mxu0 0.0
  %2198 = vmatpush1.msra.mxu0 %v2180
  %2199 = vmatprep.subr.mxu0 0.0
  %2200 = vmatpush1.msra.mxu0 %v2181
  %2201 = vmatprep.subr.mxu0 0.0
  %2202 = vmatpush1.msra.mxu0 %v2182
  %2203 = vmatprep.subr.mxu0 0.0
  %2204 = vmatpush1.msra.mxu0 %v2183
  %2205 = vmatprep.subr.mxu0 0.0
  %2206 = vmatpush1.msra.mxu0 %v2184
  %2207 = vmatprep.subr.mxu0 0.0
  %2208 = vmatpush1.msra.mxu0 %v2185
  %2209 = vmatprep.subr.mxu0 0.0
  %2210 = vmatpush1.msra.mxu0 %v2186
  %2211 = vmatprep.subr.mxu0 0.0
  %2212 = vmatpush1.msra.mxu0 %v2187
  %2213 = vmatprep.subr.mxu0 0.0
  %2214 = vmatpush1.msra.mxu0 %v2188
  %2215 = vmatprep.subr.mxu0 0.0
  %2216 = vmatpush1.msra.mxu0 %v2189
  %2217 = vmatprep.subr.mxu0 0.0
  %2218 = vmatpush1.msra.mxu0 %v2190
  %2219 = vmatprep.subr.mxu0 0.0
  %2220 = vmatpush1.msra.mxu0 %v2191
  %2221 = vmatprep.subr.mxu0 0.0
  %2222 = vmatpush1.msra.mxu0 %v2192
  %2223 = vmatprep.subr.mxu0 0.0
  %2224 = vmatpush1.msra.mxu0 %v2193
  %2225 = vmatprep.subr.mxu0 0.0
  %2226 = vmatpush1.msra.mxu0 %v2194
  %2227 = vmatprep.subr.mxu0 0.0
  %2228 = vmatpush1.msra.mxu0 0.0
  %2229 = vmatprep.subr.mxu0 0.0
  %2230 = vmatpush1.msra.mxu0 0.0
  %2231 = vmatprep.subr.mxu0 0.0
  %2232 = vmatpush1.msra.mxu0 0.0
  %2233 = vmatprep.subr.mxu0 0.0
  %2234 = vmatpush1.msra.mxu0 0.0
  %2235 = vmatprep.subr.mxu0 0.0
  %2236 = vmatpush1.msra.mxu0 0.0
  %2237 = vmatprep.subr.mxu0 0.0
  %2238 = vmatpush1.msra.mxu0 0.0
  %2239 = vmatprep.subr.mxu0 0.0
  %2240 = vmatpush1.msra.mxu0 0.0
  %2241 = vmatprep.subr.mxu0 0.0
  %2242 = vmatpush1.msra.mxu0 0.0
  %2243 = vmatprep.subr.mxu0 0.0
  %2244 = vmatpush1.msra.mxu0 0.0
  %2245 = vmatprep.subr.mxu0 0.0
  %2246 = vmatpush1.msra.mxu0 0.0
  %2247 = vmatprep.subr.mxu0 0.0
  %2248 = vmatpush1.msra.mxu0 0.0
  %2249 = vmatprep.subr.mxu0 0.0
  %2250 = vmatpush1.msra.mxu0 0.0
  %2251 = vmatprep.subr.mxu0 0.0
  %2252 = vmatpush1.msra.mxu0 0.0
  %2253 = vmatprep.subr.mxu0 0.0
  %2254 = vmatpush1.msra.mxu0 0.0
  %2255 = vmatprep.subr.mxu0 0.0
  %2256 = vmatpush1.msra.mxu0 0.0
  %2257 = vmatprep.subr.mxu0 0.0
  %2258 = vmatpush1.msra.mxu0 0.0
  %2259 = vmatprep.mubr.f32.mxu0 0.0
  %2260 = vmatmul.mubr.f32.gmra.mrb[0].mxu0 %v2178
  %v2261 = vpop.f32.mrb[0].mxu0
  %v2262 = vadd.f32 0.0, %v2261
  %v2263 = vpop.f32.mrb[0].mxu0
  %2264 = vdwg.mxu0
  %v2265 = vld [vmem:[%s5] sm:$0xff]
  %v2266 = vld [vmem:[%s5 + $0x8] sm:$0xff]
  %v2267 = vld [vmem:[%s5 + $0x10] sm:$0xff]
  %v2268 = vld [vmem:[%s5 + $0x18] sm:$0xff]
  %v2269 = vld [vmem:[%s5 + $0x20] sm:$0xff]
  %v2270 = vld [vmem:[%s5 + $0x28] sm:$0xff]
  %v2271 = vld [vmem:[%s5 + $0x30] sm:$0xff]
  %v2272 = vld [vmem:[%s5 + $0x38] sm:$0xff]
  %v2273 = vld [vmem:[%s5 + $0x40] sm:$0xff]
  %v2274 = vld [vmem:[%s5 + $0x48] sm:$0xff]
  %v2275 = vld [vmem:[%s5 + $0x50] sm:$0xff]
  %v2276 = vld [vmem:[%s5 + $0x58] sm:$0xff]
  %v2277 = vld [vmem:[%s5 + $0x60] sm:$0xff]
  %v2278 = vld [vmem:[%s5 + $0x68] sm:$0xff]
  %v2279 = vld [vmem:[%s5 + $0x70] sm:$0xff]
  %v2280 = vld [vmem:[%s5 + $0x78] sm:$0xff]
  %2281 = vmatprep.subr.mxu0 0.0
  %2282 = vmatpush1.msra.mxu0 %v2265
  %2283 = vmatprep.subr.mxu0 0.0
  %2284 = vmatpush1.msra.mxu0 %v2266
  %2285 = vmatprep.subr.mxu0 0.0
  %2286 = vmatpush1.msra.mxu0 %v2267
  %2287 = vmatprep.subr.mxu0 0.0
  %2288 = vmatpush1.msra.mxu0 %v2268
  %2289 = vmatprep.subr.mxu0 0.0
  %2290 = vmatpush1.msra.mxu0 %v2269
  %2291 = vmatprep.subr.mxu0 0.0
  %2292 = vmatpush1.msra.mxu0 %v2270
  %2293 = vmatprep.subr.mxu0 0.0
  %2294 = vmatpush1.msra.mxu0 %v2271
  %2295 = vmatprep.subr.mxu0 0.0
  %2296 = vmatpush1.msra.mxu0 %v2272
  %2297 = vmatprep.subr.mxu0 0.0
  %2298 = vmatpush1.msra.mxu0 %v2273
  %2299 = vmatprep.subr.mxu0 0.0
  %2300 = vmatpush1.msra.mxu0 %v2274
  %2301 = vmatprep.subr.mxu0 0.0
  %2302 = vmatpush1.msra.mxu0 %v2275
  %2303 = vmatprep.subr.mxu0 0.0
  %2304 = vmatpush1.msra.mxu0 %v2276
  %2305 = vmatprep.subr.mxu0 0.0
  %2306 = vmatpush1.msra.mxu0 %v2277
  %2307 = vmatprep.subr.mxu0 0.0
  %2308 = vmatpush1.msra.mxu0 %v2278
  %2309 = vmatprep.subr.mxu0 0.0
  %2310 = vmatpush1.msra.mxu0 %v2279
  %2311 = vmatprep.subr.mxu0 0.0
  %2312 = vmatpush1.msra.mxu0 %v2280
  %2313 = vmatprep.subr.mxu0 0.0
  %2314 = vmatpush1.msra.mxu0 0.0
  %2315 = vmatprep.subr.mxu0 0.0
  %2316 = vmatpush1.msra.mxu0 0.0
  %2317 = vmatprep.subr.mxu0 0.0
  %2318 = vmatpush1.msra.mxu0 0.0
  %2319 = vmatprep.subr.mxu0 0.0
  %2320 = vmatpush1.msra.mxu0 0.0
  %2321 = vmatprep.subr.mxu0 0.0
  %2322 = vmatpush1.msra.mxu0 0.0
  %2323 = vmatprep.subr.mxu0 0.0
  %2324 = vmatpush1.msra.mxu0 0.0
  %2325 = vmatprep.subr.mxu0 0.0
  %2326 = vmatpush1.msra.mxu0 0.0
  %2327 = vmatprep.subr.mxu0 0.0
  %2328 = vmatpush1.msra.mxu0 0.0
  %2329 = vmatprep.subr.mxu0 0.0
  %2330 = vmatpush1.msra.mxu0 0.0
  %2331 = vmatprep.subr.mxu0 0.0
  %2332 = vmatpush1.msra.mxu0 0.0
  %2333 = vmatprep.subr.mxu0 0.0
  %2334 = vmatpush1.msra.mxu0 0.0
  %2335 = vmatprep.subr.mxu0 0.0
  %2336 = vmatpush1.msra.mxu0 0.0
  %2337 = vmatprep.subr.mxu0 0.0
  %2338 = vmatpush1.msra.mxu0 0.0
  %2339 = vmatprep.subr.mxu0 0.0
  %2340 = vmatpush1.msra.mxu0 0.0
  %2341 = vmatprep.subr.mxu0 0.0
  %2342 = vmatpush1.msra.mxu0 0.0
  %2343 = vmatprep.subr.mxu0 0.0
  %2344 = vmatpush1.msra.mxu0 0.0
  %2345 = vmatprep.mubr.f32.mxu0 0.0
  %2346 = vmatmul.mubr.f32.gmra.mrb[0].mxu0 %v2005
  %v2347 = vpop.f32.mrb[0].mxu0
  %v2348 = vadd.f32 0.0, %v2347
  %v2349 = vpop.f32.mrb[0].mxu0
  %2350 = vdwg.mxu0
  %v2351 = vmax.f32 %v2348, 0.0
  %s2352 = scalar_lea.vmem %s7, 40
  %2353 = vst [vmem:[%s2352] sm:$0xff] %v2351
  %s2354 = scalar_lea.vmem %s6, 40
  %2355 = vst [vmem:[%s2354] sm:$0xff] %v2351
  %s2356 = scalar_lea.vmem %s8, 40
  %2357 = vst [vmem:[%s2356] sm:$0xff] %v2262
  %s2358 = scalar_lea.vmem %s0, 48
  %v2359 = vld [vmem:[%s2358] sm:$0xff]
  %v2360 = vld [vmem:[%s1] sm:$0xff]
  %v2361 = vld [vmem:[%s1 + $0x8] sm:$0x3]
  %v2362 = vld [vmem:[%s2] sm:$0xff]
  %v2363 = vld [vmem:[%s2 + $0x8] sm:$0xff]
  %v2364 = vld [vmem:[%s2 + $0x10] sm:$0xff]
  %v2365 = vld [vmem:[%s2 + $0x18] sm:$0xff]
  %v2366 = vld [vmem:[%s2 + $0x20] sm:$0xff]
  %v2367 = vld [vmem:[%s2 + $0x28] sm:$0xff]
  %v2368 = vld [vmem:[%s2 + $0x30] sm:$0xff]
  %v2369 = vld [vmem:[%s2 + $0x38] sm:$0xff]
  %v2370 = vld [vmem:[%s2 + $0x40] sm:$0xff]
  %v2371 = vld [vmem:[%s2 + $0x48] sm:$0xff]
  %v2372 = vld [vmem:[%s2 + $0x50] sm:$0xff]
  %v2373 = vld [vmem:[%s2 + $0x58] sm:$0xff]
  %v2374 = vld [vmem:[%s2 + $0x60] sm:$0xff]
  %v2375 = vld [vmem:[%s2 + $0x68] sm:$0xff]
  %v2376 = vld [vmem:[%s2 + $0x70] sm:$0xff]
  %v2377 = vld [vmem:[%s2 + $0x78] sm:$0xff]
  %2378 = vmatprep.subr.mxu0 0.0
  %2379 = vmatpush1.msra.mxu0 %v2362
  %2380 = vmatprep.subr.mxu0 0.0
  %2381 = vmatpush1.msra.mxu0 %v2363
  %2382 = vmatprep.subr.mxu0 0.0
  %2383 = vmatpush1.msra.mxu0 %v2364
  %2384 = vmatprep.subr.mxu0 0.0
  %2385 = vmatpush1.msra.mxu0 %v2365
  %2386 = vmatprep.subr.mxu0 0.0
  %2387 = vmatpush1.msra.mxu0 %v2366
  %2388 = vmatprep.subr.mxu0 0.0
  %2389 = vmatpush1.msra.mxu0 %v2367
  %2390 = vmatprep.subr.mxu0 0.0
  %2391 = vmatpush1.msra.mxu0 %v2368
  %2392 = vmatprep.subr.mxu0 0.0
  %2393 = vmatpush1.msra.mxu0 %v2369
  %2394 = vmatprep.subr.mxu0 0.0
  %2395 = vmatpush1.msra.mxu0 %v2370
  %2396 = vmatprep.subr.mxu0 0.0
  %2397 = vmatpush1.msra.mxu0 %v2371
  %2398 = vmatprep.subr.mxu0 0.0
  %2399 = vmatpush1.msra.mxu0 %v2372
  %2400 = vmatprep.subr.mxu0 0.0
  %2401 = vmatpush1.msra.mxu0 %v2373
  %2402 = vmatprep.subr.mxu0 0.0
  %2403 = vmatpush1.msra.mxu0 %v2374
  %2404 = vmatprep.subr.mxu0 0.0
  %2405 = vmatpush1.msra.mxu0 %v2375
  %2406 = vmatprep.subr.mxu0 0.0
  %2407 = vmatpush1.msra.mxu0 %v2376
  %2408 = vmatprep.subr.mxu0 0.0
  %2409 = vmatpush1.msra.mxu0 %v2377
  %2410 = vmatprep.subr.mxu0 0.0
  %2411 = vmatpush1.msra.mxu0 0.0
  %2412 = vmatprep.subr.mxu0 0.0
  %2413 = vmatpush1.msra.mxu0 0.0
  %2414 = vmatprep.subr.mxu0 0.0
  %2415 = vmatpush1.msra.mxu0 0.0
  %2416 = vmatprep.subr.mxu0 0.0
  %2417 = vmatpush1.msra.mxu0 0.0
  %2418 = vmatprep.subr.mxu0 0.0
  %2419 = vmatpush1.msra.mxu0 0.0
  %2420 = vmatprep.subr.mxu0 0.0
  %2421 = vmatpush1.msra.mxu0 0.0
  %2422 = vmatprep.subr.mxu0 0.0
  %2423 = vmatpush1.msra.mxu0 0.0
  %2424 = vmatprep.subr.mxu0 0.0
  %2425 = vmatpush1.msra.mxu0 0.0
  %2426 = vmatprep.subr.mxu0 0.0
  %2427 = vmatpush1.msra.mxu0 0.0
  %2428 = vmatprep.subr.mxu0 0.0
  %2429 = vmatpush1.msra.mxu0 0.0
  %2430 = vmatprep.subr.mxu0 0.0
  %2431 = vmatpush1.msra.mxu0 0.0
  %2432 = vmatprep.subr.mxu0 0.0
  %2433 = vmatpush1.msra.mxu0 0.0
  %2434 = vmatprep.subr.mxu0 0.0
  %2435 = vmatpush1.msra.mxu0 0.0
  %2436 = vmatprep.subr.mxu0 0.0
  %2437 = vmatpush1.msra.mxu0 0.0
  %2438 = vmatprep.subr.mxu0 0.0
  %2439 = vmatpush1.msra.mxu0 0.0
  %2440 = vmatprep.subr.mxu0 0.0
  %2441 = vmatpush1.msra.mxu0 0.0
  %2442 = vmatprep.mubr.f32.mxu0 0.0
  %2443 = vmatmul.mubr.f32.gmra.mrb[0].mxu0 %v2178
  %v2444 = vpop.f32.mrb[0].mxu0
  %v2445 = vadd.f32 0.0, %v2444
  %v2446 = vpop.f32.mrb[0].mxu0
  %2447 = vdwg.mxu0
  %v2449 = vsel %vm115, %v2359, 0
  %v2452 = vsel %vm119, %v2361, 0
  %2454 = vmatprep.subr.mxu0 0.0
  %2455 = vmatpush1.msra.mxu0 %v2360
  %2456 = vmatprep.subr.mxu0 0.0
  %2457 = vmatpush1.msra.mxu0 %v2452
  %2458 = vmatprep.subr.mxu0 0.0
  %2459 = vmatpush1.msra.mxu0 0.0
  %2460 = vmatprep.subr.mxu0 0.0
  %2461 = vmatpush1.msra.mxu0 0.0
  %2462 = vmatprep.subr.mxu0 0.0
  %2463 = vmatpush1.msra.mxu0 0.0
  %2464 = vmatprep.subr.mxu0 0.0
  %2465 = vmatpush1.msra.mxu0 0.0
  %2466 = vmatprep.subr.mxu0 0.0
  %2467 = vmatpush1.msra.mxu0 0.0
  %2468 = vmatprep.subr.mxu0 0.0
  %2469 = vmatpush1.msra.mxu0 0.0
  %2470 = vmatprep.subr.mxu0 0.0
  %2471 = vmatpush1.msra.mxu0 0.0
  %2472 = vmatprep.subr.mxu0 0.0
  %2473 = vmatpush1.msra.mxu0 0.0
  %2474 = vmatprep.subr.mxu0 0.0
  %2475 = vmatpush1.msra.mxu0 0.0
  %2476 = vmatprep.subr.mxu0 0.0
  %2477 = vmatpush1.msra.mxu0 0.0
  %2478 = vmatprep.subr.mxu0 0.0
  %2479 = vmatpush1.msra.mxu0 0.0
  %2480 = vmatprep.subr.mxu0 0.0
  %2481 = vmatpush1.msra.mxu0 0.0
  %2482 = vmatprep.subr.mxu0 0.0
  %2483 = vmatpush1.msra.mxu0 0.0
  %2484 = vmatprep.subr.mxu0 0.0
  %2485 = vmatpush1.msra.mxu0 0.0
  %2486 = vmatprep.subr.mxu0 0.0
  %2487 = vmatpush1.msra.mxu0 0.0
  %2488 = vmatprep.subr.mxu0 0.0
  %2489 = vmatpush1.msra.mxu0 0.0
  %2490 = vmatprep.subr.mxu0 0.0
  %2491 = vmatpush1.msra.mxu0 0.0
  %2492 = vmatprep.subr.mxu0 0.0
  %2493 = vmatpush1.msra.mxu0 0.0
  %2494 = vmatprep.subr.mxu0 0.0
  %2495 = vmatpush1.msra.mxu0 0.0
  %2496 = vmatprep.subr.mxu0 0.0
  %2497 = vmatpush1.msra.mxu0 0.0
  %2498 = vmatprep.subr.mxu0 0.0
  %2499 = vmatpush1.msra.mxu0 0.0
  %2500 = vmatprep.subr.mxu0 0.0
  %2501 = vmatpush1.msra.mxu0 0.0
  %2502 = vmatprep.subr.mxu0 0.0
  %2503 = vmatpush1.msra.mxu0 0.0
  %2504 = vmatprep.subr.mxu0 0.0
  %2505 = vmatpush1.msra.mxu0 0.0
  %2506 = vmatprep.subr.mxu0 0.0
  %2507 = vmatpush1.msra.mxu0 0.0
  %2508 = vmatprep.subr.mxu0 0.0
  %2509 = vmatpush1.msra.mxu0 0.0
  %2510 = vmatprep.subr.mxu0 0.0
  %2511 = vmatpush1.msra.mxu0 0.0
  %2512 = vmatprep.subr.mxu0 0.0
  %2513 = vmatpush1.msra.mxu0 0.0
  %2514 = vmatprep.subr.mxu0 0.0
  %2515 = vmatpush1.msra.mxu0 0.0
  %2516 = vmatprep.subr.mxu0 0.0
  %2517 = vmatpush1.msra.mxu0 0.0
  %2518 = vmatprep.mubr.f32.mxu0 0.0
  %2519 = vmatmul.mubr.f32.gmra.mrb[0].mxu0 %v2449
  %v2520 = vpop.f32.mrb[0].mxu0
  %v2521 = vadd.f32 %v2445, %v2520
  %v2522 = vpop.f32.mrb[0].mxu0
  %2523 = vdwg.mxu0
  %v2524 = vmax.f32 %v2521, 0.0
  %v2525 = vld [vmem:[%s3] sm:$0xff]
  %v2526 = vld [vmem:[%s3 + $0x8] sm:$0xff]
  %v2527 = vld [vmem:[%s3 + $0x10] sm:$0xff]
  %v2528 = vld [vmem:[%s3 + $0x18] sm:$0xff]
  %v2529 = vld [vmem:[%s3 + $0x20] sm:$0xff]
  %v2530 = vld [vmem:[%s3 + $0x28] sm:$0xff]
  %v2531 = vld [vmem:[%s3 + $0x30] sm:$0xff]
  %v2532 = vld [vmem:[%s3 + $0x38] sm:$0xff]
  %v2533 = vld [vmem:[%s3 + $0x40] sm:$0xff]
  %v2534 = vld [vmem:[%s3 + $0x48] sm:$0xff]
  %v2535 = vld [vmem:[%s3 + $0x50] sm:$0xff]
  %v2536 = vld [vmem:[%s3 + $0x58] sm:$0xff]
  %v2537 = vld [vmem:[%s3 + $0x60] sm:$0xff]
  %v2538 = vld [vmem:[%s3 + $0x68] sm:$0xff]
  %v2539 = vld [vmem:[%s3 + $0x70] sm:$0xff]
  %v2540 = vld [vmem:[%s3 + $0x78] sm:$0xff]
  %2541 = vmatprep.subr.mxu0 0.0
  %2542 = vmatpush1.msra.mxu0 %v2525
  %2543 = vmatprep.subr.mxu0 0.0
  %2544 = vmatpush1.msra.mxu0 %v2526
  %2545 = vmatprep.subr.mxu0 0.0
  %2546 = vmatpush1.msra.mxu0 %v2527
  %2547 = vmatprep.subr.mxu0 0.0
  %2548 = vmatpush1.msra.mxu0 %v2528
  %2549 = vmatprep.subr.mxu0 0.0
  %2550 = vmatpush1.msra.mxu0 %v2529
  %2551 = vmatprep.subr.mxu0 0.0
  %2552 = vmatpush1.msra.mxu0 %v2530
  %2553 = vmatprep.subr.mxu0 0.0
  %2554 = vmatpush1.msra.mxu0 %v2531
  %2555 = vmatprep.subr.mxu0 0.0
  %2556 = vmatpush1.msra.mxu0 %v2532
  %2557 = vmatprep.subr.mxu0 0.0
  %2558 = vmatpush1.msra.mxu0 %v2533
  %2559 = vmatprep.subr.mxu0 0.0
  %2560 = vmatpush1.msra.mxu0 %v2534
  %2561 = vmatprep.subr.mxu0 0.0
  %2562 = vmatpush1.msra.mxu0 %v2535
  %2563 = vmatprep.subr.mxu0 0.0
  %2564 = vmatpush1.msra.mxu0 %v2536
  %2565 = vmatprep.subr.mxu0 0.0
  %2566 = vmatpush1.msra.mxu0 %v2537
  %2567 = vmatprep.subr.mxu0 0.0
  %2568 = vmatpush1.msra.mxu0 %v2538
  %2569 = vmatprep.subr.mxu0 0.0
  %2570 = vmatpush1.msra.mxu0 %v2539
  %2571 = vmatprep.subr.mxu0 0.0
  %2572 = vmatpush1.msra.mxu0 %v2540
  %2573 = vmatprep.subr.mxu0 0.0
  %2574 = vmatpush1.msra.mxu0 0.0
  %2575 = vmatprep.subr.mxu0 0.0
  %2576 = vmatpush1.msra.mxu0 0.0
  %2577 = vmatprep.subr.mxu0 0.0
  %2578 = vmatpush1.msra.mxu0 0.0
  %2579 = vmatprep.subr.mxu0 0.0
  %2580 = vmatpush1.msra.mxu0 0.0
  %2581 = vmatprep.subr.mxu0 0.0
  %2582 = vmatpush1.msra.mxu0 0.0
  %2583 = vmatprep.subr.mxu0 0.0
  %2584 = vmatpush1.msra.mxu0 0.0
  %2585 = vmatprep.subr.mxu0 0.0
  %2586 = vmatpush1.msra.mxu0 0.0
  %2587 = vmatprep.subr.mxu0 0.0
  %2588 = vmatpush1.msra.mxu0 0.0
  %2589 = vmatprep.subr.mxu0 0.0
  %2590 = vmatpush1.msra.mxu0 0.0
  %2591 = vmatprep.subr.mxu0 0.0
  %2592 = vmatpush1.msra.mxu0 0.0
  %2593 = vmatprep.subr.mxu0 0.0
  %2594 = vmatpush1.msra.mxu0 0.0
  %2595 = vmatprep.subr.mxu0 0.0
  %2596 = vmatpush1.msra.mxu0 0.0
  %2597 = vmatprep.subr.mxu0 0.0
  %2598 = vmatpush1.msra.mxu0 0.0
  %2599 = vmatprep.subr.mxu0 0.0
  %2600 = vmatpush1.msra.mxu0 0.0
  %2601 = vmatprep.subr.mxu0 0.0
  %2602 = vmatpush1.msra.mxu0 0.0
  %2603 = vmatprep.subr.mxu0 0.0
  %2604 = vmatpush1.msra.mxu0 0.0
  %2605 = vmatprep.mubr.f32.mxu0 0.0
  %2606 = vmatmul.mubr.f32.gmra.mrb[0].mxu0 %v2524
  %v2607 = vpop.f32.mrb[0].mxu0
  %v2608 = vadd.f32 0.0, %v2607
  %v2609 = vpop.f32.mrb[0].mxu0
  %2610 = vdwg.mxu0
  %v2611 = vld [vmem:[%s4] sm:$0xff]
  %v2612 = vld [vmem:[%s4 + $0x8] sm:$0xff]
  %v2613 = vld [vmem:[%s4 + $0x10] sm:$0xff]
  %v2614 = vld [vmem:[%s4 + $0x18] sm:$0xff]
  %v2615 = vld [vmem:[%s4 + $0x20] sm:$0xff]
  %v2616 = vld [vmem:[%s4 + $0x28] sm:$0xff]
  %v2617 = vld [vmem:[%s4 + $0x30] sm:$0xff]
  %v2618 = vld [vmem:[%s4 + $0x38] sm:$0xff]
  %v2619 = vld [vmem:[%s4 + $0x40] sm:$0xff]
  %v2620 = vld [vmem:[%s4 + $0x48] sm:$0xff]
  %v2621 = vld [vmem:[%s4 + $0x50] sm:$0xff]
  %v2622 = vld [vmem:[%s4 + $0x58] sm:$0xff]
  %v2623 = vld [vmem:[%s4 + $0x60] sm:$0xff]
  %v2624 = vld [vmem:[%s4 + $0x68] sm:$0xff]
  %v2625 = vld [vmem:[%s4 + $0x70] sm:$0xff]
  %v2626 = vld [vmem:[%s4 + $0x78] sm:$0xff]
  %v2627 = vld [vmem:[%s5] sm:$0xff]
  %v2628 = vld [vmem:[%s5 + $0x8] sm:$0xff]
  %v2629 = vld [vmem:[%s5 + $0x10] sm:$0xff]
  %v2630 = vld [vmem:[%s5 + $0x18] sm:$0xff]
  %v2631 = vld [vmem:[%s5 + $0x20] sm:$0xff]
  %v2632 = vld [vmem:[%s5 + $0x28] sm:$0xff]
  %v2633 = vld [vmem:[%s5 + $0x30] sm:$0xff]
  %v2634 = vld [vmem:[%s5 + $0x38] sm:$0xff]
  %v2635 = vld [vmem:[%s5 + $0x40] sm:$0xff]
  %v2636 = vld [vmem:[%s5 + $0x48] sm:$0xff]
  %v2637 = vld [vmem:[%s5 + $0x50] sm:$0xff]
  %v2638 = vld [vmem:[%s5 + $0x58] sm:$0xff]
  %v2639 = vld [vmem:[%s5 + $0x60] sm:$0xff]
  %v2640 = vld [vmem:[%s5 + $0x68] sm:$0xff]
  %v2641 = vld [vmem:[%s5 + $0x70] sm:$0xff]
  %v2642 = vld [vmem:[%s5 + $0x78] sm:$0xff]
  %2643 = vmatprep.subr.mxu0 0.0
  %2644 = vmatpush1.msra.mxu0 %v2627
  %2645 = vmatprep.subr.mxu0 0.0
  %2646 = vmatpush1.msra.mxu0 %v2628
  %2647 = vmatprep.subr.mxu0 0.0
  %2648 = vmatpush1.msra.mxu0 %v2629
  %2649 = vmatprep.subr.mxu0 0.0
  %2650 = vmatpush1.msra.mxu0 %v2630
  %2651 = vmatprep.subr.mxu0 0.0
  %2652 = vmatpush1.msra.mxu0 %v2631
  %2653 = vmatprep.subr.mxu0 0.0
  %2654 = vmatpush1.msra.mxu0 %v2632
  %2655 = vmatprep.subr.mxu0 0.0
  %2656 = vmatpush1.msra.mxu0 %v2633
  %2657 = vmatprep.subr.mxu0 0.0
  %2658 = vmatpush1.msra.mxu0 %v2634
  %2659 = vmatprep.subr.mxu0 0.0
  %2660 = vmatpush1.msra.mxu0 %v2635
  %2661 = vmatprep.subr.mxu0 0.0
  %2662 = vmatpush1.msra.mxu0 %v2636
  %2663 = vmatprep.subr.mxu0 0.0
  %2664 = vmatpush1.msra.mxu0 %v2637
  %2665 = vmatprep.subr.mxu0 0.0
  %2666 = vmatpush1.msra.mxu0 %v2638
  %2667 = vmatprep.subr.mxu0 0.0
  %2668 = vmatpush1.msra.mxu0 %v2639
  %2669 = vmatprep.subr.mxu0 0.0
  %2670 = vmatpush1.msra.mxu0 %v2640
  %2671 = vmatprep.subr.mxu0 0.0
  %2672 = vmatpush1.msra.mxu0 %v2641
  %2673 = vmatprep.subr.mxu0 0.0
  %2674 = vmatpush1.msra.mxu0 %v2642
  %2675 = vmatprep.subr.mxu0 0.0
  %2676 = vmatpush1.msra.mxu0 0.0
  %2677 = vmatprep.subr.mxu0 0.0
  %2678 = vmatpush1.msra.mxu0 0.0
  %2679 = vmatprep.subr.mxu0 0.0
  %2680 = vmatpush1.msra.mxu0 0.0
  %2681 = vmatprep.subr.mxu0 0.0
  %2682 = vmatpush1.msra.mxu0 0.0
  %2683 = vmatprep.subr.mxu0 0.0
  %2684 = vmatpush1.msra.mxu0 0.0
  %2685 = vmatprep.subr.mxu0 0.0
  %2686 = vmatpush1.msra.mxu0 0.0
  %2687 = vmatprep.subr.mxu0 0.0
  %2688 = vmatpush1.msra.mxu0 0.0
  %2689 = vmatprep.subr.mxu0 0.0
  %2690 = vmatpush1.msra.mxu0 0.0
  %2691 = vmatprep.subr.mxu0 0.0
  %2692 = vmatpush1.msra.mxu0 0.0
  %2693 = vmatprep.subr.mxu0 0.0
  %2694 = vmatpush1.msra.mxu0 0.0
  %2695 = vmatprep.subr.mxu0 0.0
  %2696 = vmatpush1.msra.mxu0 0.0
  %2697 = vmatprep.subr.mxu0 0.0
  %2698 = vmatpush1.msra.mxu0 0.0
  %2699 = vmatprep.subr.mxu0 0.0
  %2700 = vmatpush1.msra.mxu0 0.0
  %2701 = vmatprep.subr.mxu0 0.0
  %2702 = vmatpush1.msra.mxu0 0.0
  %2703 = vmatprep.subr.mxu0 0.0
  %2704 = vmatpush1.msra.mxu0 0.0
  %2705 = vmatprep.subr.mxu0 0.0
  %2706 = vmatpush1.msra.mxu0 0.0
  %2707 = vmatprep.mubr.f32.mxu0 0.0
  %2708 = vmatmul.mubr.f32.gmra.mrb[0].mxu0 %v2351
  %v2709 = vpop.f32.mrb[0].mxu0
  %v2710 = vadd.f32 0.0, %v2709
  %v2711 = vpop.f32.mrb[0].mxu0
  %2712 = vdwg.mxu0
  %2713 = vmatprep.subr.mxu0 0.0
  %2714 = vmatpush1.msra.mxu0 %v2611
  %2715 = vmatprep.subr.mxu0 0.0
  %2716 = vmatpush1.msra.mxu0 %v2612
  %2717 = vmatprep.subr.mxu0 0.0
  %2718 = vmatpush1.msra.mxu0 %v2613
  %2719 = vmatprep.subr.mxu0 0.0
  %2720 = vmatpush1.msra.mxu0 %v2614
  %2721 = vmatprep.subr.mxu0 0.0
  %2722 = vmatpush1.msra.mxu0 %v2615
  %2723 = vmatprep.subr.mxu0 0.0
  %2724 = vmatpush1.msra.mxu0 %v2616
  %2725 = vmatprep.subr.mxu0 0.0
  %2726 = vmatpush1.msra.mxu0 %v2617
  %2727 = vmatprep.subr.mxu0 0.0
  %2728 = vmatpush1.msra.mxu0 %v2618
  %2729 = vmatprep.subr.mxu0 0.0
  %2730 = vmatpush1.msra.mxu0 %v2619
  %2731 = vmatprep.subr.mxu0 0.0
  %2732 = vmatpush1.msra.mxu0 %v2620
  %2733 = vmatprep.subr.mxu0 0.0
  %2734 = vmatpush1.msra.mxu0 %v2621
  %2735 = vmatprep.subr.mxu0 0.0
  %2736 = vmatpush1.msra.mxu0 %v2622
  %2737 = vmatprep.subr.mxu0 0.0
  %2738 = vmatpush1.msra.mxu0 %v2623
  %2739 = vmatprep.subr.mxu0 0.0
  %2740 = vmatpush1.msra.mxu0 %v2624
  %2741 = vmatprep.subr.mxu0 0.0
  %2742 = vmatpush1.msra.mxu0 %v2625
  %2743 = vmatprep.subr.mxu0 0.0
  %2744 = vmatpush1.msra.mxu0 %v2626
  %2745 = vmatprep.subr.mxu0 0.0
  %2746 = vmatpush1.msra.mxu0 0.0
  %2747 = vmatprep.subr.mxu0 0.0
  %2748 = vmatpush1.msra.mxu0 0.0
  %2749 = vmatprep.subr.mxu0 0.0
  %2750 = vmatpush1.msra.mxu0 0.0
  %2751 = vmatprep.subr.mxu0 0.0
  %2752 = vmatpush1.msra.mxu0 0.0
  %2753 = vmatprep.subr.mxu0 0.0
  %2754 = vmatpush1.msra.mxu0 0.0
  %2755 = vmatprep.subr.mxu0 0.0
  %2756 = vmatpush1.msra.mxu0 0.0
  %2757 = vmatprep.subr.mxu0 0.0
  %2758 = vmatpush1.msra.mxu0 0.0
  %2759 = vmatprep.subr.mxu0 0.0
  %2760 = vmatpush1.msra.mxu0 0.0
  %2761 = vmatprep.subr.mxu0 0.0
  %2762 = vmatpush1.msra.mxu0 0.0
  %2763 = vmatprep.subr.mxu0 0.0
  %2764 = vmatpush1.msra.mxu0 0.0
  %2765 = vmatprep.subr.mxu0 0.0
  %2766 = vmatpush1.msra.mxu0 0.0
  %2767 = vmatprep.subr.mxu0 0.0
  %2768 = vmatpush1.msra.mxu0 0.0
  %2769 = vmatprep.subr.mxu0 0.0
  %2770 = vmatpush1.msra.mxu0 0.0
  %2771 = vmatprep.subr.mxu0 0.0
  %2772 = vmatpush1.msra.mxu0 0.0
  %2773 = vmatprep.subr.mxu0 0.0
  %2774 = vmatpush1.msra.mxu0 0.0
  %2775 = vmatprep.subr.mxu0 0.0
  %2776 = vmatpush1.msra.mxu0 0.0
  %2777 = vmatprep.mubr.f32.mxu0 0.0
  %2778 = vmatmul.mubr.f32.gmra.mrb[0].mxu0 %v2608
  %v2779 = vpop.f32.mrb[0].mxu0
  %v2780 = vadd.f32 %v2710, %v2779
  %v2781 = vpop.f32.mrb[0].mxu0
  %2782 = vdwg.mxu0
  %v2783 = vmax.f32 %v2780, 0.0
  %s2784 = scalar_lea.vmem %s7, 48
  %2785 = vst [vmem:[%s2784] sm:$0xff] %v2783
  %s2786 = scalar_lea.vmem %s6, 48
  %2787 = vst [vmem:[%s2786] sm:$0xff] 0.0
  %s2788 = scalar_lea.vmem %s8, 48
  %2789 = vst [vmem:[%s2788] sm:$0xff] 0.0
  %s2790 = scalar_lea.vmem %s0, 56
  %v2791 = vld [vmem:[%s2790] sm:$0xff]
  %v2792 = vld [vmem:[%s1] sm:$0xff]
  %v2793 = vld [vmem:[%s1 + $0x8] sm:$0x3]
  %v2794 = vld [vmem:[%s2] sm:$0xff]
  %v2795 = vld [vmem:[%s2 + $0x8] sm:$0xff]
  %v2796 = vld [vmem:[%s2 + $0x10] sm:$0xff]
  %v2797 = vld [vmem:[%s2 + $0x18] sm:$0xff]
  %v2798 = vld [vmem:[%s2 + $0x20] sm:$0xff]
  %v2799 = vld [vmem:[%s2 + $0x28] sm:$0xff]
  %v2800 = vld [vmem:[%s2 + $0x30] sm:$0xff]
  %v2801 = vld [vmem:[%s2 + $0x38] sm:$0xff]
  %v2802 = vld [vmem:[%s2 + $0x40] sm:$0xff]
  %v2803 = vld [vmem:[%s2 + $0x48] sm:$0xff]
  %v2804 = vld [vmem:[%s2 + $0x50] sm:$0xff]
  %v2805 = vld [vmem:[%s2 + $0x58] sm:$0xff]
  %v2806 = vld [vmem:[%s2 + $0x60] sm:$0xff]
  %v2807 = vld [vmem:[%s2 + $0x68] sm:$0xff]
  %v2808 = vld [vmem:[%s2 + $0x70] sm:$0xff]
  %v2809 = vld [vmem:[%s2 + $0x78] sm:$0xff]
  %2810 = vmatprep.subr.mxu0 0.0
  %2811 = vmatpush1.msra.mxu0 %v2794
  %2812 = vmatprep.subr.mxu0 0.0
  %2813 = vmatpush1.msra.mxu0 %v2795
  %2814 = vmatprep.subr.mxu0 0.0
  %2815 = vmatpush1.msra.mxu0 %v2796
  %2816 = vmatprep.subr.mxu0 0.0
  %2817 = vmatpush1.msra.mxu0 %v2797
  %2818 = vmatprep.subr.mxu0 0.0
  %2819 = vmatpush1.msra.mxu0 %v2798
  %2820 = vmatprep.subr.mxu0 0.0
  %2821 = vmatpush1.msra.mxu0 %v2799
  %2822 = vmatprep.subr.mxu0 0.0
  %2823 = vmatpush1.msra.mxu0 %v2800
  %2824 = vmatprep.subr.mxu0 0.0
  %2825 = vmatpush1.msra.mxu0 %v2801
  %2826 = vmatprep.subr.mxu0 0.0
  %2827 = vmatpush1.msra.mxu0 %v2802
  %2828 = vmatprep.subr.mxu0 0.0
  %2829 = vmatpush1.msra.mxu0 %v2803
  %2830 = vmatprep.subr.mxu0 0.0
  %2831 = vmatpush1.msra.mxu0 %v2804
  %2832 = vmatprep.subr.mxu0 0.0
  %2833 = vmatpush1.msra.mxu0 %v2805
  %2834 = vmatprep.subr.mxu0 0.0
  %2835 = vmatpush1.msra.mxu0 %v2806
  %2836 = vmatprep.subr.mxu0 0.0
  %2837 = vmatpush1.msra.mxu0 %v2807
  %2838 = vmatprep.subr.mxu0 0.0
  %2839 = vmatpush1.msra.mxu0 %v2808
  %2840 = vmatprep.subr.mxu0 0.0
  %2841 = vmatpush1.msra.mxu0 %v2809
  %2842 = vmatprep.subr.mxu0 0.0
  %2843 = vmatpush1.msra.mxu0 0.0
  %2844 = vmatprep.subr.mxu0 0.0
  %2845 = vmatpush1.msra.mxu0 0.0
  %2846 = vmatprep.subr.mxu0 0.0
  %2847 = vmatpush1.msra.mxu0 0.0
  %2848 = vmatprep.subr.mxu0 0.0
  %2849 = vmatpush1.msra.mxu0 0.0
  %2850 = vmatprep.subr.mxu0 0.0
  %2851 = vmatpush1.msra.mxu0 0.0
  %2852 = vmatprep.subr.mxu0 0.0
  %2853 = vmatpush1.msra.mxu0 0.0
  %2854 = vmatprep.subr.mxu0 0.0
  %2855 = vmatpush1.msra.mxu0 0.0
  %2856 = vmatprep.subr.mxu0 0.0
  %2857 = vmatpush1.msra.mxu0 0.0
  %2858 = vmatprep.subr.mxu0 0.0
  %2859 = vmatpush1.msra.mxu0 0.0
  %2860 = vmatprep.subr.mxu0 0.0
  %2861 = vmatpush1.msra.mxu0 0.0
  %2862 = vmatprep.subr.mxu0 0.0
  %2863 = vmatpush1.msra.mxu0 0.0
  %2864 = vmatprep.subr.mxu0 0.0
  %2865 = vmatpush1.msra.mxu0 0.0
  %2866 = vmatprep.subr.mxu0 0.0
  %2867 = vmatpush1.msra.mxu0 0.0
  %2868 = vmatprep.subr.mxu0 0.0
  %2869 = vmatpush1.msra.mxu0 0.0
  %2870 = vmatprep.subr.mxu0 0.0
  %2871 = vmatpush1.msra.mxu0 0.0
  %2872 = vmatprep.subr.mxu0 0.0
  %2873 = vmatpush1.msra.mxu0 0.0
  %2874 = vmatprep.mubr.f32.mxu0 0.0
  %2875 = vmatmul.mubr.f32.gmra.mrb[0].mxu0 %v2524
  %v2876 = vpop.f32.mrb[0].mxu0
  %v2877 = vadd.f32 0.0, %v2876
  %v2878 = vpop.f32.mrb[0].mxu0
  %2879 = vdwg.mxu0
  %v2881 = vsel %vm115, %v2791, 0
  %v2884 = vsel %vm119, %v2793, 0
  %2886 = vmatprep.subr.mxu0 0.0
  %2887 = vmatpush1.msra.mxu0 %v2792
  %2888 = vmatprep.subr.mxu0 0.0
  %2889 = vmatpush1.msra.mxu0 %v2884
  %2890 = vmatprep.subr.mxu0 0.0
  %2891 = vmatpush1.msra.mxu0 0.0
  %2892 = vmatprep.subr.mxu0 0.0
  %2893 = vmatpush1.msra.mxu0 0.0
  %2894 = vmatprep.subr.mxu0 0.0
  %2895 = vmatpush1.msra.mxu0 0.0
  %2896 = vmatprep.subr.mxu0 0.0
  %2897 = vmatpush1.msra.mxu0 0.0
  %2898 = vmatprep.subr.mxu0 0.0
  %2899 = vmatpush1.msra.mxu0 0.0
  %2900 = vmatprep.subr.mxu0 0.0
  %2901 = vmatpush1.msra.mxu0 0.0
  %2902 = vmatprep.subr.mxu0 0.0
  %2903 = vmatpush1.msra.mxu0 0.0
  %2904 = vmatprep.subr.mxu0 0.0
  %2905 = vmatpush1.msra.mxu0 0.0
  %2906 = vmatprep.subr.mxu0 0.0
  %2907 = vmatpush1.msra.mxu0 0.0
  %2908 = vmatprep.subr.mxu0 0.0
  %2909 = vmatpush1.msra.mxu0 0.0
  %2910 = vmatprep.subr.mxu0 0.0
  %2911 = vmatpush1.msra.mxu0 0.0
  %2912 = vmatprep.subr.mxu0 0.0
  %2913 = vmatpush1.msra.mxu0 0.0
  %2914 = vmatprep.subr.mxu0 0.0
  %2915 = vmatpush1.msra.mxu0 0.0
  %2916 = vmatprep.subr.mxu0 0.0
  %2917 = vmatpush1.msra.mxu0 0.0
  %2918 = vmatprep.subr.mxu0 0.0
  %2919 = vmatpush1.msra.mxu0 0.0
  %2920 = vmatprep.subr.mxu0 0.0
  %2921 = vmatpush1.msra.mxu0 0.0
  %2922 = vmatprep.subr.mxu0 0.0
  %2923 = vmatpush1.msra.mxu0 0.0
  %2924 = vmatprep.subr.mxu0 0.0
  %2925 = vmatpush1.msra.mxu0 0.0
  %2926 = vmatprep.subr.mxu0 0.0
  %2927 = vmatpush1.msra.mxu0 0.0
  %2928 = vmatprep.subr.mxu0 0.0
  %2929 = vmatpush1.msra.mxu0 0.0
  %2930 = vmatprep.subr.mxu0 0.0
  %2931 = vmatpush1.msra.mxu0 0.0
  %2932 = vmatprep.subr.mxu0 0.0
  %2933 = vmatpush1.msra.mxu0 0.0
  %2934 = vmatprep.subr.mxu0 0.0
  %2935 = vmatpush1.msra.mxu0 0.0
  %2936 = vmatprep.subr.mxu0 0.0
  %2937 = vmatpush1.msra.mxu0 0.0
  %2938 = vmatprep.subr.mxu0 0.0
  %2939 = vmatpush1.msra.mxu0 0.0
  %2940 = vmatprep.subr.mxu0 0.0
  %2941 = vmatpush1.msra.mxu0 0.0
  %2942 = vmatprep.subr.mxu0 0.0
  %2943 = vmatpush1.msra.mxu0 0.0
  %2944 = vmatprep.subr.mxu0 0.0
  %2945 = vmatpush1.msra.mxu0 0.0
  %2946 = vmatprep.subr.mxu0 0.0
  %2947 = vmatpush1.msra.mxu0 0.0
  %2948 = vmatprep.subr.mxu0 0.0
  %2949 = vmatpush1.msra.mxu0 0.0
  %2950 = vmatprep.mubr.f32.mxu0 0.0
  %2951 = vmatmul.mubr.f32.gmra.mrb[0].mxu0 %v2881
  %v2952 = vpop.f32.mrb[0].mxu0
  %v2953 = vadd.f32 %v2877, %v2952
  %v2954 = vpop.f32.mrb[0].mxu0
  %2955 = vdwg.mxu0
  %v2956 = vmax.f32 %v2953, 0.0
  %v2957 = vld [vmem:[%s3] sm:$0xff]
  %v2958 = vld [vmem:[%s3 + $0x8] sm:$0xff]
  %v2959 = vld [vmem:[%s3 + $0x10] sm:$0xff]
  %v2960 = vld [vmem:[%s3 + $0x18] sm:$0xff]
  %v2961 = vld [vmem:[%s3 + $0x20] sm:$0xff]
  %v2962 = vld [vmem:[%s3 + $0x28] sm:$0xff]
  %v2963 = vld [vmem:[%s3 + $0x30] sm:$0xff]
  %v2964 = vld [vmem:[%s3 + $0x38] sm:$0xff]
  %v2965 = vld [vmem:[%s3 + $0x40] sm:$0xff]
  %v2966 = vld [vmem:[%s3 + $0x48] sm:$0xff]
  %v2967 = vld [vmem:[%s3 + $0x50] sm:$0xff]
  %v2968 = vld [vmem:[%s3 + $0x58] sm:$0xff]
  %v2969 = vld [vmem:[%s3 + $0x60] sm:$0xff]
  %v2970 = vld [vmem:[%s3 + $0x68] sm:$0xff]
  %v2971 = vld [vmem:[%s3 + $0x70] sm:$0xff]
  %v2972 = vld [vmem:[%s3 + $0x78] sm:$0xff]
  %2973 = vmatprep.subr.mxu0 0.0
  %2974 = vmatpush1.msra.mxu0 %v2957
  %2975 = vmatprep.subr.mxu0 0.0
  %2976 = vmatpush1.msra.mxu0 %v2958
  %2977 = vmatprep.subr.mxu0 0.0
  %2978 = vmatpush1.msra.mxu0 %v2959
  %2979 = vmatprep.subr.mxu0 0.0
  %2980 = vmatpush1.msra.mxu0 %v2960
  %2981 = vmatprep.subr.mxu0 0.0
  %2982 = vmatpush1.msra.mxu0 %v2961
  %2983 = vmatprep.subr.mxu0 0.0
  %2984 = vmatpush1.msra.mxu0 %v2962
  %2985 = vmatprep.subr.mxu0 0.0
  %2986 = vmatpush1.msra.mxu0 %v2963
  %2987 = vmatprep.subr.mxu0 0.0
  %2988 = vmatpush1.msra.mxu0 %v2964
  %2989 = vmatprep.subr.mxu0 0.0
  %2990 = vmatpush1.msra.mxu0 %v2965
  %2991 = vmatprep.subr.mxu0 0.0
  %2992 = vmatpush1.msra.mxu0 %v2966
  %2993 = vmatprep.subr.mxu0 0.0
  %2994 = vmatpush1.msra.mxu0 %v2967
  %2995 = vmatprep.subr.mxu0 0.0
  %2996 = vmatpush1.msra.mxu0 %v2968
  %2997 = vmatprep.subr.mxu0 0.0
  %2998 = vmatpush1.msra.mxu0 %v2969
  %2999 = vmatprep.subr.mxu0 0.0
  %3000 = vmatpush1.msra.mxu0 %v2970
  %3001 = vmatprep.subr.mxu0 0.0
  %3002 = vmatpush1.msra.mxu0 %v2971
  %3003 = vmatprep.subr.mxu0 0.0
  %3004 = vmatpush1.msra.mxu0 %v2972
  %3005 = vmatprep.subr.mxu0 0.0
  %3006 = vmatpush1.msra.mxu0 0.0
  %3007 = vmatprep.subr.mxu0 0.0
  %3008 = vmatpush1.msra.mxu0 0.0
  %3009 = vmatprep.subr.mxu0 0.0
  %3010 = vmatpush1.msra.mxu0 0.0
  %3011 = vmatprep.subr.mxu0 0.0
  %3012 = vmatpush1.msra.mxu0 0.0
  %3013 = vmatprep.subr.mxu0 0.0
  %3014 = vmatpush1.msra.mxu0 0.0
  %3015 = vmatprep.subr.mxu0 0.0
  %3016 = vmatpush1.msra.mxu0 0.0
  %3017 = vmatprep.subr.mxu0 0.0
  %3018 = vmatpush1.msra.mxu0 0.0
  %3019 = vmatprep.subr.mxu0 0.0
  %3020 = vmatpush1.msra.mxu0 0.0
  %3021 = vmatprep.subr.mxu0 0.0
  %3022 = vmatpush1.msra.mxu0 0.0
  %3023 = vmatprep.subr.mxu0 0.0
  %3024 = vmatpush1.msra.mxu0 0.0
  %3025 = vmatprep.subr.mxu0 0.0
  %3026 = vmatpush1.msra.mxu0 0.0
  %3027 = vmatprep.subr.mxu0 0.0
  %3028 = vmatpush1.msra.mxu0 0.0
  %3029 = vmatprep.subr.mxu0 0.0
  %3030 = vmatpush1.msra.mxu0 0.0
  %3031 = vmatprep.subr.mxu0 0.0
  %3032 = vmatpush1.msra.mxu0 0.0
  %3033 = vmatprep.subr.mxu0 0.0
  %3034 = vmatpush1.msra.mxu0 0.0
  %3035 = vmatprep.subr.mxu0 0.0
  %3036 = vmatpush1.msra.mxu0 0.0
  %3037 = vmatprep.mubr.f32.mxu0 0.0
  %3038 = vmatmul.mubr.f32.gmra.mrb[0].mxu0 %v2956
  %v3039 = vpop.f32.mrb[0].mxu0
  %v3040 = vadd.f32 0.0, %v3039
  %v3041 = vpop.f32.mrb[0].mxu0
  %3042 = vdwg.mxu0
  %v3043 = vld [vmem:[%s5] sm:$0xff]
  %v3044 = vld [vmem:[%s5 + $0x8] sm:$0xff]
  %v3045 = vld [vmem:[%s5 + $0x10] sm:$0xff]
  %v3046 = vld [vmem:[%s5 + $0x18] sm:$0xff]
  %v3047 = vld [vmem:[%s5 + $0x20] sm:$0xff]
  %v3048 = vld [vmem:[%s5 + $0x28] sm:$0xff]
  %v3049 = vld [vmem:[%s5 + $0x30] sm:$0xff]
  %v3050 = vld [vmem:[%s5 + $0x38] sm:$0xff]
  %v3051 = vld [vmem:[%s5 + $0x40] sm:$0xff]
  %v3052 = vld [vmem:[%s5 + $0x48] sm:$0xff]
  %v3053 = vld [vmem:[%s5 + $0x50] sm:$0xff]
  %v3054 = vld [vmem:[%s5 + $0x58] sm:$0xff]
  %v3055 = vld [vmem:[%s5 + $0x60] sm:$0xff]
  %v3056 = vld [vmem:[%s5 + $0x68] sm:$0xff]
  %v3057 = vld [vmem:[%s5 + $0x70] sm:$0xff]
  %v3058 = vld [vmem:[%s5 + $0x78] sm:$0xff]
  %3059 = vmatprep.subr.mxu0 0.0
  %3060 = vmatpush1.msra.mxu0 %v3043
  %3061 = vmatprep.subr.mxu0 0.0
  %3062 = vmatpush1.msra.mxu0 %v3044
  %3063 = vmatprep.subr.mxu0 0.0
  %3064 = vmatpush1.msra.mxu0 %v3045
  %3065 = vmatprep.subr.mxu0 0.0
  %3066 = vmatpush1.msra.mxu0 %v3046
  %3067 = vmatprep.subr.mxu0 0.0
  %3068 = vmatpush1.msra.mxu0 %v3047
  %3069 = vmatprep.subr.mxu0 0.0
  %3070 = vmatpush1.msra.mxu0 %v3048
  %3071 = vmatprep.subr.mxu0 0.0
  %3072 = vmatpush1.msra.mxu0 %v3049
  %3073 = vmatprep.subr.mxu0 0.0
  %3074 = vmatpush1.msra.mxu0 %v3050
  %3075 = vmatprep.subr.mxu0 0.0
  %3076 = vmatpush1.msra.mxu0 %v3051
  %3077 = vmatprep.subr.mxu0 0.0
  %3078 = vmatpush1.msra.mxu0 %v3052
  %3079 = vmatprep.subr.mxu0 0.0
  %3080 = vmatpush1.msra.mxu0 %v3053
  %3081 = vmatprep.subr.mxu0 0.0
  %3082 = vmatpush1.msra.mxu0 %v3054
  %3083 = vmatprep.subr.mxu0 0.0
  %3084 = vmatpush1.msra.mxu0 %v3055
  %3085 = vmatprep.subr.mxu0 0.0
  %3086 = vmatpush1.msra.mxu0 %v3056
  %3087 = vmatprep.subr.mxu0 0.0
  %3088 = vmatpush1.msra.mxu0 %v3057
  %3089 = vmatprep.subr.mxu0 0.0
  %3090 = vmatpush1.msra.mxu0 %v3058
  %3091 = vmatprep.subr.mxu0 0.0
  %3092 = vmatpush1.msra.mxu0 0.0
  %3093 = vmatprep.subr.mxu0 0.0
  %3094 = vmatpush1.msra.mxu0 0.0
  %3095 = vmatprep.subr.mxu0 0.0
  %3096 = vmatpush1.msra.mxu0 0.0
  %3097 = vmatprep.subr.mxu0 0.0
  %3098 = vmatpush1.msra.mxu0 0.0
  %3099 = vmatprep.subr.mxu0 0.0
  %3100 = vmatpush1.msra.mxu0 0.0
  %3101 = vmatprep.subr.mxu0 0.0
  %3102 = vmatpush1.msra.mxu0 0.0
  %3103 = vmatprep.subr.mxu0 0.0
  %3104 = vmatpush1.msra.mxu0 0.0
  %3105 = vmatprep.subr.mxu0 0.0
  %3106 = vmatpush1.msra.mxu0 0.0
  %3107 = vmatprep.subr.mxu0 0.0
  %3108 = vmatpush1.msra.mxu0 0.0
  %3109 = vmatprep.subr.mxu0 0.0
  %3110 = vmatpush1.msra.mxu0 0.0
  %3111 = vmatprep.subr.mxu0 0.0
  %3112 = vmatpush1.msra.mxu0 0.0
  %3113 = vmatprep.subr.mxu0 0.0
  %3114 = vmatpush1.msra.mxu0 0.0
  %3115 = vmatprep.subr.mxu0 0.0
  %3116 = vmatpush1.msra.mxu0 0.0
  %3117 = vmatprep.subr.mxu0 0.0
  %3118 = vmatpush1.msra.mxu0 0.0
  %3119 = vmatprep.subr.mxu0 0.0
  %3120 = vmatpush1.msra.mxu0 0.0
  %3121 = vmatprep.subr.mxu0 0.0
  %3122 = vmatpush1.msra.mxu0 0.0
  %3123 = vmatprep.mubr.f32.mxu0 0.0
  %3124 = vmatmul.mubr.f32.gmra.mrb[0].mxu0 %v2783
  %v3125 = vpop.f32.mrb[0].mxu0
  %v3126 = vadd.f32 0.0, %v3125
  %v3127 = vpop.f32.mrb[0].mxu0
  %3128 = vdwg.mxu0
  %v3129 = vmax.f32 %v3126, 0.0
  %s3130 = scalar_lea.vmem %s7, 56
  %3131 = vst [vmem:[%s3130] sm:$0xff] %v3129
  %s3132 = scalar_lea.vmem %s6, 56
  %3133 = vst [vmem:[%s3132] sm:$0xff] %v3129
  %s3134 = scalar_lea.vmem %s8, 56
  %3135 = vst [vmem:[%s3134] sm:$0xff] %v3040
  // Predicated region
  $region26: #{rnn2l_forward.1} parent=0 // pred_check
    _
  $region27: #{rnn2l_forward.1} parent=0 // pred_check_branch
    %3137 = sbr.rel (0) target = $region29
  $region28: #{rnn2l_forward.1} parent=0 // pred_region
    _
  $region29: #{rnn2l_forward.1} parent=0 // pred_fallthru
    _
  // Predicated region
  $region30: #{rnn2l_forward.1} parent=0 // pred_check
    _
  $region31: #{rnn2l_forward.1} parent=0 // pred_check_branch
    %3139 = sbr.rel (0) target = $region33
  $region32: #{rnn2l_forward.1} parent=0 // pred_region
    _
  $region33: #{rnn2l_forward.1} parent=0 // pred_fallthru
    _
  // Predicated region
  $region34: #{rnn2l_forward.1} parent=0 // pred_check
    _
  $region35: #{rnn2l_forward.1} parent=0 // pred_check_branch
    %3141 = sbr.rel (0) target = $region37
  $region36: #{rnn2l_forward.1} parent=0 // pred_region
    _
  $region37: #{rnn2l_forward.1} parent=0 // pred_fallthru
    _
  // Predicated region
  $region38: #{rnn2l_forward.1} parent=0 // pred_check
    _
  $region39: #{rnn2l_forward.1} parent=0 // pred_check_branch
    %3143 = sbr.rel (0) target = $region41
  $region40: #{rnn2l_forward.1} parent=0 // pred_region
    _
  $region41: #{rnn2l_forward.1} parent=0 // pred_fallthru
    _
  // Predicated region
  $region42: #{rnn2l_forward.1} parent=0 // pred_check
    _
  $region43: #{rnn2l_forward.1} parent=0 // pred_check_branch
    %3145 = sbr.rel (0) target = $region45
  $region44: #{rnn2l_forward.1} parent=0 // pred_region
    _
  $region45: #{rnn2l_forward.1} parent=0 // pred_fallthru
    _
  // Predicated region
  $region46: #{rnn2l_forward.1} parent=0 // pred_check
    _
  $region47: #{rnn2l_forward.1} parent=0 // pred_check_branch
    %3147 = sbr.rel (0) target = $region49
  $region48: #{rnn2l_forward.1} parent=0 // pred_region
    _
  $region49: #{rnn2l_forward.1} parent=0 // pred_fallthru
    _

</llo_original>
